<compile_context>
chip_gen: v5e
topology: v5e:2x2
jax: 0.10.0
libtpu: 0.0.40
codegen_flags: <defaults>
</compile_context>

<pallas_src>
import functools

import jax
import jax.numpy as jnp
from jax.experimental import pallas as pl
from jax.experimental.pallas import tpu as pltpu


# ----------------------------------------------------------------------------
# Pallas kernel: tiled  out = relu?(x @ w + b)   (bf16 inputs, f32 accumulate)
# ----------------------------------------------------------------------------
def _linear_kernel(x_ref, w_ref, b_ref, o_ref, acc_ref, *, relu):
    @pl.when(pl.program_id(2) == 0)
    def _init():
        acc_ref[...] = jnp.zeros_like(acc_ref)

    acc_ref[...] += jnp.dot(x_ref[...], w_ref[...],
                            preferred_element_type=jnp.float32)

    @pl.when(pl.program_id(2) == pl.num_programs(2) - 1)
    def _finalize():
        acc = acc_ref[...] + b_ref[...]          # bias (1, tn) broadcasts (f32)
        if relu:
            acc = jnp.maximum(acc, 0.0)
        o_ref[...] = acc.astype(o_ref.dtype)


def _round_up(x, m):
    return ((x + m - 1) // m) * m


def pallas_linear(x, w, b, *, relu):
    """x: [M, K], w: [K, N], b: [N]  ->  [M, N] float32."""
    M, K = x.shape
    K2, N = w.shape
    assert K == K2, (K, K2)

    # Tile sizes: lane-dense N (>=128), bf16-friendly sublane tiles, K last.
    tm = min(256, _round_up(M, 16))
    tn = min(256, _round_up(N, 128))
    tk = min(512, _round_up(K, 128))
    Mp, Kp, Np = _round_up(M, tm), _round_up(K, tk), _round_up(N, tn)

    xb = x.astype(jnp.bfloat16)
    wb = w.astype(jnp.bfloat16)
    if (Mp, Kp) != (M, K):
        xb = jnp.pad(xb, ((0, Mp - M), (0, Kp - K)))
    if (Kp, Np) != (K, N):
        wb = jnp.pad(wb, ((0, Kp - K), (0, Np - N)))
    b2 = b.astype(jnp.float32).reshape(1, N)
    if Np != N:
        b2 = jnp.pad(b2, ((0, 0), (0, Np - N)))

    grid = (Mp // tm, Np // tn, Kp // tk)
    cost = pl.CostEstimate(
        flops=2 * Mp * Kp * Np,
        transcendentals=0,
        bytes_accessed=xb.size * 2 + wb.size * 2 + b2.size * 4 + Mp * Np * 4,
    )

    out = pl.pallas_call(
        functools.partial(_linear_kernel, relu=relu),
        out_shape=jax.ShapeDtypeStruct((Mp, Np), jnp.float32),
        grid_spec=pltpu.PrefetchScalarGridSpec(
            num_scalar_prefetch=0,
            grid=grid,
            in_specs=[
                pl.BlockSpec((tm, tk), lambda i, j, k: (i, k)),
                pl.BlockSpec((tk, tn), lambda i, j, k: (k, j)),
                pl.BlockSpec((1, tn), lambda i, j, k: (0, j)),
            ],
            out_specs=pl.BlockSpec((tm, tn), lambda i, j, k: (i, j)),
            scratch_shapes=[pltpu.VMEM((tm, tn), jnp.float32)],
        ),
        compiler_params=pltpu.CompilerParams(
            dimension_semantics=("parallel", "parallel", "arbitrary")),
        cost_estimate=cost,
    )(xb, wb, b2)

    if (Mp, Np) != (M, N):
        out = out[:M, :N]
    return out


# ----------------------------------------------------------------------------
# NHWC conv (VALID, square stride) = strided-slice im2col + Pallas matmul
# ----------------------------------------------------------------------------
def _extract_patches_nhwc(x, kh, kw, stride):
    """x: [B, H, W, C] -> ([B*OH*OW, KH*KW*C], OH, OW); feature order (kh,kw,c)."""
    B, H, W, C = x.shape
    OH = (H - kh) // stride + 1
    OW = (W - kw) // stride + 1
    cols = []
    for i in range(kh):
        for j in range(kw):
            sl = x[:, i:i + (OH - 1) * stride + 1:stride,
                      j:j + (OW - 1) * stride + 1:stride, :]       # [B, OH, OW, C]
            cols.append(sl)
    patches = jnp.concatenate(cols, axis=-1)                       # [B, OH, OW, KH*KW*C]
    return patches.reshape(B * OH * OW, kh * kw * C), OH, OW


def conv2d_relu_nhwc(x, w_mat, b, *, kh, kw, stride):
    """x: [B,H,W,C] NHWC; w_mat: [KH*KW*C, OC] (pre-reshaped); b: [OC]."""
    B = x.shape[0]
    OC = w_mat.shape[1]
    patches, OH, OW = _extract_patches_nhwc(x, kh, kw, stride)
    out = pallas_linear(patches, w_mat, b, relu=True)              # [B*OH*OW, OC]
    return out.reshape(B, OH, OW, OC)


# ----------------------------------------------------------------------------
# DQN parameters (PyTorch layout) + one-time kernel-friendly preparation
# ----------------------------------------------------------------------------
def _conv_out_hw(h, w):
    h = (h - 8) // 4 + 1; w = (w - 8) // 4 + 1   # conv1 k=8 s=4
    h = (h - 4) // 2 + 1; w = (w - 4) // 2 + 1   # conv2 k=4 s=2
    h = (h - 3) // 1 + 1; w = (w - 3) // 1 + 1   # conv3 k=3 s=1
    return h, w


def init_dqn_params(key, input_shape, n_actions):
    c, h, w = input_shape
    oh, ow = _conv_out_hw(h, w)
    conv_out_size = 64 * oh * ow
    ks = jax.random.split(key, 10)
    s = 0.05
    return {
        "conv1_w": jax.random.normal(ks[0], (32, c, 8, 8), jnp.float32) * s,
        "conv1_b": jax.random.normal(ks[1], (32,), jnp.float32) * s,
        "conv2_w": jax.random.normal(ks[2], (64, 32, 4, 4), jnp.float32) * s,
        "conv2_b": jax.random.normal(ks[3], (64,), jnp.float32) * s,
        "conv3_w": jax.random.normal(ks[4], (64, 64, 3, 3), jnp.float32) * s,
        "conv3_b": jax.random.normal(ks[5], (64,), jnp.float32) * s,
        "fc1_w": jax.random.normal(ks[6], (512, conv_out_size), jnp.float32) * s,  # [out, in]
        "fc1_b": jax.random.normal(ks[7], (512,), jnp.float32) * s,
        "fc2_w": jax.random.normal(ks[8], (n_actions, 512), jnp.float32) * s,
        "fc2_b": jax.random.normal(ks[9], (n_actions,), jnp.float32) * s,
    }


def prepare_dqn_params(params, input_shape):
    """One-time: weights to matmul layout ([K,N], bf16), NHWC-compatible fc1."""
    _, h, w = input_shape
    oh, ow = _conv_out_hw(h, w)

    def conv_mat(wt):  # [OC, C, KH, KW] -> [KH*KW*C, OC]  (matches (kh,kw,c) patches)
        oc, ci, kh, kw = wt.shape
        return wt.transpose(2, 3, 1, 0).reshape(kh * kw * ci, oc).astype(jnp.bfloat16)

    nh = params["fc1_w"].shape[0]           # 512
    c3 = params["conv3_w"].shape[0]         # 64
    # PyTorch flatten is (c, oh, ow); permute fc1 columns to NHWC (oh, ow, c) order.
    fc1_wm = (params["fc1_w"].reshape(nh, c3, oh, ow)
              .transpose(2, 3, 1, 0).reshape(oh * ow * c3, nh).astype(jnp.bfloat16))

    return {
        "conv1_wm": conv_mat(params["conv1_w"]), "conv1_b": params["conv1_b"],
        "conv2_wm": conv_mat(params["conv2_w"]), "conv2_b": params["conv2_b"],
        "conv3_wm": conv_mat(params["conv3_w"]), "conv3_b": params["conv3_b"],
        "fc1_wm": fc1_wm,                        "fc1_b": params["fc1_b"],
        "fc2_wm": params["fc2_w"].T.astype(jnp.bfloat16), "fc2_b": params["fc2_b"],
    }


def dqn_forward(prep, x):
    """x: [B, C, H, W] float32 (NCHW, PyTorch layout) -> [B, n_actions]."""
    y = jnp.transpose(x, (0, 2, 3, 1))                              # NCHW -> NHWC once
    y = conv2d_relu_nhwc(y, prep["conv1_wm"], prep["conv1_b"], kh=8, kw=8, stride=4)
    y = conv2d_relu_nhwc(y, prep["conv2_wm"], prep["conv2_b"], kh=4, kw=4, stride=2)
    y = conv2d_relu_nhwc(y, prep["conv3_wm"], prep["conv3_b"], kh=3, kw=3, stride=1)
    B = x.shape[0]
    flat = y.reshape(B, -1)                 # NHWC flatten; fc1_wm is pre-permuted to match
    h = pallas_linear(flat, prep["fc1_wm"], prep["fc1_b"], relu=True)
    return pallas_linear(h, prep["fc2_wm"], prep["fc2_b"], relu=False)


# ----------------------------------------------------------------------------
# Pure-JAX f32 reference (PyTorch semantics) for correctness checking
# ----------------------------------------------------------------------------
def dqn_reference(params, x):
    def conv(x, w, b, s):
        y = jax.lax.conv_general_dilated(
            x, w, window_strides=(s, s), padding="VALID",
            dimension_numbers=("NCHW", "OIHW", "NCHW"))
        return jax.nn.relu(y + b[None, :, None, None])

    y = conv(x, params["conv1_w"], params["conv1_b"], 4)
    y = conv(y, params["conv2_w"], params["conv2_b"], 2)
    y = conv(y, params["conv3_w"], params["conv3_b"], 1)
    flat = y.reshape(x.shape[0], -1)
    h = jax.nn.relu(flat @ params["fc1_w"].T + params["fc1_b"])
    return h @ params["fc2_w"].T + params["fc2_b"]


if __name__ == "__main__":
    # Small but structurally valid shapes: batch=2, channels=4, spatial=44
    # (44 -> 10 -> 4 -> 2 through the three conv layers; conv_out_size = 64*2*2 = 256)
    B, C, H, W = 2, 4, 44, 44
    n_actions = 6

    key = jax.random.PRNGKey(0)
    pkey, xkey = jax.random.split(key)
    params = init_dqn_params(pkey, (C, H, W), n_actions)
    prep = prepare_dqn_params(params, (C, H, W))
    x = jax.random.normal(xkey, (B, C, H, W), jnp.float32)

    fwd = jax.jit(dqn_forward)
    out = fwd(prep, x)
    out = jax.block_until_ready(out)

    ref = dqn_reference(params, x)
    assert out.shape == (B, n_actions), out.shape
    # bf16 MXU inputs (f32 accumulate) -> loosened tolerance vs. the f32 reference.
    max_diff = float(jnp.max(jnp.abs(out - ref)))
    assert jnp.allclose(out, ref, rtol=3e-2, atol=3e-2), max_diff

    print("KERNEL_OK")
</pallas_src>

<mosaic_0001>
module attributes {stable_mosaic.version = 11 : i64} {
  func.func @_linear_kernel(%arg0: i32, %arg1: i32, %arg2: i32, %arg3: memref<208x256xbf16, #tpu.memory_space<vmem>>, %arg4: memref<256x128xbf16, #tpu.memory_space<vmem>>, %arg5: memref<1x128xf32, #tpu.memory_space<vmem>>, %arg6: memref<208x128xf32, #tpu.memory_space<vmem>>, %arg7: memref<208x128xf32, #tpu.memory_space<vmem>>) attributes {dimension_semantics = [#tpu.dimension_semantics<parallel>, #tpu.dimension_semantics<parallel>, #tpu.dimension_semantics<arbitrary>], iteration_bounds = array<i64: 1, 1, 1>, scalar_prefetch = 0 : i64, scratch_operands = 1 : i64, tpu.core_type = #tpu.core_type<tc>, window_params = [{transform_indices = @transform_0, window_bounds = array<i64: 208, 256>}, {transform_indices = @transform_1, window_bounds = array<i64: 256, 128>}, {transform_indices = @transform_2, window_bounds = array<i64: 1, 128>}, {transform_indices = @transform_3, window_bounds = array<i64: 208, 128>}]} {
    %c0_i32 = arith.constant 0 : i32
    %0 = arith.cmpi eq, %arg2, %c0_i32 : i32
    %1 = arith.extui %0 : i1 to i32
    %c0_i32_0 = arith.constant 0 : i32
    %2 = arith.cmpi ne, %1, %c0_i32_0 : i32
    scf.if %2 {
      %cst_10 = arith.constant 0.000000e+00 : f32
      %12 = vector.broadcast %cst_10 : f32 to vector<208x128xf32>
      %c0_11 = arith.constant 0 : index
      %c0_12 = arith.constant 0 : index
      %13 = vector.load %arg7[%c0_11, %c0_12] : memref<208x128xf32, #tpu.memory_space<vmem>>, vector<208x128xf32>
      tpu.vector_store %arg7[%c0_11, %c0_12], %12 {strides = array<i32>} : memref<208x128xf32, #tpu.memory_space<vmem>>, vector<208x128xf32>,
    } else {
    }
    %c0 = arith.constant 0 : index
    %c0_1 = arith.constant 0 : index
    %3 = vector.load %arg7[%c0, %c0_1] : memref<208x128xf32, #tpu.memory_space<vmem>>, vector<208x128xf32>
    %c0_2 = arith.constant 0 : index
    %c0_3 = arith.constant 0 : index
    %4 = vector.load %arg3[%c0_2, %c0_3] : memref<208x256xbf16, #tpu.memory_space<vmem>>, vector<208x256xbf16>
    %c0_4 = arith.constant 0 : index
    %c0_5 = arith.constant 0 : index
    %5 = vector.load %arg4[%c0_4, %c0_5] : memref<256x128xbf16, #tpu.memory_space<vmem>>, vector<256x128xbf16>
    %cst = arith.constant dense<0.000000e+00> : vector<208x128xf32>
    %6 = tpu.matmul %4, %5, %cst {dimension_numbers = #tpu.dot_dimension_numbers<[1], [0], [0], [1], [0, 0, 1, 1], [], []>} : vector<208x256xbf16>, vector<256x128xbf16>, vector<208x128xf32> -> vector<208x128xf32>
    %7 = arith.addf %3, %6 : vector<208x128xf32>
    %c0_6 = arith.constant 0 : index
    %c0_7 = arith.constant 0 : index
    %8 = vector.load %arg7[%c0_6, %c0_7] : memref<208x128xf32, #tpu.memory_space<vmem>>, vector<208x128xf32>
    tpu.vector_store %arg7[%c0_6, %c0_7], %7 {strides = array<i32>} : memref<208x128xf32, #tpu.memory_space<vmem>>, vector<208x128xf32>,
    %c0_i32_8 = arith.constant 0 : i32
    %9 = arith.cmpi eq, %arg2, %c0_i32_8 : i32
    %10 = arith.extui %9 : i1 to i32
    %c0_i32_9 = arith.constant 0 : i32
    %11 = arith.cmpi ne, %10, %c0_i32_9 : i32
    scf.if %11 {
      %c0_10 = arith.constant 0 : index
      %c0_11 = arith.constant 0 : index
      %12 = vector.load %arg7[%c0_10, %c0_11] : memref<208x128xf32, #tpu.memory_space<vmem>>, vector<208x128xf32>
      %c0_12 = arith.constant 0 : index
      %c0_13 = arith.constant 0 : index
      %13 = vector.load %arg5[%c0_12, %c0_13] : memref<1x128xf32, #tpu.memory_space<vmem>>, vector<1x128xf32>
      %14 = vector.broadcast %13 : vector<1x128xf32> to vector<208x128xf32>
      %15 = arith.addf %12, %14 : vector<208x128xf32>
      %cst_14 = arith.constant 0.000000e+00 : f32
      %16 = vector.broadcast %cst_14 : f32 to vector<208x128xf32>
      %17 = arith.maximumf %15, %16 : vector<208x128xf32>
      %c0_15 = arith.constant 0 : index
      %c0_16 = arith.constant 0 : index
      %18 = vector.load %arg6[%c0_15, %c0_16] : memref<208x128xf32, #tpu.memory_space<vmem>>, vector<208x128xf32>
      tpu.vector_store %arg6[%c0_15, %c0_16], %17 {strides = array<i32>} : memref<208x128xf32, #tpu.memory_space<vmem>>, vector<208x128xf32>,
    } else {
    }
    return
  }
  func.func @transform_0(%arg0: i32, %arg1: i32, %arg2: i32) -> (i32, i32) {
    %c0_i32 = arith.constant 0 : i32
    return %arg0, %arg2 : i32, i32
  }
  func.func @transform_1(%arg0: i32, %arg1: i32, %arg2: i32) -> (i32, i32) {
    %c0_i32 = arith.constant 0 : i32
    return %arg2, %arg1 : i32, i32
  }
  func.func @transform_2(%arg0: i32, %arg1: i32, %arg2: i32) -> (i32, i32) {
    %c0_i32 = arith.constant 0 : i32
    %c0_i32_0 = arith.constant 0 : i32
    return %c0_i32, %arg1 : i32, i32
  }
  func.func @transform_3(%arg0: i32, %arg1: i32, %arg2: i32) -> (i32, i32) {
    %c0_i32 = arith.constant 0 : i32
    return %arg0, %arg1 : i32, i32
  }
}

module attributes {stable_mosaic.version = 11 : i64} {
  func.func @_linear_kernel(%arg0: i32, %arg1: i32, %arg2: i32, %arg3: memref<32x512xbf16, #tpu.memory_space<vmem>>, %arg4: memref<512x128xbf16, #tpu.memory_space<vmem>>, %arg5: memref<1x128xf32, #tpu.memory_space<vmem>>, %arg6: memref<32x128xf32, #tpu.memory_space<vmem>>, %arg7: memref<32x128xf32, #tpu.memory_space<vmem>>) attributes {dimension_semantics = [#tpu.dimension_semantics<parallel>, #tpu.dimension_semantics<parallel>, #tpu.dimension_semantics<arbitrary>], iteration_bounds = array<i64: 1, 1, 1>, scalar_prefetch = 0 : i64, scratch_operands = 1 : i64, tpu.core_type = #tpu.core_type<tc>, window_params = [{transform_indices = @transform_0, window_bounds = array<i64: 32, 512>}, {transform_indices = @transform_1, window_bounds = array<i64: 512, 128>}, {transform_indices = @transform_2, window_bounds = array<i64: 1, 128>}, {transform_indices = @transform_3, window_bounds = array<i64: 32, 128>}]} {
    %c0_i32 = arith.constant 0 : i32
    %0 = arith.cmpi eq, %arg2, %c0_i32 : i32
    %1 = arith.extui %0 : i1 to i32
    %c0_i32_0 = arith.constant 0 : i32
    %2 = arith.cmpi ne, %1, %c0_i32_0 : i32
    scf.if %2 {
      %cst_10 = arith.constant 0.000000e+00 : f32
      %12 = vector.broadcast %cst_10 : f32 to vector<32x128xf32>
      %c0_11 = arith.constant 0 : index
      %c0_12 = arith.constant 0 : index
      %13 = vector.load %arg7[%c0_11, %c0_12] : memref<32x128xf32, #tpu.memory_space<vmem>>, vector<32x128xf32>
      tpu.vector_store %arg7[%c0_11, %c0_12], %12 {strides = array<i32>} : memref<32x128xf32, #tpu.memory_space<vmem>>, vector<32x128xf32>,
    } else {
    }
    %c0 = arith.constant 0 : index
    %c0_1 = arith.constant 0 : index
    %3 = vector.load %arg7[%c0, %c0_1] : memref<32x128xf32, #tpu.memory_space<vmem>>, vector<32x128xf32>
    %c0_2 = arith.constant 0 : index
    %c0_3 = arith.constant 0 : index
    %4 = vector.load %arg3[%c0_2, %c0_3] : memref<32x512xbf16, #tpu.memory_space<vmem>>, vector<32x512xbf16>
    %c0_4 = arith.constant 0 : index
    %c0_5 = arith.constant 0 : index
    %5 = vector.load %arg4[%c0_4, %c0_5] : memref<512x128xbf16, #tpu.memory_space<vmem>>, vector<512x128xbf16>
    %cst = arith.constant dense<0.000000e+00> : vector<32x128xf32>
    %6 = tpu.matmul %4, %5, %cst {dimension_numbers = #tpu.dot_dimension_numbers<[1], [0], [0], [1], [0, 0, 1, 1], [], []>} : vector<32x512xbf16>, vector<512x128xbf16>, vector<32x128xf32> -> vector<32x128xf32>
    %7 = arith.addf %3, %6 : vector<32x128xf32>
    %c0_6 = arith.constant 0 : index
    %c0_7 = arith.constant 0 : index
    %8 = vector.load %arg7[%c0_6, %c0_7] : memref<32x128xf32, #tpu.memory_space<vmem>>, vector<32x128xf32>
    tpu.vector_store %arg7[%c0_6, %c0_7], %7 {strides = array<i32>} : memref<32x128xf32, #tpu.memory_space<vmem>>, vector<32x128xf32>,
    %c0_i32_8 = arith.constant 0 : i32
    %9 = arith.cmpi eq, %arg2, %c0_i32_8 : i32
    %10 = arith.extui %9 : i1 to i32
    %c0_i32_9 = arith.constant 0 : i32
    %11 = arith.cmpi ne, %10, %c0_i32_9 : i32
    scf.if %11 {
      %c0_10 = arith.constant 0 : index
      %c0_11 = arith.constant 0 : index
      %12 = vector.load %arg7[%c0_10, %c0_11] : memref<32x128xf32, #tpu.memory_space<vmem>>, vector<32x128xf32>
      %c0_12 = arith.constant 0 : index
      %c0_13 = arith.constant 0 : index
      %13 = vector.load %arg5[%c0_12, %c0_13] : memref<1x128xf32, #tpu.memory_space<vmem>>, vector<1x128xf32>
      %14 = vector.broadcast %13 : vector<1x128xf32> to vector<32x128xf32>
      %15 = arith.addf %12, %14 : vector<32x128xf32>
      %cst_14 = arith.constant 0.000000e+00 : f32
      %16 = vector.broadcast %cst_14 : f32 to vector<32x128xf32>
      %17 = arith.maximumf %15, %16 : vector<32x128xf32>
      %c0_15 = arith.constant 0 : index
      %c0_16 = arith.constant 0 : index
      %18 = vector.load %arg6[%c0_15, %c0_16] : memref<32x128xf32, #tpu.memory_space<vmem>>, vector<32x128xf32>
      tpu.vector_store %arg6[%c0_15, %c0_16], %17 {strides = array<i32>} : memref<32x128xf32, #tpu.memory_space<vmem>>, vector<32x128xf32>,
    } else {
    }
    return
  }
  func.func @transform_0(%arg0: i32, %arg1: i32, %arg2: i32) -> (i32, i32) {
    %c0_i32 = arith.constant 0 : i32
    return %arg0, %arg2 : i32, i32
  }
  func.func @transform_1(%arg0: i32, %arg1: i32, %arg2: i32) -> (i32, i32) {
    %c0_i32 = arith.constant 0 : i32
    return %arg2, %arg1 : i32, i32
  }
  func.func @transform_2(%arg0: i32, %arg1: i32, %arg2: i32) -> (i32, i32) {
    %c0_i32 = arith.constant 0 : i32
    %c0_i32_0 = arith.constant 0 : i32
    return %c0_i32, %arg1 : i32, i32
  }
  func.func @transform_3(%arg0: i32, %arg1: i32, %arg2: i32) -> (i32, i32) {
    %c0_i32 = arith.constant 0 : i32
    return %arg0, %arg1 : i32, i32
  }
}

module attributes {stable_mosaic.version = 11 : i64} {
  func.func @_linear_kernel(%arg0: i32, %arg1: i32, %arg2: i32, %arg3: memref<16x256xbf16, #tpu.memory_space<vmem>>, %arg4: memref<256x256xbf16, #tpu.memory_space<vmem>>, %arg5: memref<1x256xf32, #tpu.memory_space<vmem>>, %arg6: memref<16x256xf32, #tpu.memory_space<vmem>>, %arg7: memref<16x256xf32, #tpu.memory_space<vmem>>) attributes {dimension_semantics = [#tpu.dimension_semantics<parallel>, #tpu.dimension_semantics<parallel>, #tpu.dimension_semantics<arbitrary>], iteration_bounds = array<i64: 1, 2, 1>, scalar_prefetch = 0 : i64, scratch_operands = 1 : i64, tpu.core_type = #tpu.core_type<tc>, window_params = [{transform_indices = @transform_0, window_bounds = array<i64: 16, 256>}, {transform_indices = @transform_1, window_bounds = array<i64: 256, 256>}, {transform_indices = @transform_2, window_bounds = array<i64: 1, 256>}, {transform_indices = @transform_3, window_bounds = array<i64: 16, 256>}]} {
    %c0_i32 = arith.constant 0 : i32
    %0 = arith.cmpi eq, %arg2, %c0_i32 : i32
    %1 = arith.extui %0 : i1 to i32
    %c0_i32_0 = arith.constant 0 : i32
    %2 = arith.cmpi ne, %1, %c0_i32_0 : i32
    scf.if %2 {
      %cst_10 = arith.constant 0.000000e+00 : f32
      %12 = vector.broadcast %cst_10 : f32 to vector<16x256xf32>
      %c0_11 = arith.constant 0 : index
      %c0_12 = arith.constant 0 : index
      %13 = vector.load %arg7[%c0_11, %c0_12] : memref<16x256xf32, #tpu.memory_space<vmem>>, vector<16x256xf32>
      tpu.vector_store %arg7[%c0_11, %c0_12], %12 {strides = array<i32>} : memref<16x256xf32, #tpu.memory_space<vmem>>, vector<16x256xf32>,
    } else {
    }
    %c0 = arith.constant 0 : index
    %c0_1 = arith.constant 0 : index
    %3 = vector.load %arg7[%c0, %c0_1] : memref<16x256xf32, #tpu.memory_space<vmem>>, vector<16x256xf32>
    %c0_2 = arith.constant 0 : index
    %c0_3 = arith.constant 0 : index
    %4 = vector.load %arg3[%c0_2, %c0_3] : memref<16x256xbf16, #tpu.memory_space<vmem>>, vector<16x256xbf16>
    %c0_4 = arith.constant 0 : index
    %c0_5 = arith.constant 0 : index
    %5 = vector.load %arg4[%c0_4, %c0_5] : memref<256x256xbf16, #tpu.memory_space<vmem>>, vector<256x256xbf16>
    %cst = arith.constant dense<0.000000e+00> : vector<16x256xf32>
    %6 = tpu.matmul %4, %5, %cst {dimension_numbers = #tpu.dot_dimension_numbers<[1], [0], [0], [1], [0, 0, 1, 1], [], []>} : vector<16x256xbf16>, vector<256x256xbf16>, vector<16x256xf32> -> vector<16x256xf32>
    %7 = arith.addf %3, %6 : vector<16x256xf32>
    %c0_6 = arith.constant 0 : index
    %c0_7 = arith.constant 0 : index
    %8 = vector.load %arg7[%c0_6, %c0_7] : memref<16x256xf32, #tpu.memory_space<vmem>>, vector<16x256xf32>
    tpu.vector_store %arg7[%c0_6, %c0_7], %7 {strides = array<i32>} : memref<16x256xf32, #tpu.memory_space<vmem>>, vector<16x256xf32>,
    %c0_i32_8 = arith.constant 0 : i32
    %9 = arith.cmpi eq, %arg2, %c0_i32_8 : i32
    %10 = arith.extui %9 : i1 to i32
    %c0_i32_9 = arith.constant 0 : i32
    %11 = arith.cmpi ne, %10, %c0_i32_9 : i32
    scf.if %11 {
      %c0_10 = arith.constant 0 : index
      %c0_11 = arith.constant 0 : index
      %12 = vector.load %arg7[%c0_10, %c0_11] : memref<16x256xf32, #tpu.memory_space<vmem>>, vector<16x256xf32>
      %c0_12 = arith.constant 0 : index
      %c0_13 = arith.constant 0 : index
      %13 = vector.load %arg5[%c0_12, %c0_13] : memref<1x256xf32, #tpu.memory_space<vmem>>, vector<1x256xf32>
      %14 = vector.broadcast %13 : vector<1x256xf32> to vector<16x256xf32>
      %15 = arith.addf %12, %14 : vector<16x256xf32>
      %cst_14 = arith.constant 0.000000e+00 : f32
      %16 = vector.broadcast %cst_14 : f32 to vector<16x256xf32>
      %17 = arith.maximumf %15, %16 : vector<16x256xf32>
      %c0_15 = arith.constant 0 : index
      %c0_16 = arith.constant 0 : index
      %18 = vector.load %arg6[%c0_15, %c0_16] : memref<16x256xf32, #tpu.memory_space<vmem>>, vector<16x256xf32>
      tpu.vector_store %arg6[%c0_15, %c0_16], %17 {strides = array<i32>} : memref<16x256xf32, #tpu.memory_space<vmem>>, vector<16x256xf32>,
    } else {
    }
    return
  }
  func.func @transform_0(%arg0: i32, %arg1: i32, %arg2: i32) -> (i32, i32) {
    %c0_i32 = arith.constant 0 : i32
    return %arg0, %arg2 : i32, i32
  }
  func.func @transform_1(%arg0: i32, %arg1: i32, %arg2: i32) -> (i32, i32) {
    %c0_i32 = arith.constant 0 : i32
    return %arg2, %arg1 : i32, i32
  }
  func.func @transform_2(%arg0: i32, %arg1: i32, %arg2: i32) -> (i32, i32) {
    %c0_i32 = arith.constant 0 : i32
    %c0_i32_0 = arith.constant 0 : i32
    return %c0_i32, %arg1 : i32, i32
  }
  func.func @transform_3(%arg0: i32, %arg1: i32, %arg2: i32) -> (i32, i32) {
    %c0_i32 = arith.constant 0 : i32
    return %arg0, %arg1 : i32, i32
  }
}

module attributes {stable_mosaic.version = 11 : i64} {
  func.func @_linear_kernel(%arg0: i32, %arg1: i32, %arg2: i32, %arg3: memref<16x512xbf16, #tpu.memory_space<vmem>>, %arg4: memref<512x128xbf16, #tpu.memory_space<vmem>>, %arg5: memref<1x128xf32, #tpu.memory_space<vmem>>, %arg6: memref<16x128xf32, #tpu.memory_space<vmem>>, %arg7: memref<16x128xf32, #tpu.memory_space<vmem>>) attributes {dimension_semantics = [#tpu.dimension_semantics<parallel>, #tpu.dimension_semantics<parallel>, #tpu.dimension_semantics<arbitrary>], iteration_bounds = array<i64: 1, 1, 2>, scalar_prefetch = 0 : i64, scratch_operands = 1 : i64, tpu.core_type = #tpu.core_type<tc>, window_params = [{transform_indices = @transform_0, window_bounds = array<i64: 16, 512>}, {transform_indices = @transform_1, window_bounds = array<i64: 512, 128>}, {transform_indices = @transform_2, window_bounds = array<i64: 1, 128>}, {transform_indices = @transform_3, window_bounds = array<i64: 16, 128>}]} {
    %c0_i32 = arith.constant 0 : i32
    %0 = arith.cmpi eq, %arg2, %c0_i32 : i32
    %1 = arith.extui %0 : i1 to i32
    %c0_i32_0 = arith.constant 0 : i32
    %2 = arith.cmpi ne, %1, %c0_i32_0 : i32
    scf.if %2 {
      %cst_9 = arith.constant 0.000000e+00 : f32
      %12 = vector.broadcast %cst_9 : f32 to vector<16x128xf32>
      %c0_10 = arith.constant 0 : index
      %c0_11 = arith.constant 0 : index
      %13 = vector.load %arg7[%c0_10, %c0_11] : memref<16x128xf32, #tpu.memory_space<vmem>>, vector<16x128xf32>
      tpu.vector_store %arg7[%c0_10, %c0_11], %12 {strides = array<i32>} : memref<16x128xf32, #tpu.memory_space<vmem>>, vector<16x128xf32>,
    } else {
    }
    %c0 = arith.constant 0 : index
    %c0_1 = arith.constant 0 : index
    %3 = vector.load %arg7[%c0, %c0_1] : memref<16x128xf32, #tpu.memory_space<vmem>>, vector<16x128xf32>
    %c0_2 = arith.constant 0 : index
    %c0_3 = arith.constant 0 : index
    %4 = vector.load %arg3[%c0_2, %c0_3] : memref<16x512xbf16, #tpu.memory_space<vmem>>, vector<16x512xbf16>
    %c0_4 = arith.constant 0 : index
    %c0_5 = arith.constant 0 : index
    %5 = vector.load %arg4[%c0_4, %c0_5] : memref<512x128xbf16, #tpu.memory_space<vmem>>, vector<512x128xbf16>
    %cst = arith.constant dense<0.000000e+00> : vector<16x128xf32>
    %6 = tpu.matmul %4, %5, %cst {dimension_numbers = #tpu.dot_dimension_numbers<[1], [0], [0], [1], [0, 0, 1, 1], [], []>} : vector<16x512xbf16>, vector<512x128xbf16>, vector<16x128xf32> -> vector<16x128xf32>
    %7 = arith.addf %3, %6 : vector<16x128xf32>
    %c0_6 = arith.constant 0 : index
    %c0_7 = arith.constant 0 : index
    %8 = vector.load %arg7[%c0_6, %c0_7] : memref<16x128xf32, #tpu.memory_space<vmem>>, vector<16x128xf32>
    tpu.vector_store %arg7[%c0_6, %c0_7], %7 {strides = array<i32>} : memref<16x128xf32, #tpu.memory_space<vmem>>, vector<16x128xf32>,
    %c1_i32 = arith.constant 1 : i32
    %9 = arith.cmpi eq, %arg2, %c1_i32 : i32
    %10 = arith.extui %9 : i1 to i32
    %c0_i32_8 = arith.constant 0 : i32
    %11 = arith.cmpi ne, %10, %c0_i32_8 : i32
    scf.if %11 {
      %c0_9 = arith.constant 0 : index
      %c0_10 = arith.constant 0 : index
      %12 = vector.load %arg7[%c0_9, %c0_10] : memref<16x128xf32, #tpu.memory_space<vmem>>, vector<16x128xf32>
      %c0_11 = arith.constant 0 : index
      %c0_12 = arith.constant 0 : index
      %13 = vector.load %arg5[%c0_11, %c0_12] : memref<1x128xf32, #tpu.memory_space<vmem>>, vector<1x128xf32>
      %14 = vector.broadcast %13 : vector<1x128xf32> to vector<16x128xf32>
      %15 = arith.addf %12, %14 : vector<16x128xf32>
      %cst_13 = arith.constant 0.000000e+00 : f32
      %16 = vector.broadcast %cst_13 : f32 to vector<16x128xf32>
      %17 = arith.maximumf %15, %16 : vector<16x128xf32>
      %c0_14 = arith.constant 0 : index
      %c0_15 = arith.constant 0 : index
      %18 = vector.load %arg6[%c0_14, %c0_15] : memref<16x128xf32, #tpu.memory_space<vmem>>, vector<16x128xf32>
      tpu.vector_store %arg6[%c0_14, %c0_15], %17 {strides = array<i32>} : memref<16x128xf32, #tpu.memory_space<vmem>>, vector<16x128xf32>,
    } else {
    }
    return
  }
  func.func @transform_0(%arg0: i32, %arg1: i32, %arg2: i32) -> (i32, i32) {
    %c0_i32 = arith.constant 0 : i32
    return %arg0, %arg2 : i32, i32
  }
  func.func @transform_1(%arg0: i32, %arg1: i32, %arg2: i32) -> (i32, i32) {
    %c0_i32 = arith.constant 0 : i32
    return %arg2, %arg1 : i32, i32
  }
  func.func @transform_2(%arg0: i32, %arg1: i32, %arg2: i32) -> (i32, i32) {
    %c0_i32 = arith.constant 0 : i32
    %c0_i32_0 = arith.constant 0 : i32
    return %c0_i32, %arg1 : i32, i32
  }
  func.func @transform_3(%arg0: i32, %arg1: i32, %arg2: i32) -> (i32, i32) {
    %c0_i32 = arith.constant 0 : i32
    return %arg0, %arg1 : i32, i32
  }
}

module attributes {stable_mosaic.version = 11 : i64} {
  func.func @_linear_kernel(%arg0: i32, %arg1: i32, %arg2: i32, %arg3: memref<16x512xbf16, #tpu.memory_space<vmem>>, %arg4: memref<512x128xbf16, #tpu.memory_space<vmem>>, %arg5: memref<1x128xf32, #tpu.memory_space<vmem>>, %arg6: memref<16x128xf32, #tpu.memory_space<vmem>>, %arg7: memref<16x128xf32, #tpu.memory_space<vmem>>) attributes {dimension_semantics = [#tpu.dimension_semantics<parallel>, #tpu.dimension_semantics<parallel>, #tpu.dimension_semantics<arbitrary>], iteration_bounds = array<i64: 1, 1, 1>, scalar_prefetch = 0 : i64, scratch_operands = 1 : i64, tpu.core_type = #tpu.core_type<tc>, window_params = [{transform_indices = @transform_0, window_bounds = array<i64: 16, 512>}, {transform_indices = @transform_1, window_bounds = array<i64: 512, 128>}, {transform_indices = @transform_2, window_bounds = array<i64: 1, 128>}, {transform_indices = @transform_3, window_bounds = array<i64: 16, 128>}]} {
    %c0_i32 = arith.constant 0 : i32
    %0 = arith.cmpi eq, %arg2, %c0_i32 : i32
    %1 = arith.extui %0 : i1 to i32
    %c0_i32_0 = arith.constant 0 : i32
    %2 = arith.cmpi ne, %1, %c0_i32_0 : i32
    scf.if %2 {
      %cst_10 = arith.constant 0.000000e+00 : f32
      %12 = vector.broadcast %cst_10 : f32 to vector<16x128xf32>
      %c0_11 = arith.constant 0 : index
      %c0_12 = arith.constant 0 : index
      %13 = vector.load %arg7[%c0_11, %c0_12] : memref<16x128xf32, #tpu.memory_space<vmem>>, vector<16x128xf32>
      tpu.vector_store %arg7[%c0_11, %c0_12], %12 {strides = array<i32>} : memref<16x128xf32, #tpu.memory_space<vmem>>, vector<16x128xf32>,
    } else {
    }
    %c0 = arith.constant 0 : index
    %c0_1 = arith.constant 0 : index
    %3 = vector.load %arg7[%c0, %c0_1] : memref<16x128xf32, #tpu.memory_space<vmem>>, vector<16x128xf32>
    %c0_2 = arith.constant 0 : index
    %c0_3 = arith.constant 0 : index
    %4 = vector.load %arg3[%c0_2, %c0_3] : memref<16x512xbf16, #tpu.memory_space<vmem>>, vector<16x512xbf16>
    %c0_4 = arith.constant 0 : index
    %c0_5 = arith.constant 0 : index
    %5 = vector.load %arg4[%c0_4, %c0_5] : memref<512x128xbf16, #tpu.memory_space<vmem>>, vector<512x128xbf16>
    %cst = arith.constant dense<0.000000e+00> : vector<16x128xf32>
    %6 = tpu.matmul %4, %5, %cst {dimension_numbers = #tpu.dot_dimension_numbers<[1], [0], [0], [1], [0, 0, 1, 1], [], []>} : vector<16x512xbf16>, vector<512x128xbf16>, vector<16x128xf32> -> vector<16x128xf32>
    %7 = arith.addf %3, %6 : vector<16x128xf32>
    %c0_6 = arith.constant 0 : index
    %c0_7 = arith.constant 0 : index
    %8 = vector.load %arg7[%c0_6, %c0_7] : memref<16x128xf32, #tpu.memory_space<vmem>>, vector<16x128xf32>
    tpu.vector_store %arg7[%c0_6, %c0_7], %7 {strides = array<i32>} : memref<16x128xf32, #tpu.memory_space<vmem>>, vector<16x128xf32>,
    %c0_i32_8 = arith.constant 0 : i32
    %9 = arith.cmpi eq, %arg2, %c0_i32_8 : i32
    %10 = arith.extui %9 : i1 to i32
    %c0_i32_9 = arith.constant 0 : i32
    %11 = arith.cmpi ne, %10, %c0_i32_9 : i32
    scf.if %11 {
      %c0_10 = arith.constant 0 : index
      %c0_11 = arith.constant 0 : index
      %12 = vector.load %arg7[%c0_10, %c0_11] : memref<16x128xf32, #tpu.memory_space<vmem>>, vector<16x128xf32>
      %c0_12 = arith.constant 0 : index
      %c0_13 = arith.constant 0 : index
      %13 = vector.load %arg5[%c0_12, %c0_13] : memref<1x128xf32, #tpu.memory_space<vmem>>, vector<1x128xf32>
      %14 = vector.broadcast %13 : vector<1x128xf32> to vector<16x128xf32>
      %15 = arith.addf %12, %14 : vector<16x128xf32>
      %c0_14 = arith.constant 0 : index
      %c0_15 = arith.constant 0 : index
      %16 = vector.load %arg6[%c0_14, %c0_15] : memref<16x128xf32, #tpu.memory_space<vmem>>, vector<16x128xf32>
      tpu.vector_store %arg6[%c0_14, %c0_15], %15 {strides = array<i32>} : memref<16x128xf32, #tpu.memory_space<vmem>>, vector<16x128xf32>,
    } else {
    }
    return
  }
  func.func @transform_0(%arg0: i32, %arg1: i32, %arg2: i32) -> (i32, i32) {
    %c0_i32 = arith.constant 0 : i32
    return %arg0, %arg2 : i32, i32
  }
  func.func @transform_1(%arg0: i32, %arg1: i32, %arg2: i32) -> (i32, i32) {
    %c0_i32 = arith.constant 0 : i32
    return %arg2, %arg1 : i32, i32
  }
  func.func @transform_2(%arg0: i32, %arg1: i32, %arg2: i32) -> (i32, i32) {
    %c0_i32 = arith.constant 0 : i32
    %c0_i32_0 = arith.constant 0 : i32
    return %c0_i32, %arg1 : i32, i32
  }
  func.func @transform_3(%arg0: i32, %arg1: i32, %arg2: i32) -> (i32, i32) {
    %c0_i32 = arith.constant 0 : i32
    return %arg0, %arg1 : i32, i32
  }
}

</mosaic_0001>

<llo_original>
// kernel: dqn_forward.5
$region0: #{dqn_forward.5}
  #allocation0 [shape = 'u32[]', space=smem, size = 0x4, offset = 0x4, fixed_abs, tag = 'smem constant byte address 0x4 - core index']
  #allocation1 [shape = 'u32[72,128]{1,0:T(1,128)}', space=vmem, size = 0x9000, scoped, tag = 'internal scratch']
  #allocation2 [shape = 'f32[208,128]{1,0:T(8,128)}', space=vmem, size = 0x1a000, scoped, tag = 'scratch operand']
  %s0 = inlined_call_operand.vmem [shape: bf16[208,256], index: 0, kind: input, shape index: {}]
  %s1 = inlined_call_operand.vmem [shape: bf16[256,128], index: 1, kind: input, shape index: {}]
  %s2 = inlined_call_operand.vmem [shape: f32[1,128], index: 2, kind: input, shape index: {}]
  %s3 = inlined_call_operand.vmem [shape: f32[208,128], index: 3, kind: output, shape index: {}]
  %s4 = sld [smem:[#allocation0]]
  $region30: #{dqn_forward.5} parent=0
    _
  %s6 = ssub.s32 1, %s4
  %s7 = scalar_select 0, %s6, %s4
  // Predicated region
  $region2: #{dqn_forward.5} parent=0 // pred_check
    _
  $region3: #{dqn_forward.5} parent=0 // pred_check_branch
    %9 = sbr.rel (0) target = $region5
  $region4: #{dqn_forward.5} parent=0 // pred_region
    _
  $region5: #{dqn_forward.5} parent=0 // pred_fallthru
    _
  // Predicated region
  $region6: #{dqn_forward.5} parent=0 // pred_check
    _
  $region7: #{dqn_forward.5} parent=0 // pred_check_branch
    %11 = sbr.rel (0) target = $region9
  $region8: #{dqn_forward.5} parent=0 // pred_region
    _
  $region9: #{dqn_forward.5} parent=0 // pred_fallthru
    _
  // Predicated region
  $region10: #{dqn_forward.5} parent=0 // pred_check
    _
  $region11: #{dqn_forward.5} parent=0 // pred_check_branch
    %13 = sbr.rel (0) target = $region13
  $region12: #{dqn_forward.5} parent=0 // pred_region
    _
  $region13: #{dqn_forward.5} parent=0 // pred_fallthru
    _
  %p14 = scmp.eq.s32.totalorder 0, 0
  // Predicated region
  $region14: #{dqn_forward.5} parent=0 // pred_check
    %p15 = pneg %p14
  $region15: #{dqn_forward.5} parent=0 // pred_check_branch
    %17 = sbr.rel (%p15) target = $region17
  $region16: #{dqn_forward.5} parent=0 // pred_region
    %18 = vst [vmem:[#allocation2] sm:$0xff] 0.0
    %19 = vst [vmem:[#allocation2 + $0x8] sm:$0xff] 0.0
    %20 = vst [vmem:[#allocation2 + $0x10] sm:$0xff] 0.0
    %21 = vst [vmem:[#allocation2 + $0x18] sm:$0xff] 0.0
    %22 = vst [vmem:[#allocation2 + $0x20] sm:$0xff] 0.0
    %23 = vst [vmem:[#allocation2 + $0x28] sm:$0xff] 0.0
    %24 = vst [vmem:[#allocation2 + $0x30] sm:$0xff] 0.0
    %25 = vst [vmem:[#allocation2 + $0x38] sm:$0xff] 0.0
    %26 = vst [vmem:[#allocation2 + $0x40] sm:$0xff] 0.0
    %27 = vst [vmem:[#allocation2 + $0x48] sm:$0xff] 0.0
    %28 = vst [vmem:[#allocation2 + $0x50] sm:$0xff] 0.0
    %29 = vst [vmem:[#allocation2 + $0x58] sm:$0xff] 0.0
    %30 = vst [vmem:[#allocation2 + $0x60] sm:$0xff] 0.0
    %31 = vst [vmem:[#allocation2 + $0x68] sm:$0xff] 0.0
    %32 = vst [vmem:[#allocation2 + $0x70] sm:$0xff] 0.0
    %33 = vst [vmem:[#allocation2 + $0x78] sm:$0xff] 0.0
    %34 = vst [vmem:[#allocation2 + $0x80] sm:$0xff] 0.0
    %35 = vst [vmem:[#allocation2 + $0x88] sm:$0xff] 0.0
    %36 = vst [vmem:[#allocation2 + $0x90] sm:$0xff] 0.0
    %37 = vst [vmem:[#allocation2 + $0x98] sm:$0xff] 0.0
    %38 = vst [vmem:[#allocation2 + $0xa0] sm:$0xff] 0.0
    %39 = vst [vmem:[#allocation2 + $0xa8] sm:$0xff] 0.0
    %40 = vst [vmem:[#allocation2 + $0xb0] sm:$0xff] 0.0
    %41 = vst [vmem:[#allocation2 + $0xb8] sm:$0xff] 0.0
    %42 = vst [vmem:[#allocation2 + $0xc0] sm:$0xff] 0.0
    %43 = vst [vmem:[#allocation2 + $0xc8] sm:$0xff] 0.0
  $region17: #{dqn_forward.5} parent=0 // pred_fallthru
    _
  %v44 = vld [vmem:[#allocation2] sm:$0xff]
  %v45 = vld [vmem:[#allocation2 + $0x8] sm:$0xff]
  %v46 = vld [vmem:[#allocation2 + $0x10] sm:$0xff]
  %v47 = vld [vmem:[#allocation2 + $0x18] sm:$0xff]
  %v48 = vld [vmem:[#allocation2 + $0x20] sm:$0xff]
  %v49 = vld [vmem:[#allocation2 + $0x28] sm:$0xff]
  %v50 = vld [vmem:[#allocation2 + $0x30] sm:$0xff]
  %v51 = vld [vmem:[#allocation2 + $0x38] sm:$0xff]
  %v52 = vld [vmem:[#allocation2 + $0x40] sm:$0xff]
  %v53 = vld [vmem:[#allocation2 + $0x48] sm:$0xff]
  %v54 = vld [vmem:[#allocation2 + $0x50] sm:$0xff]
  %v55 = vld [vmem:[#allocation2 + $0x58] sm:$0xff]
  %v56 = vld [vmem:[#allocation2 + $0x60] sm:$0xff]
  %v57 = vld [vmem:[#allocation2 + $0x68] sm:$0xff]
  %v58 = vld [vmem:[#allocation2 + $0x70] sm:$0xff]
  %v59 = vld [vmem:[#allocation2 + $0x78] sm:$0xff]
  %v60 = vld [vmem:[#allocation2 + $0x80] sm:$0xff]
  %v61 = vld [vmem:[#allocation2 + $0x88] sm:$0xff]
  %v62 = vld [vmem:[#allocation2 + $0x90] sm:$0xff]
  %v63 = vld [vmem:[#allocation2 + $0x98] sm:$0xff]
  %v64 = vld [vmem:[#allocation2 + $0xa0] sm:$0xff]
  %v65 = vld [vmem:[#allocation2 + $0xa8] sm:$0xff]
  %v66 = vld [vmem:[#allocation2 + $0xb0] sm:$0xff]
  %v67 = vld [vmem:[#allocation2 + $0xb8] sm:$0xff]
  %v68 = vld [vmem:[#allocation2 + $0xc0] sm:$0xff]
  %v69 = vld [vmem:[#allocation2 + $0xc8] sm:$0xff]
  %v70 = vld [vmem:[%s0] sm:$0xff]
  %v71 = vld [vmem:[%s0 + $0x8] sm:$0xff]
  %v72 = vld [vmem:[%s0 + $0x10] sm:$0xff]
  %v73 = vld [vmem:[%s0 + $0x18] sm:$0xff]
  %v74 = vld [vmem:[%s0 + $0x20] sm:$0xff]
  %v75 = vld [vmem:[%s0 + $0x28] sm:$0xff]
  %v76 = vld [vmem:[%s0 + $0x30] sm:$0xff]
  %v77 = vld [vmem:[%s0 + $0x38] sm:$0xff]
  %v78 = vld [vmem:[%s0 + $0x40] sm:$0xff]
  %v79 = vld [vmem:[%s0 + $0x48] sm:$0xff]
  %v80 = vld [vmem:[%s0 + $0x50] sm:$0xff]
  %v81 = vld [vmem:[%s0 + $0x58] sm:$0xff]
  %v82 = vld [vmem:[%s0 + $0x60] sm:$0xff]
  %v83 = vld [vmem:[%s0 + $0x68] sm:$0xff]
  %v84 = vld [vmem:[%s0 + $0x70] sm:$0xff]
  %v85 = vld [vmem:[%s0 + $0x78] sm:$0xff]
  %v86 = vld [vmem:[%s0 + $0x80] sm:$0xff]
  %v87 = vld [vmem:[%s0 + $0x88] sm:$0xff]
  %v88 = vld [vmem:[%s0 + $0x90] sm:$0xff]
  %v89 = vld [vmem:[%s0 + $0x98] sm:$0xff]
  %v90 = vld [vmem:[%s0 + $0xa0] sm:$0xff]
  %v91 = vld [vmem:[%s0 + $0xa8] sm:$0xff]
  %v92 = vld [vmem:[%s0 + $0xb0] sm:$0xff]
  %v93 = vld [vmem:[%s0 + $0xb8] sm:$0xff]
  %v94 = vld [vmem:[%s0 + $0xc0] sm:$0xff]
  %v95 = vld [vmem:[%s0 + $0xc8] sm:$0xff]
  %v96 = vld [vmem:[%s1] sm:$0xf]
  %v97 = vld [vmem:[%s1 + $0x4] sm:$0xf]
  %v98 = vld [vmem:[%s1 + $0x8] sm:$0xf]
  %v99 = vld [vmem:[%s1 + $0xc] sm:$0xf]
  %v100 = vld [vmem:[%s1 + $0x10] sm:$0xf]
  %v101 = vld [vmem:[%s1 + $0x14] sm:$0xf]
  %v102 = vld [vmem:[%s1 + $0x18] sm:$0xf]
  %v103 = vld [vmem:[%s1 + $0x1c] sm:$0xf]
  %v104 = vld [vmem:[%s1 + $0x20] sm:$0xf]
  %v105 = vld [vmem:[%s1 + $0x24] sm:$0xf]
  %v106 = vld [vmem:[%s1 + $0x28] sm:$0xf]
  %v107 = vld [vmem:[%s1 + $0x2c] sm:$0xf]
  %v108 = vld [vmem:[%s1 + $0x30] sm:$0xf]
  %v109 = vld [vmem:[%s1 + $0x34] sm:$0xf]
  %v110 = vld [vmem:[%s1 + $0x38] sm:$0xf]
  %v111 = vld [vmem:[%s1 + $0x3c] sm:$0xf]
  %v112 = vld [vmem:[%s1 + $0x40] sm:$0xf]
  %v113 = vld [vmem:[%s1 + $0x44] sm:$0xf]
  %v114 = vld [vmem:[%s1 + $0x48] sm:$0xf]
  %v115 = vld [vmem:[%s1 + $0x4c] sm:$0xf]
  %v116 = vld [vmem:[%s1 + $0x50] sm:$0xf]
  %v117 = vld [vmem:[%s1 + $0x54] sm:$0xf]
  %v118 = vld [vmem:[%s1 + $0x58] sm:$0xf]
  %v119 = vld [vmem:[%s1 + $0x5c] sm:$0xf]
  %v120 = vld [vmem:[%s1 + $0x60] sm:$0xf]
  %v121 = vld [vmem:[%s1 + $0x64] sm:$0xf]
  %v122 = vld [vmem:[%s1 + $0x68] sm:$0xf]
  %v123 = vld [vmem:[%s1 + $0x6c] sm:$0xf]
  %v124 = vld [vmem:[%s1 + $0x70] sm:$0xf]
  %v125 = vld [vmem:[%s1 + $0x74] sm:$0xf]
  %v126 = vld [vmem:[%s1 + $0x78] sm:$0xf]
  %v127 = vld [vmem:[%s1 + $0x7c] sm:$0xf]
  %v154 = vunpack.c.l.b16 %v70
  %v155 = vunpack.c.h.b16 %v70
  %v156 = vunpack.c.l.b16 %v71
  %v157 = vunpack.c.h.b16 %v71
  %v158 = vunpack.c.l.b16 %v72
  %v159 = vunpack.c.h.b16 %v72
  %v160 = vunpack.c.l.b16 %v73
  %v161 = vunpack.c.h.b16 %v73
  %v162 = vunpack.c.l.b16 %v74
  %v163 = vunpack.c.h.b16 %v74
  %v164 = vunpack.c.l.b16 %v75
  %v165 = vunpack.c.h.b16 %v75
  %v166 = vunpack.c.l.b16 %v76
  %v167 = vunpack.c.h.b16 %v76
  %v168 = vunpack.c.l.b16 %v77
  %v169 = vunpack.c.h.b16 %v77
  %v170 = vunpack.c.l.b16 %v78
  %v171 = vunpack.c.h.b16 %v78
  %v172 = vunpack.c.l.b16 %v79
  %v173 = vunpack.c.h.b16 %v79
  %v174 = vunpack.c.l.b16 %v80
  %v175 = vunpack.c.h.b16 %v80
  %v176 = vunpack.c.l.b16 %v81
  %v177 = vunpack.c.h.b16 %v81
  %v178 = vunpack.c.l.b16 %v82
  %v179 = vunpack.c.h.b16 %v82
  %v180 = vunpack.c.l.b16 %v83
  %v181 = vunpack.c.h.b16 %v83
  %v182 = vunpack.c.l.b16 %v84
  %v183 = vunpack.c.h.b16 %v84
  %v184 = vunpack.c.l.b16 %v85
  %v185 = vunpack.c.h.b16 %v85
  %v186 = vunpack.c.l.b16 %v86
  %v187 = vunpack.c.h.b16 %v86
  %v188 = vunpack.c.l.b16 %v87
  %v189 = vunpack.c.h.b16 %v87
  %v190 = vunpack.c.l.b16 %v88
  %v191 = vunpack.c.h.b16 %v88
  %v192 = vunpack.c.l.b16 %v89
  %v193 = vunpack.c.h.b16 %v89
  %v194 = vunpack.c.l.b16 %v90
  %v195 = vunpack.c.h.b16 %v90
  %v196 = vunpack.c.l.b16 %v91
  %v197 = vunpack.c.h.b16 %v91
  %v198 = vunpack.c.l.b16 %v92
  %v199 = vunpack.c.h.b16 %v92
  %v200 = vunpack.c.l.b16 %v93
  %v201 = vunpack.c.h.b16 %v93
  %v202 = vunpack.c.l.b16 %v94
  %v203 = vunpack.c.h.b16 %v94
  %v204 = vunpack.c.l.b16 %v95
  %v205 = vunpack.c.h.b16 %v95
  %v206 = vpack.c.b16 %v156, %v154
  %v207 = vpack.c.b16 %v157, %v155
  %v208 = vpack.c.b16 %v160, %v158
  %v209 = vpack.c.b16 %v161, %v159
  %v210 = vpack.c.b16 %v164, %v162
  %v211 = vpack.c.b16 %v165, %v163
  %v212 = vpack.c.b16 %v168, %v166
  %v213 = vpack.c.b16 %v169, %v167
  %v214 = vpack.c.b16 %v172, %v170
  %v215 = vpack.c.b16 %v173, %v171
  %v216 = vpack.c.b16 %v176, %v174
  %v217 = vpack.c.b16 %v177, %v175
  %v218 = vpack.c.b16 %v180, %v178
  %v219 = vpack.c.b16 %v181, %v179
  %v220 = vpack.c.b16 %v184, %v182
  %v221 = vpack.c.b16 %v185, %v183
  %v222 = vpack.c.b16 %v188, %v186
  %v223 = vpack.c.b16 %v189, %v187
  %v224 = vpack.c.b16 %v192, %v190
  %v225 = vpack.c.b16 %v193, %v191
  %v226 = vpack.c.b16 %v196, %v194
  %v227 = vpack.c.b16 %v197, %v195
  %v228 = vpack.c.b16 %v200, %v198
  %v229 = vpack.c.b16 %v201, %v199
  %v230 = vpack.c.b16 %v204, %v202
  %v231 = vpack.c.b16 %v205, %v203
  %v290 = vunpack.c.l.b16 %v96
  %v291 = vunpack.c.l.b16 %v97
  %v292 = vunpack.c.l.b16 %v98
  %v293 = vunpack.c.l.b16 %v99
  %v294 = vunpack.c.l.b16 %v100
  %v295 = vunpack.c.l.b16 %v101
  %v296 = vunpack.c.l.b16 %v102
  %v297 = vunpack.c.l.b16 %v103
  %v298 = vunpack.c.l.b16 %v104
  %v299 = vunpack.c.l.b16 %v105
  %v300 = vunpack.c.l.b16 %v106
  %v301 = vunpack.c.l.b16 %v107
  %v302 = vunpack.c.l.b16 %v108
  %v303 = vunpack.c.l.b16 %v109
  %v304 = vunpack.c.l.b16 %v110
  %v305 = vunpack.c.l.b16 %v111
  %v306 = vunpack.c.l.b16 %v112
  %v307 = vunpack.c.l.b16 %v113
  %v308 = vunpack.c.l.b16 %v114
  %v309 = vunpack.c.l.b16 %v115
  %v310 = vunpack.c.l.b16 %v116
  %v311 = vunpack.c.l.b16 %v117
  %v312 = vunpack.c.l.b16 %v118
  %v313 = vunpack.c.l.b16 %v119
  %v314 = vunpack.c.l.b16 %v120
  %v315 = vunpack.c.l.b16 %v121
  %v316 = vunpack.c.l.b16 %v122
  %v317 = vunpack.c.l.b16 %v123
  %v318 = vunpack.c.l.b16 %v124
  %v319 = vunpack.c.l.b16 %v125
  %v320 = vunpack.c.l.b16 %v126
  %v321 = vunpack.c.l.b16 %v127
  %v322 = vpack.c.b16 %v291, %v290
  %v323 = vpack.c.b16 %v293, %v292
  %v324 = vpack.c.b16 %v295, %v294
  %v325 = vpack.c.b16 %v297, %v296
  %v326 = vpack.c.b16 %v299, %v298
  %v327 = vpack.c.b16 %v301, %v300
  %v328 = vpack.c.b16 %v303, %v302
  %v329 = vpack.c.b16 %v305, %v304
  %v330 = vpack.c.b16 %v307, %v306
  %v331 = vpack.c.b16 %v309, %v308
  %v332 = vpack.c.b16 %v311, %v310
  %v333 = vpack.c.b16 %v313, %v312
  %v334 = vpack.c.b16 %v315, %v314
  %v335 = vpack.c.b16 %v317, %v316
  %v336 = vpack.c.b16 %v319, %v318
  %v337 = vpack.c.b16 %v321, %v320
  %354 = vmatpush.bf16.msra.mxu0 %v329
  %355 = vmatpush.bf16.msra.mxu0 %v328
  %356 = vmatpush.bf16.msra.mxu0 %v327
  %357 = vmatpush.bf16.msra.mxu0 %v326
  %358 = vmatpush.bf16.msra.mxu0 %v325
  %359 = vmatpush.bf16.msra.mxu0 %v324
  %360 = vmatpush.bf16.msra.mxu0 %v323
  %361 = vmatpush.bf16.msra.mxu0 %v322
  %362 = vmatmul.bf16.gmra.mxu0 %v206
  %v363 = vpop.f32.mrf.mxu0
  %v364 = vadd.f32 0.0, %v363
  %v365 = vpop.f32.mrf.mxu0
  %v366 = vadd.f32 0.0, %v365
  %367 = vmatmul.bf16.gmra.mxu0 %v208
  %v368 = vpop.f32.mrf.mxu0
  %v369 = vadd.f32 0.0, %v368
  %v370 = vpop.f32.mrf.mxu0
  %v371 = vadd.f32 0.0, %v370
  %372 = vmatmul.bf16.gmra.mxu0 %v210
  %v373 = vpop.f32.mrf.mxu0
  %v374 = vadd.f32 0.0, %v373
  %v375 = vpop.f32.mrf.mxu0
  %v376 = vadd.f32 0.0, %v375
  %377 = vmatmul.bf16.gmra.mxu0 %v212
  %v378 = vpop.f32.mrf.mxu0
  %v379 = vadd.f32 0.0, %v378
  %v380 = vpop.f32.mrf.mxu0
  %v381 = vadd.f32 0.0, %v380
  %382 = vmatmul.bf16.gmra.mxu0 %v214
  %v383 = vpop.f32.mrf.mxu0
  %v384 = vadd.f32 0.0, %v383
  %v385 = vpop.f32.mrf.mxu0
  %v386 = vadd.f32 0.0, %v385
  %387 = vmatmul.bf16.gmra.mxu0 %v216
  %v388 = vpop.f32.mrf.mxu0
  %v389 = vadd.f32 0.0, %v388
  %v390 = vpop.f32.mrf.mxu0
  %v391 = vadd.f32 0.0, %v390
  %392 = vmatmul.bf16.gmra.mxu0 %v218
  %v393 = vpop.f32.mrf.mxu0
  %v394 = vadd.f32 0.0, %v393
  %v395 = vpop.f32.mrf.mxu0
  %v396 = vadd.f32 0.0, %v395
  %397 = vmatmul.bf16.gmra.mxu0 %v220
  %v398 = vpop.f32.mrf.mxu0
  %v399 = vadd.f32 0.0, %v398
  %v400 = vpop.f32.mrf.mxu0
  %v401 = vadd.f32 0.0, %v400
  %402 = vmatmul.bf16.gmra.mxu0 %v222
  %v403 = vpop.f32.mrf.mxu0
  %v404 = vadd.f32 0.0, %v403
  %v405 = vpop.f32.mrf.mxu0
  %v406 = vadd.f32 0.0, %v405
  %407 = vmatmul.bf16.gmra.mxu0 %v224
  %v408 = vpop.f32.mrf.mxu0
  %v409 = vadd.f32 0.0, %v408
  %v410 = vpop.f32.mrf.mxu0
  %v411 = vadd.f32 0.0, %v410
  %412 = vmatmul.bf16.gmra.mxu0 %v226
  %v413 = vpop.f32.mrf.mxu0
  %v414 = vadd.f32 0.0, %v413
  %v415 = vpop.f32.mrf.mxu0
  %v416 = vadd.f32 0.0, %v415
  %417 = vmatmul.bf16.gmra.mxu0 %v228
  %v418 = vpop.f32.mrf.mxu0
  %v419 = vadd.f32 0.0, %v418
  %v420 = vpop.f32.mrf.mxu0
  %v421 = vadd.f32 0.0, %v420
  %422 = vmatmul.bf16.gmra.mxu0 %v230
  %v423 = vpop.f32.mrf.mxu0
  %v424 = vadd.f32 0.0, %v423
  %v425 = vpop.f32.mrf.mxu0
  %v426 = vadd.f32 0.0, %v425
  %427 = vdwg.mxu0
  %428 = vmatpush.bf16.msra.mxu0 %v337
  %429 = vmatpush.bf16.msra.mxu0 %v336
  %430 = vmatpush.bf16.msra.mxu0 %v335
  %431 = vmatpush.bf16.msra.mxu0 %v334
  %432 = vmatpush.bf16.msra.mxu0 %v333
  %433 = vmatpush.bf16.msra.mxu0 %v332
  %434 = vmatpush.bf16.msra.mxu0 %v331
  %435 = vmatpush.bf16.msra.mxu0 %v330
  %436 = vmatmul.bf16.gmra.mxu0 %v207
  %v437 = vpop.f32.mrf.mxu0
  %v438 = vadd.f32 %v364, %v437
  %v439 = vpop.f32.mrf.mxu0
  %v440 = vadd.f32 %v366, %v439
  %441 = vmatmul.bf16.gmra.mxu0 %v209
  %v442 = vpop.f32.mrf.mxu0
  %v443 = vadd.f32 %v369, %v442
  %v444 = vpop.f32.mrf.mxu0
  %v445 = vadd.f32 %v371, %v444
  %446 = vmatmul.bf16.gmra.mxu0 %v211
  %v447 = vpop.f32.mrf.mxu0
  %v448 = vadd.f32 %v374, %v447
  %v449 = vpop.f32.mrf.mxu0
  %v450 = vadd.f32 %v376, %v449
  %451 = vmatmul.bf16.gmra.mxu0 %v213
  %v452 = vpop.f32.mrf.mxu0
  %v453 = vadd.f32 %v379, %v452
  %v454 = vpop.f32.mrf.mxu0
  %v455 = vadd.f32 %v381, %v454
  %456 = vmatmul.bf16.gmra.mxu0 %v215
  %v457 = vpop.f32.mrf.mxu0
  %v458 = vadd.f32 %v384, %v457
  %v459 = vpop.f32.mrf.mxu0
  %v460 = vadd.f32 %v386, %v459
  %461 = vmatmul.bf16.gmra.mxu0 %v217
  %v462 = vpop.f32.mrf.mxu0
  %v463 = vadd.f32 %v389, %v462
  %v464 = vpop.f32.mrf.mxu0
  %v465 = vadd.f32 %v391, %v464
  %466 = vmatmul.bf16.gmra.mxu0 %v219
  %v467 = vpop.f32.mrf.mxu0
  %v468 = vadd.f32 %v394, %v467
  %v469 = vpop.f32.mrf.mxu0
  %v470 = vadd.f32 %v396, %v469
  %471 = vmatmul.bf16.gmra.mxu0 %v221
  %v472 = vpop.f32.mrf.mxu0
  %v473 = vadd.f32 %v399, %v472
  %v474 = vpop.f32.mrf.mxu0
  %v475 = vadd.f32 %v401, %v474
  %476 = vmatmul.bf16.gmra.mxu0 %v223
  %v477 = vpop.f32.mrf.mxu0
  %v478 = vadd.f32 %v404, %v477
  %v479 = vpop.f32.mrf.mxu0
  %v480 = vadd.f32 %v406, %v479
  %481 = vmatmul.bf16.gmra.mxu0 %v225
  %v482 = vpop.f32.mrf.mxu0
  %v483 = vadd.f32 %v409, %v482
  %v484 = vpop.f32.mrf.mxu0
  %v485 = vadd.f32 %v411, %v484
  %486 = vmatmul.bf16.gmra.mxu0 %v227
  %v487 = vpop.f32.mrf.mxu0
  %v488 = vadd.f32 %v414, %v487
  %v489 = vpop.f32.mrf.mxu0
  %v490 = vadd.f32 %v416, %v489
  %491 = vmatmul.bf16.gmra.mxu0 %v229
  %v492 = vpop.f32.mrf.mxu0
  %v493 = vadd.f32 %v419, %v492
  %v494 = vpop.f32.mrf.mxu0
  %v495 = vadd.f32 %v421, %v494
  %496 = vmatmul.bf16.gmra.mxu0 %v231
  %v497 = vpop.f32.mrf.mxu0
  %v498 = vadd.f32 %v424, %v497
  %v499 = vpop.f32.mrf.mxu0
  %v500 = vadd.f32 %v426, %v499
  %501 = vdwg.mxu0
  %v502 = vadd.f32 %v44, %v438
  %v503 = vadd.f32 %v45, %v440
  %v504 = vadd.f32 %v46, %v443
  %v505 = vadd.f32 %v47, %v445
  %v506 = vadd.f32 %v48, %v448
  %v507 = vadd.f32 %v49, %v450
  %v508 = vadd.f32 %v50, %v453
  %v509 = vadd.f32 %v51, %v455
  %v510 = vadd.f32 %v52, %v458
  %v511 = vadd.f32 %v53, %v460
  %v512 = vadd.f32 %v54, %v463
  %v513 = vadd.f32 %v55, %v465
  %v514 = vadd.f32 %v56, %v468
  %v515 = vadd.f32 %v57, %v470
  %v516 = vadd.f32 %v58, %v473
  %v517 = vadd.f32 %v59, %v475
  %v518 = vadd.f32 %v60, %v478
  %v519 = vadd.f32 %v61, %v480
  %v520 = vadd.f32 %v62, %v483
  %v521 = vadd.f32 %v63, %v485
  %v522 = vadd.f32 %v64, %v488
  %v523 = vadd.f32 %v65, %v490
  %v524 = vadd.f32 %v66, %v493
  %v525 = vadd.f32 %v67, %v495
  %v526 = vadd.f32 %v68, %v498
  %v527 = vadd.f32 %v69, %v500
  %528 = vst [vmem:[#allocation2] sm:$0xff] %v502
  %529 = vst [vmem:[#allocation2 + $0x8] sm:$0xff] %v503
  %530 = vst [vmem:[#allocation2 + $0x10] sm:$0xff] %v504
  %531 = vst [vmem:[#allocation2 + $0x18] sm:$0xff] %v505
  %532 = vst [vmem:[#allocation2 + $0x20] sm:$0xff] %v506
  %533 = vst [vmem:[#allocation2 + $0x28] sm:$0xff] %v507
  %534 = vst [vmem:[#allocation2 + $0x30] sm:$0xff] %v508
  %535 = vst [vmem:[#allocation2 + $0x38] sm:$0xff] %v509
  %536 = vst [vmem:[#allocation2 + $0x40] sm:$0xff] %v510
  %537 = vst [vmem:[#allocation2 + $0x48] sm:$0xff] %v511
  %538 = vst [vmem:[#allocation2 + $0x50] sm:$0xff] %v512
  %539 = vst [vmem:[#allocation2 + $0x58] sm:$0xff] %v513
  %540 = vst [vmem:[#allocation2 + $0x60] sm:$0xff] %v514
  %541 = vst [vmem:[#allocation2 + $0x68] sm:$0xff] %v515
  %542 = vst [vmem:[#allocation2 + $0x70] sm:$0xff] %v516
  %543 = vst [vmem:[#allocation2 + $0x78] sm:$0xff] %v517
  %544 = vst [vmem:[#allocation2 + $0x80] sm:$0xff] %v518
  %545 = vst [vmem:[#allocation2 + $0x88] sm:$0xff] %v519
  %546 = vst [vmem:[#allocation2 + $0x90] sm:$0xff] %v520
  %547 = vst [vmem:[#allocation2 + $0x98] sm:$0xff] %v521
  %548 = vst [vmem:[#allocation2 + $0xa0] sm:$0xff] %v522
  %549 = vst [vmem:[#allocation2 + $0xa8] sm:$0xff] %v523
  %550 = vst [vmem:[#allocation2 + $0xb0] sm:$0xff] %v524
  %551 = vst [vmem:[#allocation2 + $0xb8] sm:$0xff] %v525
  %552 = vst [vmem:[#allocation2 + $0xc0] sm:$0xff] %v526
  %553 = vst [vmem:[#allocation2 + $0xc8] sm:$0xff] %v527
  // Predicated region
  $region18: #{dqn_forward.5} parent=0 // pred_check
    %p554 = pneg %p14
  $region19: #{dqn_forward.5} parent=0 // pred_check_branch
    %556 = sbr.rel (%p554) target = $region21
  $region20: #{dqn_forward.5} parent=0 // pred_region
    %v557 = vld [vmem:[#allocation2] sm:$0xff]
    %v558 = vld [vmem:[#allocation2 + $0x8] sm:$0xff]
    %v559 = vld [vmem:[#allocation2 + $0x10] sm:$0xff]
    %v560 = vld [vmem:[#allocation2 + $0x18] sm:$0xff]
    %v561 = vld [vmem:[#allocation2 + $0x20] sm:$0xff]
    %v562 = vld [vmem:[#allocation2 + $0x28] sm:$0xff]
    %v563 = vld [vmem:[#allocation2 + $0x30] sm:$0xff]
    %v564 = vld [vmem:[#allocation2 + $0x38] sm:$0xff]
    %v565 = vld [vmem:[#allocation2 + $0x40] sm:$0xff]
    %v566 = vld [vmem:[#allocation2 + $0x48] sm:$0xff]
    %v567 = vld [vmem:[#allocation2 + $0x50] sm:$0xff]
    %v568 = vld [vmem:[#allocation2 + $0x58] sm:$0xff]
    %v569 = vld [vmem:[#allocation2 + $0x60] sm:$0xff]
    %v570 = vld [vmem:[#allocation2 + $0x68] sm:$0xff]
    %v571 = vld [vmem:[#allocation2 + $0x70] sm:$0xff]
    %v572 = vld [vmem:[#allocation2 + $0x78] sm:$0xff]
    %v573 = vld [vmem:[#allocation2 + $0x80] sm:$0xff]
    %v574 = vld [vmem:[#allocation2 + $0x88] sm:$0xff]
    %v575 = vld [vmem:[#allocation2 + $0x90] sm:$0xff]
    %v576 = vld [vmem:[#allocation2 + $0x98] sm:$0xff]
    %v577 = vld [vmem:[#allocation2 + $0xa0] sm:$0xff]
    %v578 = vld [vmem:[#allocation2 + $0xa8] sm:$0xff]
    %v579 = vld [vmem:[#allocation2 + $0xb0] sm:$0xff]
    %v580 = vld [vmem:[#allocation2 + $0xb8] sm:$0xff]
    %v581 = vld [vmem:[#allocation2 + $0xc0] sm:$0xff]
    %v582 = vld [vmem:[#allocation2 + $0xc8] sm:$0xff]
    %v583 = vld [vmem:[%s2] sm:$0x1]
    %v585 = vperm.slane %v583, 0
    %v587 = vadd.f32 %v557, %v585
    %v588 = vadd.f32 %v558, %v585
    %v589 = vadd.f32 %v559, %v585
    %v590 = vadd.f32 %v560, %v585
    %v591 = vadd.f32 %v561, %v585
    %v592 = vadd.f32 %v562, %v585
    %v593 = vadd.f32 %v563, %v585
    %v594 = vadd.f32 %v564, %v585
    %v595 = vadd.f32 %v565, %v585
    %v596 = vadd.f32 %v566, %v585
    %v597 = vadd.f32 %v567, %v585
    %v598 = vadd.f32 %v568, %v585
    %v599 = vadd.f32 %v569, %v585
    %v600 = vadd.f32 %v570, %v585
    %v601 = vadd.f32 %v571, %v585
    %v602 = vadd.f32 %v572, %v585
    %v603 = vadd.f32 %v573, %v585
    %v604 = vadd.f32 %v574, %v585
    %v605 = vadd.f32 %v575, %v585
    %v606 = vadd.f32 %v576, %v585
    %v607 = vadd.f32 %v577, %v585
    %v608 = vadd.f32 %v578, %v585
    %v609 = vadd.f32 %v579, %v585
    %v610 = vadd.f32 %v580, %v585
    %v611 = vadd.f32 %v581, %v585
    %v612 = vadd.f32 %v582, %v585
    %v613 = vmax.f32 %v587, 0.0
    %v614 = vmax.f32 %v588, 0.0
    %v615 = vmax.f32 %v589, 0.0
    %v616 = vmax.f32 %v590, 0.0
    %v617 = vmax.f32 %v591, 0.0
    %v618 = vmax.f32 %v592, 0.0
    %v619 = vmax.f32 %v593, 0.0
    %v620 = vmax.f32 %v594, 0.0
    %v621 = vmax.f32 %v595, 0.0
    %v622 = vmax.f32 %v596, 0.0
    %v623 = vmax.f32 %v597, 0.0
    %v624 = vmax.f32 %v598, 0.0
    %v625 = vmax.f32 %v599, 0.0
    %v626 = vmax.f32 %v600, 0.0
    %v627 = vmax.f32 %v601, 0.0
    %v628 = vmax.f32 %v602, 0.0
    %v629 = vmax.f32 %v603, 0.0
    %v630 = vmax.f32 %v604, 0.0
    %v631 = vmax.f32 %v605, 0.0
    %v632 = vmax.f32 %v606, 0.0
    %v633 = vmax.f32 %v607, 0.0
    %v634 = vmax.f32 %v608, 0.0
    %v635 = vmax.f32 %v609, 0.0
    %v636 = vmax.f32 %v610, 0.0
    %v637 = vmax.f32 %v611, 0.0
    %v638 = vmax.f32 %v612, 0.0
    %639 = vst [vmem:[%s3] sm:$0xff] %v613
    %640 = vst [vmem:[%s3 + $0x8] sm:$0xff] %v614
    %641 = vst [vmem:[%s3 + $0x10] sm:$0xff] %v615
    %642 = vst [vmem:[%s3 + $0x18] sm:$0xff] %v616
    %643 = vst [vmem:[%s3 + $0x20] sm:$0xff] %v617
    %644 = vst [vmem:[%s3 + $0x28] sm:$0xff] %v618
    %645 = vst [vmem:[%s3 + $0x30] sm:$0xff] %v619
    %646 = vst [vmem:[%s3 + $0x38] sm:$0xff] %v620
    %647 = vst [vmem:[%s3 + $0x40] sm:$0xff] %v621
    %648 = vst [vmem:[%s3 + $0x48] sm:$0xff] %v622
    %649 = vst [vmem:[%s3 + $0x50] sm:$0xff] %v623
    %650 = vst [vmem:[%s3 + $0x58] sm:$0xff] %v624
    %651 = vst [vmem:[%s3 + $0x60] sm:$0xff] %v625
    %652 = vst [vmem:[%s3 + $0x68] sm:$0xff] %v626
    %653 = vst [vmem:[%s3 + $0x70] sm:$0xff] %v627
    %654 = vst [vmem:[%s3 + $0x78] sm:$0xff] %v628
    %655 = vst [vmem:[%s3 + $0x80] sm:$0xff] %v629
    %656 = vst [vmem:[%s3 + $0x88] sm:$0xff] %v630
    %657 = vst [vmem:[%s3 + $0x90] sm:$0xff] %v631
    %658 = vst [vmem:[%s3 + $0x98] sm:$0xff] %v632
    %659 = vst [vmem:[%s3 + $0xa0] sm:$0xff] %v633
    %660 = vst [vmem:[%s3 + $0xa8] sm:$0xff] %v634
    %661 = vst [vmem:[%s3 + $0xb0] sm:$0xff] %v635
    %662 = vst [vmem:[%s3 + $0xb8] sm:$0xff] %v636
    %663 = vst [vmem:[%s3 + $0xc0] sm:$0xff] %v637
    %664 = vst [vmem:[%s3 + $0xc8] sm:$0xff] %v638
  $region21: #{dqn_forward.5} parent=0 // pred_fallthru
    _
  // Predicated region
  $region22: #{dqn_forward.5} parent=0 // pred_check
    _
  $region23: #{dqn_forward.5} parent=0 // pred_check_branch
    %666 = sbr.rel (0) target = $region25
  $region24: #{dqn_forward.5} parent=0 // pred_region
    _
  $region25: #{dqn_forward.5} parent=0 // pred_fallthru
    _
  // Predicated region
  $region26: #{dqn_forward.5} parent=0 // pred_check
    _
  $region27: #{dqn_forward.5} parent=0 // pred_check_branch
    %668 = sbr.rel (0) target = $region29
  $region28: #{dqn_forward.5} parent=0 // pred_region
    _
  $region29: #{dqn_forward.5} parent=0 // pred_fallthru
    _

// kernel: dqn_forward.6
$region0: #{dqn_forward.6}
  #allocation0 [shape = 'u32[]', space=smem, size = 0x4, offset = 0x4, fixed_abs, tag = 'smem constant byte address 0x4 - core index']
  #allocation1 [shape = 'u32[72,128]{1,0:T(1,128)}', space=vmem, size = 0x9000, scoped, tag = 'internal scratch']
  #allocation2 [shape = 'f32[32,128]{1,0:T(8,128)}', space=vmem, size = 0x4000, scoped, tag = 'scratch operand']
  %s0 = inlined_call_operand.vmem [shape: bf16[32,512], index: 0, kind: input, shape index: {}]
  %s1 = inlined_call_operand.vmem [shape: bf16[512,128], index: 1, kind: input, shape index: {}]
  %s2 = inlined_call_operand.vmem [shape: f32[1,128], index: 2, kind: input, shape index: {}]
  %s3 = inlined_call_operand.vmem [shape: f32[32,128], index: 3, kind: output, shape index: {}]
  %s4 = sld [smem:[#allocation0]]
  $region30: #{dqn_forward.6} parent=0
    _
  %s6 = ssub.s32 1, %s4
  %s7 = scalar_select 0, %s6, %s4
  // Predicated region
  $region2: #{dqn_forward.6} parent=0 // pred_check
    _
  $region3: #{dqn_forward.6} parent=0 // pred_check_branch
    %9 = sbr.rel (0) target = $region5
  $region4: #{dqn_forward.6} parent=0 // pred_region
    _
  $region5: #{dqn_forward.6} parent=0 // pred_fallthru
    _
  // Predicated region
  $region6: #{dqn_forward.6} parent=0 // pred_check
    _
  $region7: #{dqn_forward.6} parent=0 // pred_check_branch
    %11 = sbr.rel (0) target = $region9
  $region8: #{dqn_forward.6} parent=0 // pred_region
    _
  $region9: #{dqn_forward.6} parent=0 // pred_fallthru
    _
  // Predicated region
  $region10: #{dqn_forward.6} parent=0 // pred_check
    _
  $region11: #{dqn_forward.6} parent=0 // pred_check_branch
    %13 = sbr.rel (0) target = $region13
  $region12: #{dqn_forward.6} parent=0 // pred_region
    _
  $region13: #{dqn_forward.6} parent=0 // pred_fallthru
    _
  %p14 = scmp.eq.s32.totalorder 0, 0
  // Predicated region
  $region14: #{dqn_forward.6} parent=0 // pred_check
    %p15 = pneg %p14
  $region15: #{dqn_forward.6} parent=0 // pred_check_branch
    %17 = sbr.rel (%p15) target = $region17
  $region16: #{dqn_forward.6} parent=0 // pred_region
    %18 = vst [vmem:[#allocation2] sm:$0xff] 0.0
    %19 = vst [vmem:[#allocation2 + $0x8] sm:$0xff] 0.0
    %20 = vst [vmem:[#allocation2 + $0x10] sm:$0xff] 0.0
    %21 = vst [vmem:[#allocation2 + $0x18] sm:$0xff] 0.0
  $region17: #{dqn_forward.6} parent=0 // pred_fallthru
    _
  %v22 = vld [vmem:[#allocation2] sm:$0xff]
  %v23 = vld [vmem:[#allocation2 + $0x8] sm:$0xff]
  %v24 = vld [vmem:[#allocation2 + $0x10] sm:$0xff]
  %v25 = vld [vmem:[#allocation2 + $0x18] sm:$0xff]
  %v26 = vld [vmem:[%s0] sm:$0xff]
  %v27 = vld [vmem:[%s0 + $0x8] sm:$0xff]
  %v28 = vld [vmem:[%s0 + $0x10] sm:$0xff]
  %v29 = vld [vmem:[%s0 + $0x18] sm:$0xff]
  %v30 = vld [vmem:[%s0 + $0x20] sm:$0xff]
  %v31 = vld [vmem:[%s0 + $0x28] sm:$0xff]
  %v32 = vld [vmem:[%s0 + $0x30] sm:$0xff]
  %v33 = vld [vmem:[%s0 + $0x38] sm:$0xff]
  %v34 = vld [vmem:[%s1] sm:$0xf]
  %v35 = vld [vmem:[%s1 + $0x4] sm:$0xf]
  %v36 = vld [vmem:[%s1 + $0x8] sm:$0xf]
  %v37 = vld [vmem:[%s1 + $0xc] sm:$0xf]
  %v38 = vld [vmem:[%s1 + $0x10] sm:$0xf]
  %v39 = vld [vmem:[%s1 + $0x14] sm:$0xf]
  %v40 = vld [vmem:[%s1 + $0x18] sm:$0xf]
  %v41 = vld [vmem:[%s1 + $0x1c] sm:$0xf]
  %v42 = vld [vmem:[%s1 + $0x20] sm:$0xf]
  %v43 = vld [vmem:[%s1 + $0x24] sm:$0xf]
  %v44 = vld [vmem:[%s1 + $0x28] sm:$0xf]
  %v45 = vld [vmem:[%s1 + $0x2c] sm:$0xf]
  %v46 = vld [vmem:[%s1 + $0x30] sm:$0xf]
  %v47 = vld [vmem:[%s1 + $0x34] sm:$0xf]
  %v48 = vld [vmem:[%s1 + $0x38] sm:$0xf]
  %v49 = vld [vmem:[%s1 + $0x3c] sm:$0xf]
  %v50 = vld [vmem:[%s1 + $0x40] sm:$0xf]
  %v51 = vld [vmem:[%s1 + $0x44] sm:$0xf]
  %v52 = vld [vmem:[%s1 + $0x48] sm:$0xf]
  %v53 = vld [vmem:[%s1 + $0x4c] sm:$0xf]
  %v54 = vld [vmem:[%s1 + $0x50] sm:$0xf]
  %v55 = vld [vmem:[%s1 + $0x54] sm:$0xf]
  %v56 = vld [vmem:[%s1 + $0x58] sm:$0xf]
  %v57 = vld [vmem:[%s1 + $0x5c] sm:$0xf]
  %v58 = vld [vmem:[%s1 + $0x60] sm:$0xf]
  %v59 = vld [vmem:[%s1 + $0x64] sm:$0xf]
  %v60 = vld [vmem:[%s1 + $0x68] sm:$0xf]
  %v61 = vld [vmem:[%s1 + $0x6c] sm:$0xf]
  %v62 = vld [vmem:[%s1 + $0x70] sm:$0xf]
  %v63 = vld [vmem:[%s1 + $0x74] sm:$0xf]
  %v64 = vld [vmem:[%s1 + $0x78] sm:$0xf]
  %v65 = vld [vmem:[%s1 + $0x7c] sm:$0xf]
  %v66 = vld [vmem:[%s1 + $0x80] sm:$0xf]
  %v67 = vld [vmem:[%s1 + $0x84] sm:$0xf]
  %v68 = vld [vmem:[%s1 + $0x88] sm:$0xf]
  %v69 = vld [vmem:[%s1 + $0x8c] sm:$0xf]
  %v70 = vld [vmem:[%s1 + $0x90] sm:$0xf]
  %v71 = vld [vmem:[%s1 + $0x94] sm:$0xf]
  %v72 = vld [vmem:[%s1 + $0x98] sm:$0xf]
  %v73 = vld [vmem:[%s1 + $0x9c] sm:$0xf]
  %v74 = vld [vmem:[%s1 + $0xa0] sm:$0xf]
  %v75 = vld [vmem:[%s1 + $0xa4] sm:$0xf]
  %v76 = vld [vmem:[%s1 + $0xa8] sm:$0xf]
  %v77 = vld [vmem:[%s1 + $0xac] sm:$0xf]
  %v78 = vld [vmem:[%s1 + $0xb0] sm:$0xf]
  %v79 = vld [vmem:[%s1 + $0xb4] sm:$0xf]
  %v80 = vld [vmem:[%s1 + $0xb8] sm:$0xf]
  %v81 = vld [vmem:[%s1 + $0xbc] sm:$0xf]
  %v82 = vld [vmem:[%s1 + $0xc0] sm:$0xf]
  %v83 = vld [vmem:[%s1 + $0xc4] sm:$0xf]
  %v84 = vld [vmem:[%s1 + $0xc8] sm:$0xf]
  %v85 = vld [vmem:[%s1 + $0xcc] sm:$0xf]
  %v86 = vld [vmem:[%s1 + $0xd0] sm:$0xf]
  %v87 = vld [vmem:[%s1 + $0xd4] sm:$0xf]
  %v88 = vld [vmem:[%s1 + $0xd8] sm:$0xf]
  %v89 = vld [vmem:[%s1 + $0xdc] sm:$0xf]
  %v90 = vld [vmem:[%s1 + $0xe0] sm:$0xf]
  %v91 = vld [vmem:[%s1 + $0xe4] sm:$0xf]
  %v92 = vld [vmem:[%s1 + $0xe8] sm:$0xf]
  %v93 = vld [vmem:[%s1 + $0xec] sm:$0xf]
  %v94 = vld [vmem:[%s1 + $0xf0] sm:$0xf]
  %v95 = vld [vmem:[%s1 + $0xf4] sm:$0xf]
  %v96 = vld [vmem:[%s1 + $0xf8] sm:$0xf]
  %v97 = vld [vmem:[%s1 + $0xfc] sm:$0xf]
  %v106 = vunpack.c.l.b16 %v26
  %v107 = vunpack.c.h.b16 %v26
  %v108 = vunpack.c.l.b16 %v27
  %v109 = vunpack.c.h.b16 %v27
  %v110 = vunpack.c.l.b16 %v28
  %v111 = vunpack.c.h.b16 %v28
  %v112 = vunpack.c.l.b16 %v29
  %v113 = vunpack.c.h.b16 %v29
  %v114 = vunpack.c.l.b16 %v30
  %v115 = vunpack.c.h.b16 %v30
  %v116 = vunpack.c.l.b16 %v31
  %v117 = vunpack.c.h.b16 %v31
  %v118 = vunpack.c.l.b16 %v32
  %v119 = vunpack.c.h.b16 %v32
  %v120 = vunpack.c.l.b16 %v33
  %v121 = vunpack.c.h.b16 %v33
  %v122 = vpack.c.b16 %v110, %v106
  %v123 = vpack.c.b16 %v111, %v107
  %v124 = vpack.c.b16 %v112, %v108
  %v125 = vpack.c.b16 %v113, %v109
  %v126 = vpack.c.b16 %v118, %v114
  %v127 = vpack.c.b16 %v119, %v115
  %v128 = vpack.c.b16 %v120, %v116
  %v129 = vpack.c.b16 %v121, %v117
  %v202 = vunpack.c.l.b16 %v34
  %v203 = vunpack.c.l.b16 %v35
  %v204 = vunpack.c.l.b16 %v36
  %v205 = vunpack.c.l.b16 %v37
  %v206 = vunpack.c.l.b16 %v38
  %v207 = vunpack.c.l.b16 %v39
  %v208 = vunpack.c.l.b16 %v40
  %v209 = vunpack.c.l.b16 %v41
  %v210 = vunpack.c.l.b16 %v42
  %v211 = vunpack.c.l.b16 %v43
  %v212 = vunpack.c.l.b16 %v44
  %v213 = vunpack.c.l.b16 %v45
  %v214 = vunpack.c.l.b16 %v46
  %v215 = vunpack.c.l.b16 %v47
  %v216 = vunpack.c.l.b16 %v48
  %v217 = vunpack.c.l.b16 %v49
  %v218 = vunpack.c.l.b16 %v50
  %v219 = vunpack.c.l.b16 %v51
  %v220 = vunpack.c.l.b16 %v52
  %v221 = vunpack.c.l.b16 %v53
  %v222 = vunpack.c.l.b16 %v54
  %v223 = vunpack.c.l.b16 %v55
  %v224 = vunpack.c.l.b16 %v56
  %v225 = vunpack.c.l.b16 %v57
  %v226 = vunpack.c.l.b16 %v58
  %v227 = vunpack.c.l.b16 %v59
  %v228 = vunpack.c.l.b16 %v60
  %v229 = vunpack.c.l.b16 %v61
  %v230 = vunpack.c.l.b16 %v62
  %v231 = vunpack.c.l.b16 %v63
  %v232 = vunpack.c.l.b16 %v64
  %v233 = vunpack.c.l.b16 %v65
  %v234 = vunpack.c.l.b16 %v66
  %v235 = vunpack.c.l.b16 %v67
  %v236 = vunpack.c.l.b16 %v68
  %v237 = vunpack.c.l.b16 %v69
  %v238 = vunpack.c.l.b16 %v70
  %v239 = vunpack.c.l.b16 %v71
  %v240 = vunpack.c.l.b16 %v72
  %v241 = vunpack.c.l.b16 %v73
  %v242 = vunpack.c.l.b16 %v74
  %v243 = vunpack.c.l.b16 %v75
  %v244 = vunpack.c.l.b16 %v76
  %v245 = vunpack.c.l.b16 %v77
  %v246 = vunpack.c.l.b16 %v78
  %v247 = vunpack.c.l.b16 %v79
  %v248 = vunpack.c.l.b16 %v80
  %v249 = vunpack.c.l.b16 %v81
  %v250 = vunpack.c.l.b16 %v82
  %v251 = vunpack.c.l.b16 %v83
  %v252 = vunpack.c.l.b16 %v84
  %v253 = vunpack.c.l.b16 %v85
  %v254 = vunpack.c.l.b16 %v86
  %v255 = vunpack.c.l.b16 %v87
  %v256 = vunpack.c.l.b16 %v88
  %v257 = vunpack.c.l.b16 %v89
  %v258 = vunpack.c.l.b16 %v90
  %v259 = vunpack.c.l.b16 %v91
  %v260 = vunpack.c.l.b16 %v92
  %v261 = vunpack.c.l.b16 %v93
  %v262 = vunpack.c.l.b16 %v94
  %v263 = vunpack.c.l.b16 %v95
  %v264 = vunpack.c.l.b16 %v96
  %v265 = vunpack.c.l.b16 %v97
  %v266 = vpack.c.b16 %v203, %v202
  %v267 = vpack.c.b16 %v205, %v204
  %v268 = vpack.c.b16 %v207, %v206
  %v269 = vpack.c.b16 %v209, %v208
  %v270 = vpack.c.b16 %v211, %v210
  %v271 = vpack.c.b16 %v213, %v212
  %v272 = vpack.c.b16 %v215, %v214
  %v273 = vpack.c.b16 %v217, %v216
  %v274 = vpack.c.b16 %v219, %v218
  %v275 = vpack.c.b16 %v221, %v220
  %v276 = vpack.c.b16 %v223, %v222
  %v277 = vpack.c.b16 %v225, %v224
  %v278 = vpack.c.b16 %v227, %v226
  %v279 = vpack.c.b16 %v229, %v228
  %v280 = vpack.c.b16 %v231, %v230
  %v281 = vpack.c.b16 %v233, %v232
  %v282 = vpack.c.b16 %v235, %v234
  %v283 = vpack.c.b16 %v237, %v236
  %v284 = vpack.c.b16 %v239, %v238
  %v285 = vpack.c.b16 %v241, %v240
  %v286 = vpack.c.b16 %v243, %v242
  %v287 = vpack.c.b16 %v245, %v244
  %v288 = vpack.c.b16 %v247, %v246
  %v289 = vpack.c.b16 %v249, %v248
  %v290 = vpack.c.b16 %v251, %v250
  %v291 = vpack.c.b16 %v253, %v252
  %v292 = vpack.c.b16 %v255, %v254
  %v293 = vpack.c.b16 %v257, %v256
  %v294 = vpack.c.b16 %v259, %v258
  %v295 = vpack.c.b16 %v261, %v260
  %v296 = vpack.c.b16 %v263, %v262
  %v297 = vpack.c.b16 %v265, %v264
  %330 = vmatpush.bf16.msra.mxu0 %v273
  %331 = vmatpush.bf16.msra.mxu0 %v272
  %332 = vmatpush.bf16.msra.mxu0 %v271
  %333 = vmatpush.bf16.msra.mxu0 %v270
  %334 = vmatpush.bf16.msra.mxu0 %v269
  %335 = vmatpush.bf16.msra.mxu0 %v268
  %336 = vmatpush.bf16.msra.mxu0 %v267
  %337 = vmatpush.bf16.msra.mxu0 %v266
  %338 = vmatmul.bf16.gmra.mxu0 %v122
  %v339 = vpop.f32.mrf.mxu0
  %v340 = vadd.f32 0.0, %v339
  %v341 = vpop.f32.mrf.mxu0
  %v342 = vadd.f32 0.0, %v341
  %343 = vmatmul.bf16.gmra.mxu0 %v126
  %v344 = vpop.f32.mrf.mxu0
  %v345 = vadd.f32 0.0, %v344
  %v346 = vpop.f32.mrf.mxu0
  %v347 = vadd.f32 0.0, %v346
  %348 = vdwg.mxu0
  %349 = vmatpush.bf16.msra.mxu0 %v281
  %350 = vmatpush.bf16.msra.mxu0 %v280
  %351 = vmatpush.bf16.msra.mxu0 %v279
  %352 = vmatpush.bf16.msra.mxu0 %v278
  %353 = vmatpush.bf16.msra.mxu0 %v277
  %354 = vmatpush.bf16.msra.mxu0 %v276
  %355 = vmatpush.bf16.msra.mxu0 %v275
  %356 = vmatpush.bf16.msra.mxu0 %v274
  %357 = vmatmul.bf16.gmra.mxu0 %v123
  %v358 = vpop.f32.mrf.mxu0
  %v359 = vadd.f32 %v340, %v358
  %v360 = vpop.f32.mrf.mxu0
  %v361 = vadd.f32 %v342, %v360
  %362 = vmatmul.bf16.gmra.mxu0 %v127
  %v363 = vpop.f32.mrf.mxu0
  %v364 = vadd.f32 %v345, %v363
  %v365 = vpop.f32.mrf.mxu0
  %v366 = vadd.f32 %v347, %v365
  %367 = vdwg.mxu0
  %368 = vmatpush.bf16.msra.mxu0 %v289
  %369 = vmatpush.bf16.msra.mxu0 %v288
  %370 = vmatpush.bf16.msra.mxu0 %v287
  %371 = vmatpush.bf16.msra.mxu0 %v286
  %372 = vmatpush.bf16.msra.mxu0 %v285
  %373 = vmatpush.bf16.msra.mxu0 %v284
  %374 = vmatpush.bf16.msra.mxu0 %v283
  %375 = vmatpush.bf16.msra.mxu0 %v282
  %376 = vmatmul.bf16.gmra.mxu0 %v124
  %v377 = vpop.f32.mrf.mxu0
  %v378 = vadd.f32 %v359, %v377
  %v379 = vpop.f32.mrf.mxu0
  %v380 = vadd.f32 %v361, %v379
  %381 = vmatmul.bf16.gmra.mxu0 %v128
  %v382 = vpop.f32.mrf.mxu0
  %v383 = vadd.f32 %v364, %v382
  %v384 = vpop.f32.mrf.mxu0
  %v385 = vadd.f32 %v366, %v384
  %386 = vdwg.mxu0
  %387 = vmatpush.bf16.msra.mxu0 %v297
  %388 = vmatpush.bf16.msra.mxu0 %v296
  %389 = vmatpush.bf16.msra.mxu0 %v295
  %390 = vmatpush.bf16.msra.mxu0 %v294
  %391 = vmatpush.bf16.msra.mxu0 %v293
  %392 = vmatpush.bf16.msra.mxu0 %v292
  %393 = vmatpush.bf16.msra.mxu0 %v291
  %394 = vmatpush.bf16.msra.mxu0 %v290
  %395 = vmatmul.bf16.gmra.mxu0 %v125
  %v396 = vpop.f32.mrf.mxu0
  %v397 = vadd.f32 %v378, %v396
  %v398 = vpop.f32.mrf.mxu0
  %v399 = vadd.f32 %v380, %v398
  %400 = vmatmul.bf16.gmra.mxu0 %v129
  %v401 = vpop.f32.mrf.mxu0
  %v402 = vadd.f32 %v383, %v401
  %v403 = vpop.f32.mrf.mxu0
  %v404 = vadd.f32 %v385, %v403
  %405 = vdwg.mxu0
  %v406 = vadd.f32 %v22, %v397
  %v407 = vadd.f32 %v23, %v399
  %v408 = vadd.f32 %v24, %v402
  %v409 = vadd.f32 %v25, %v404
  %410 = vst [vmem:[#allocation2] sm:$0xff] %v406
  %411 = vst [vmem:[#allocation2 + $0x8] sm:$0xff] %v407
  %412 = vst [vmem:[#allocation2 + $0x10] sm:$0xff] %v408
  %413 = vst [vmem:[#allocation2 + $0x18] sm:$0xff] %v409
  // Predicated region
  $region18: #{dqn_forward.6} parent=0 // pred_check
    %p414 = pneg %p14
  $region19: #{dqn_forward.6} parent=0 // pred_check_branch
    %416 = sbr.rel (%p414) target = $region21
  $region20: #{dqn_forward.6} parent=0 // pred_region
    %v417 = vld [vmem:[#allocation2] sm:$0xff]
    %v418 = vld [vmem:[#allocation2 + $0x8] sm:$0xff]
    %v419 = vld [vmem:[#allocation2 + $0x10] sm:$0xff]
    %v420 = vld [vmem:[#allocation2 + $0x18] sm:$0xff]
    %v421 = vld [vmem:[%s2] sm:$0x1]
    %v423 = vperm.slane %v421, 0
    %v425 = vadd.f32 %v417, %v423
    %v426 = vadd.f32 %v418, %v423
    %v427 = vadd.f32 %v419, %v423
    %v428 = vadd.f32 %v420, %v423
    %v429 = vmax.f32 %v425, 0.0
    %v430 = vmax.f32 %v426, 0.0
    %v431 = vmax.f32 %v427, 0.0
    %v432 = vmax.f32 %v428, 0.0
    %433 = vst [vmem:[%s3] sm:$0xff] %v429
    %434 = vst [vmem:[%s3 + $0x8] sm:$0xff] %v430
    %435 = vst [vmem:[%s3 + $0x10] sm:$0xff] %v431
    %436 = vst [vmem:[%s3 + $0x18] sm:$0xff] %v432
  $region21: #{dqn_forward.6} parent=0 // pred_fallthru
    _
  // Predicated region
  $region22: #{dqn_forward.6} parent=0 // pred_check
    _
  $region23: #{dqn_forward.6} parent=0 // pred_check_branch
    %438 = sbr.rel (0) target = $region25
  $region24: #{dqn_forward.6} parent=0 // pred_region
    _
  $region25: #{dqn_forward.6} parent=0 // pred_fallthru
    _
  // Predicated region
  $region26: #{dqn_forward.6} parent=0 // pred_check
    _
  $region27: #{dqn_forward.6} parent=0 // pred_check_branch
    %440 = sbr.rel (0) target = $region29
  $region28: #{dqn_forward.6} parent=0 // pred_region
    _
  $region29: #{dqn_forward.6} parent=0 // pred_fallthru
    _

// kernel: dqn_forward.8
$region0: #{dqn_forward.8}
  #allocation0 [shape = 'u32[]', space=smem, size = 0x4, offset = 0x4, fixed_abs, tag = 'smem constant byte address 0x4 - core index']
  #allocation1 [shape = 'u32[72,128]{1,0:T(1,128)}', space=vmem, size = 0x9000, scoped, tag = 'internal scratch']
  #allocation2 [shape = 'f32[16,256]{1,0:T(8,128)}', space=vmem, size = 0x4000, scoped, tag = 'scratch operand']
  %s0 = inlined_call_operand.vmem [shape: bf16[16,256], index: 0, kind: input, shape index: {}]
  %s1 = inlined_call_operand.vmem [shape: bf16[256,512], index: 1, kind: input, shape index: {}]
  %s2 = inlined_call_operand.vmem [shape: f32[1,512], index: 2, kind: input, shape index: {}]
  %s3 = inlined_call_operand.vmem [shape: f32[16,512], index: 3, kind: output, shape index: {}]
  %s4 = sld [smem:[#allocation0]]
  $region110: #{dqn_forward.8} parent=0
    _
  %s6 = ssub.s32 1, %s4
  %s7 = scalar_select 0, %s6, %s4
  $region1: #{dqn_forward.8} parent=0
    #allocation3 [shape = 'u8[262144]{0}', space=vmem, size = 0x40000, scoped, tag = 'input window, operand 1']
    #allocation4 [shape = 'u8[32768]{0}', space=vmem, size = 0x8000, scoped, tag = 'output window, operand 0']
    loop: start=0, step=1, limit=4
    $region2: #{dqn_forward.8} parent=1 // loop_pre_header
      _
    $region3: #{dqn_forward.8} parent=1 // loop_header
      %s9 = sphi 0, %s13
      %p10 = scmp.ge.s32.totalorder %s9, 4
      %s16 = sphi 0, %s35
      %s17 = sphi 0, %s31
      %s18 = sphi 0, %s27
      %s19 = sphi 0, %s16
      %s20 = sphi 0, %s17
      %s21 = sphi 0, %s18
      %s22 = sphi 0, %s19
      %s23 = sphi 0, %s20
      %s24 = sphi 0, %s21
      %s40 = sphi 0, %s42
      %s43 = sphi 0, %s40
      %s44 = sphi 0, %s43
      %s60 = sphi 0, %s44
      %s68 = sphi 0, %s70
      %s71 = sphi 0, %s68
      %s72 = sphi 0, %s71
      %s88 = sphi 0, %s72
      %s94 = sphi 0, %s96
      %s97 = sphi 0, %s94
      %s98 = sphi 0, %s97
      %s114 = sphi 0, %s98
      %s122 = sphi 0, %s124
      %s125 = sphi 0, %s122
      %s126 = sphi 0, %s125
      %s142 = sphi 0, %s126
    $region4: #{dqn_forward.8} parent=1 // loop_header_branch
      %12 = sbr.rel (%p10) target = $region8
    $region5: #{dqn_forward.8} parent=1 // loop_body
      %s14 = ssub.s32 %s9, 1
      %s15 = ssub.s32 %s9, 2
      %s25 = sadd.s32 1, %s18
      %p26 = scmp.ge.s32.totalorder %s25, 1
      %s27 = scalar_select %p26, 0, %s25
      %s28 = sadd.s32 1, %s17
      %s29 = scalar_select %p26, %s28, %s17
      %p30 = scmp.ge.s32.totalorder %s29, 2
      %s31 = scalar_select %p30, 0, %s29
      %s32 = sadd.s32 1, %s16
      %s33 = scalar_select %p30, %s32, %s16
      %p34 = scmp.ge.s32.totalorder %s33, 1
      %s35 = scalar_select %p34, 0, %s33
      %s36 = ssub.s32 %s16, %s35
      %s37 = ssub.s32 %s18, %s27
      %s38 = sor.u32 %s36, %s37
      %p39 = scmp.eq.s32.totalorder %s38, 0
      %s41 = sadd.s32 %s40, 1
      %s42 = scalar_select %p39, %s40, %s41
      %p45 = pneg %p39
      %p46 = scmp.eq.s32.totalorder %s9, 1
      %p47 = por %p45, %p46
      %p48 = scmp.ne.s32.totalorder %s40, %s43
      %p49 = scmp.eq.s32.totalorder %s9, 0
      %p50 = por %p48, %p49
      %p51 = scmp.ne.s32.totalorder %s40, %s43
      %p52 = scmp.eq.s32.totalorder %s14, 1
      %p53 = por %p51, %p52
      %p54 = scmp.ne.s32.totalorder %s43, %s44
      %p55 = scmp.eq.s32.totalorder %s14, 0
      %p56 = por %p54, %p55
      %p57 = scmp.ne.s32.totalorder %s43, %s44
      %p58 = scmp.eq.s32.totalorder %s15, 1
      %p59 = por %p57, %p58
      %p61 = scmp.ne.s32.totalorder %s44, %s60
      %p62 = scmp.eq.s32.totalorder %s15, 0
      %p63 = por %p61, %p62
      %s64 = ssub.s32 %s18, %s27
      %s65 = ssub.s32 %s17, %s31
      %s66 = sor.u32 %s64, %s65
      %p67 = scmp.eq.s32.totalorder %s66, 0
      %s69 = sadd.s32 %s68, 1
      %s70 = scalar_select %p67, %s68, %s69
      %p73 = pneg %p67
      %p74 = scmp.eq.s32.totalorder %s9, 1
      %p75 = por %p73, %p74
      %p76 = scmp.ne.s32.totalorder %s68, %s71
      %p77 = scmp.eq.s32.totalorder %s9, 0
      %p78 = por %p76, %p77
      %p79 = scmp.ne.s32.totalorder %s68, %s71
      %p80 = scmp.eq.s32.totalorder %s14, 1
      %p81 = por %p79, %p80
      %p82 = scmp.ne.s32.totalorder %s71, %s72
      %p83 = scmp.eq.s32.totalorder %s14, 0
      %p84 = por %p82, %p83
      %p85 = scmp.ne.s32.totalorder %s71, %s72
      %p86 = scmp.eq.s32.totalorder %s15, 1
      %p87 = por %p85, %p86
      %p89 = scmp.ne.s32.totalorder %s72, %s88
      %p90 = scmp.eq.s32.totalorder %s15, 0
      %p91 = por %p89, %p90
      %s92 = ssub.s32 %s17, %s31
      %p93 = scmp.eq.s32.totalorder %s92, 0
      %s95 = sadd.s32 %s94, 1
      %s96 = scalar_select %p93, %s94, %s95
      %p99 = pneg %p93
      %p100 = scmp.eq.s32.totalorder %s9, 1
      %p101 = por %p99, %p100
      %p102 = scmp.ne.s32.totalorder %s94, %s97
      %p103 = scmp.eq.s32.totalorder %s9, 0
      %p104 = por %p102, %p103
      %p105 = scmp.ne.s32.totalorder %s94, %s97
      %p106 = scmp.eq.s32.totalorder %s14, 1
      %p107 = por %p105, %p106
      %p108 = scmp.ne.s32.totalorder %s97, %s98
      %p109 = scmp.eq.s32.totalorder %s14, 0
      %p110 = por %p108, %p109
      %p111 = scmp.ne.s32.totalorder %s97, %s98
      %p112 = scmp.eq.s32.totalorder %s15, 1
      %p113 = por %p111, %p112
      %p115 = scmp.ne.s32.totalorder %s98, %s114
      %p116 = scmp.eq.s32.totalorder %s15, 0
      %p117 = por %p115, %p116
      %s118 = ssub.s32 %s16, %s35
      %s119 = ssub.s32 %s17, %s31
      %s120 = sor.u32 %s118, %s119
      %p121 = scmp.eq.s32.totalorder %s120, 0
      %s123 = sadd.s32 %s122, 1
      %s124 = scalar_select %p121, %s122, %s123
      %p127 = pneg %p121
      %p128 = scmp.eq.s32.totalorder %s9, 1
      %p129 = por %p127, %p128
      %p130 = scmp.ne.s32.totalorder %s122, %s125
      %p131 = scmp.eq.s32.totalorder %s9, 0
      %p132 = por %p130, %p131
      %p133 = scmp.ne.s32.totalorder %s122, %s125
      %p134 = scmp.eq.s32.totalorder %s14, 1
      %p135 = por %p133, %p134
      %p136 = scmp.ne.s32.totalorder %s125, %s126
      %p137 = scmp.eq.s32.totalorder %s14, 0
      %p138 = por %p136, %p137
      %p139 = scmp.ne.s32.totalorder %s125, %s126
      %p140 = scmp.eq.s32.totalorder %s15, 1
      %p141 = por %p139, %p140
      %p143 = scmp.ne.s32.totalorder %s126, %s142
      %p144 = scmp.eq.s32.totalorder %s15, 0
      %p145 = por %p143, %p144
      %p146 = scmp.le.s32.totalorder 1, %s9
      %p147 = scmp.lt.s32.totalorder %s9, 3
      %p148 = pnand %p146, %p147
      %p149 = pneg %p148
      // Predicated region
      $region9: #{dqn_forward.8} parent=5 // pred_check
        _
      $region10: #{dqn_forward.8} parent=5 // pred_check_branch
        %151 = sbr.rel (%p148) target = $region12
      $region11: #{dqn_forward.8} parent=5 // pred_region
        %s152 = ssub.s32 %s9, 1
        // Predicated region
        $region13: #{dqn_forward.8} parent=11 // pred_check
          %p153 = pneg %p56
        $region14: #{dqn_forward.8} parent=11 // pred_check_branch
          %155 = sbr.rel (%p153) target = $region16
        $region15: #{dqn_forward.8} parent=11 // pred_region
          %s156 = smul.u32 2, %s19
          %s157 = smul.u32 2, %s21
          %p158 = scmp.lt.s32.totalorder %s156, 1
          %s159 = scalar_select %p158, %s156, 1
          %p160 = scmp.lt.s32.totalorder %s157, 1
          %s161 = scalar_select %p160, %s157, 1
          %s162 = smul.addr %s159, 2
          %s163 = sadd.s32 %s161, %s162
          %s164 = smul.addr %s163, 4
          %s165 = scalar_lea.vmem %s0, %s164
          %s166 = smul.u32 2, %s19
          %s167 = smul.u32 2, %s21
        $region16: #{dqn_forward.8} parent=11 // pred_fallthru
          _
      $region12: #{dqn_forward.8} parent=5 // pred_fallthru
        _
      %p168 = scmp.lt.s32.totalorder %s9, 2
      // Predicated region
      $region17: #{dqn_forward.8} parent=5 // pred_check
        %p169 = pneg %p168
      $region18: #{dqn_forward.8} parent=5 // pred_check_branch
        %171 = sbr.rel (%p169) target = $region20
      $region19: #{dqn_forward.8} parent=5 // pred_region
        // Predicated region
        $region21: #{dqn_forward.8} parent=19 // pred_check
          %p172 = pneg %p78
        $region22: #{dqn_forward.8} parent=19 // pred_check_branch
          %174 = sbr.rel (%p172) target = $region24
        $region23: #{dqn_forward.8} parent=19 // pred_region
          %s175 = sand.u32 %s68, 1
          %s176 = sand.u32 %s68, 1
          %s177 = smul.addr %s176, 256
          %s178 = scalar_lea.vmem [#allocation3], %s177
          %s179 = smul.u32 32, %s18
          %s180 = smul.u32 2, %s17
          %s181 = smul.addr %s179, 4
          %s182 = sadd.s32 %s180, %s181
          %s183 = smul.addr %s182, 4
          %s184 = scalar_lea.vmem %s1, %s183
          // Predicated region
          $region25: #{dqn_forward.8} parent=23 // pred_check
            _
          $region26: #{dqn_forward.8} parent=23 // pred_check_branch
            %186 = sbr.rel (0) target = $region28
          $region27: #{dqn_forward.8} parent=23 // pred_region
            // Predicated region
            $region29: #{dqn_forward.8} parent=27 // pred_check
              _
            $region30: #{dqn_forward.8} parent=27 // pred_check_branch
              %188 = sbr.rel (0) target = $region32
            $region31: #{dqn_forward.8} parent=27 // pred_region
              // Predicated region
              $region44: #{dqn_forward.8} parent=31 // pred_check
                _
              $region45: #{dqn_forward.8} parent=31 // pred_check_branch
                %266 = sbr.rel (0) target = $region47
              $region46: #{dqn_forward.8} parent=31 // pred_region
                loop: start=0, step=1, limit=1
                $region48: #{dqn_forward.8} parent=46 // loop_pre_header
                  _
                $region49: #{dqn_forward.8} parent=46 // loop_header
                  %s268 = sphi 0, %s272
                  %p269 = scmp.ge.s32.totalorder %s268, 1
                  %s273 = sphi %s184, %s184
                  %s274 = sphi %s178, %s178
                $region50: #{dqn_forward.8} parent=46 // loop_header_branch
                  %271 = sbr.rel (%p269) target = $region54
                $region51: #{dqn_forward.8} parent=46 // loop_body
                  %v275 = vld [vmem:[%s273] sm:$0xff]
                  %276 = vst [vmem:[%s274] sm:$0xff] %v275
                  %v277 = vld [vmem:[%s273 + $0x10] sm:$0xff]
                  %278 = vst [vmem:[%s274 + $0x8] sm:$0xff] %v277
                  %v279 = vld [vmem:[%s273 + $0x20] sm:$0xff]
                  %280 = vst [vmem:[%s274 + $0x10] sm:$0xff] %v279
                  %v281 = vld [vmem:[%s273 + $0x30] sm:$0xff]
                  %282 = vst [vmem:[%s274 + $0x18] sm:$0xff] %v281
                  %v283 = vld [vmem:[%s273 + $0x40] sm:$0xff]
                  %284 = vst [vmem:[%s274 + $0x20] sm:$0xff] %v283
                  %v285 = vld [vmem:[%s273 + $0x50] sm:$0xff]
                  %286 = vst [vmem:[%s274 + $0x28] sm:$0xff] %v285
                  %v287 = vld [vmem:[%s273 + $0x60] sm:$0xff]
                  %288 = vst [vmem:[%s274 + $0x30] sm:$0xff] %v287
                  %v289 = vld [vmem:[%s273 + $0x70] sm:$0xff]
                  %290 = vst [vmem:[%s274 + $0x38] sm:$0xff] %v289
                  %v291 = vld [vmem:[%s273 + $0x80] sm:$0xff]
                  %292 = vst [vmem:[%s274 + $0x40] sm:$0xff] %v291
                  %v293 = vld [vmem:[%s273 + $0x90] sm:$0xff]
                  %294 = vst [vmem:[%s274 + $0x48] sm:$0xff] %v293
                  %v295 = vld [vmem:[%s273 + $0xa0] sm:$0xff]
                  %296 = vst [vmem:[%s274 + $0x50] sm:$0xff] %v295
                  %v297 = vld [vmem:[%s273 + $0xb0] sm:$0xff]
                  %298 = vst [vmem:[%s274 + $0x58] sm:$0xff] %v297
                  %v299 = vld [vmem:[%s273 + $0xc0] sm:$0xff]
                  %300 = vst [vmem:[%s274 + $0x60] sm:$0xff] %v299
                  %v301 = vld [vmem:[%s273 + $0xd0] sm:$0xff]
                  %302 = vst [vmem:[%s274 + $0x68] sm:$0xff] %v301
                  %v303 = vld [vmem:[%s273 + $0xe0] sm:$0xff]
                  %304 = vst [vmem:[%s274 + $0x70] sm:$0xff] %v303
                  %v305 = vld [vmem:[%s273 + $0xf0] sm:$0xff]
                  %306 = vst [vmem:[%s274 + $0x78] sm:$0xff] %v305
                  %v307 = vld [vmem:[%s273 + $0x100] sm:$0xff]
                  %308 = vst [vmem:[%s274 + $0x80] sm:$0xff] %v307
                  %v309 = vld [vmem:[%s273 + $0x110] sm:$0xff]
                  %310 = vst [vmem:[%s274 + $0x88] sm:$0xff] %v309
                  %v311 = vld [vmem:[%s273 + $0x120] sm:$0xff]
                  %312 = vst [vmem:[%s274 + $0x90] sm:$0xff] %v311
                  %v313 = vld [vmem:[%s273 + $0x130] sm:$0xff]
                  %314 = vst [vmem:[%s274 + $0x98] sm:$0xff] %v313
                  %v315 = vld [vmem:[%s273 + $0x140] sm:$0xff]
                  %316 = vst [vmem:[%s274 + $0xa0] sm:$0xff] %v315
                  %v317 = vld [vmem:[%s273 + $0x150] sm:$0xff]
                  %318 = vst [vmem:[%s274 + $0xa8] sm:$0xff] %v317
                  %v319 = vld [vmem:[%s273 + $0x160] sm:$0xff]
                  %320 = vst [vmem:[%s274 + $0xb0] sm:$0xff] %v319
                  %v321 = vld [vmem:[%s273 + $0x170] sm:$0xff]
                  %322 = vst [vmem:[%s274 + $0xb8] sm:$0xff] %v321
                  %v323 = vld [vmem:[%s273 + $0x180] sm:$0xff]
                  %324 = vst [vmem:[%s274 + $0xc0] sm:$0xff] %v323
                  %v325 = vld [vmem:[%s273 + $0x190] sm:$0xff]
                  %326 = vst [vmem:[%s274 + $0xc8] sm:$0xff] %v325
                  %v327 = vld [vmem:[%s273 + $0x1a0] sm:$0xff]
                  %328 = vst [vmem:[%s274 + $0xd0] sm:$0xff] %v327
                  %v329 = vld [vmem:[%s273 + $0x1b0] sm:$0xff]
                  %330 = vst [vmem:[%s274 + $0xd8] sm:$0xff] %v329
                  %v331 = vld [vmem:[%s273 + $0x1c0] sm:$0xff]
                  %332 = vst [vmem:[%s274 + $0xe0] sm:$0xff] %v331
                  %v333 = vld [vmem:[%s273 + $0x1d0] sm:$0xff]
                  %334 = vst [vmem:[%s274 + $0xe8] sm:$0xff] %v333
                  %v335 = vld [vmem:[%s273 + $0x1e0] sm:$0xff]
                  %336 = vst [vmem:[%s274 + $0xf0] sm:$0xff] %v335
                  %v337 = vld [vmem:[%s273 + $0x1f0] sm:$0xff]
                  %338 = vst [vmem:[%s274 + $0xf8] sm:$0xff] %v337
                $region52: #{dqn_forward.8} parent=46 // loop_footer
                  %s272 = sadd.s32 1, %s268
                $region53: #{dqn_forward.8} parent=46 // loop_footer_branch
                  %267 = sbr.rel target = $region49
                $region54: #{dqn_forward.8} parent=46 // loop_exit
                  _
              $region47: #{dqn_forward.8} parent=31 // pred_fallthru
                _
              // Predicated region
              $region55: #{dqn_forward.8} parent=31 // pred_check
                _
              $region56: #{dqn_forward.8} parent=31 // pred_check_branch
                %340 = sbr.rel target = $region58
              $region57: #{dqn_forward.8} parent=31 // pred_region
                _
              $region58: #{dqn_forward.8} parent=31 // pred_fallthru
                _
            $region32: #{dqn_forward.8} parent=27 // pred_fallthru
              _
            // Predicated region
            $region33: #{dqn_forward.8} parent=27 // pred_check
              _
            $region34: #{dqn_forward.8} parent=27 // pred_check_branch
              %190 = sbr.rel target = $region36
            $region35: #{dqn_forward.8} parent=27 // pred_region
              %s192 = ssub.s32 256, 1
              loop: start=0, step=1, limit=1
              $region37: #{dqn_forward.8} parent=35 // loop_pre_header
                _
              $region38: #{dqn_forward.8} parent=35 // loop_header
                %s194 = sphi 0, %s198
                %p195 = scmp.ge.s32.totalorder %s194, 1
                %s199 = sphi %s184, %s184
                %s200 = sphi %s178, %s178
              $region39: #{dqn_forward.8} parent=35 // loop_header_branch
                %197 = sbr.rel (%p195) target = $region43
              $region40: #{dqn_forward.8} parent=35 // loop_body
                %v201 = vld [vmem:[%s199] sm:%s192]
                %202 = vst [vmem:[%s200] sm:%s192] %v201
                %v203 = vld [vmem:[%s199 + $0x10] sm:%s192]
                %204 = vst [vmem:[%s200 + $0x8] sm:%s192] %v203
                %v205 = vld [vmem:[%s199 + $0x20] sm:%s192]
                %206 = vst [vmem:[%s200 + $0x10] sm:%s192] %v205
                %v207 = vld [vmem:[%s199 + $0x30] sm:%s192]
                %208 = vst [vmem:[%s200 + $0x18] sm:%s192] %v207
                %v209 = vld [vmem:[%s199 + $0x40] sm:%s192]
                %210 = vst [vmem:[%s200 + $0x20] sm:%s192] %v209
                %v211 = vld [vmem:[%s199 + $0x50] sm:%s192]
                %212 = vst [vmem:[%s200 + $0x28] sm:%s192] %v211
                %v213 = vld [vmem:[%s199 + $0x60] sm:%s192]
                %214 = vst [vmem:[%s200 + $0x30] sm:%s192] %v213
                %v215 = vld [vmem:[%s199 + $0x70] sm:%s192]
                %216 = vst [vmem:[%s200 + $0x38] sm:%s192] %v215
                %v217 = vld [vmem:[%s199 + $0x80] sm:%s192]
                %218 = vst [vmem:[%s200 + $0x40] sm:%s192] %v217
                %v219 = vld [vmem:[%s199 + $0x90] sm:%s192]
                %220 = vst [vmem:[%s200 + $0x48] sm:%s192] %v219
                %v221 = vld [vmem:[%s199 + $0xa0] sm:%s192]
                %222 = vst [vmem:[%s200 + $0x50] sm:%s192] %v221
                %v223 = vld [vmem:[%s199 + $0xb0] sm:%s192]
                %224 = vst [vmem:[%s200 + $0x58] sm:%s192] %v223
                %v225 = vld [vmem:[%s199 + $0xc0] sm:%s192]
                %226 = vst [vmem:[%s200 + $0x60] sm:%s192] %v225
                %v227 = vld [vmem:[%s199 + $0xd0] sm:%s192]
                %228 = vst [vmem:[%s200 + $0x68] sm:%s192] %v227
                %v229 = vld [vmem:[%s199 + $0xe0] sm:%s192]
                %230 = vst [vmem:[%s200 + $0x70] sm:%s192] %v229
                %v231 = vld [vmem:[%s199 + $0xf0] sm:%s192]
                %232 = vst [vmem:[%s200 + $0x78] sm:%s192] %v231
                %v233 = vld [vmem:[%s199 + $0x100] sm:%s192]
                %234 = vst [vmem:[%s200 + $0x80] sm:%s192] %v233
                %v235 = vld [vmem:[%s199 + $0x110] sm:%s192]
                %236 = vst [vmem:[%s200 + $0x88] sm:%s192] %v235
                %v237 = vld [vmem:[%s199 + $0x120] sm:%s192]
                %238 = vst [vmem:[%s200 + $0x90] sm:%s192] %v237
                %v239 = vld [vmem:[%s199 + $0x130] sm:%s192]
                %240 = vst [vmem:[%s200 + $0x98] sm:%s192] %v239
                %v241 = vld [vmem:[%s199 + $0x140] sm:%s192]
                %242 = vst [vmem:[%s200 + $0xa0] sm:%s192] %v241
                %v243 = vld [vmem:[%s199 + $0x150] sm:%s192]
                %244 = vst [vmem:[%s200 + $0xa8] sm:%s192] %v243
                %v245 = vld [vmem:[%s199 + $0x160] sm:%s192]
                %246 = vst [vmem:[%s200 + $0xb0] sm:%s192] %v245
                %v247 = vld [vmem:[%s199 + $0x170] sm:%s192]
                %248 = vst [vmem:[%s200 + $0xb8] sm:%s192] %v247
                %v249 = vld [vmem:[%s199 + $0x180] sm:%s192]
                %250 = vst [vmem:[%s200 + $0xc0] sm:%s192] %v249
                %v251 = vld [vmem:[%s199 + $0x190] sm:%s192]
                %252 = vst [vmem:[%s200 + $0xc8] sm:%s192] %v251
                %v253 = vld [vmem:[%s199 + $0x1a0] sm:%s192]
                %254 = vst [vmem:[%s200 + $0xd0] sm:%s192] %v253
                %v255 = vld [vmem:[%s199 + $0x1b0] sm:%s192]
                %256 = vst [vmem:[%s200 + $0xd8] sm:%s192] %v255
                %v257 = vld [vmem:[%s199 + $0x1c0] sm:%s192]
                %258 = vst [vmem:[%s200 + $0xe0] sm:%s192] %v257
                %v259 = vld [vmem:[%s199 + $0x1d0] sm:%s192]
                %260 = vst [vmem:[%s200 + $0xe8] sm:%s192] %v259
                %v261 = vld [vmem:[%s199 + $0x1e0] sm:%s192]
                %262 = vst [vmem:[%s200 + $0xf0] sm:%s192] %v261
                %v263 = vld [vmem:[%s199 + $0x1f0] sm:%s192]
                %264 = vst [vmem:[%s200 + $0xf8] sm:%s192] %v263
              $region41: #{dqn_forward.8} parent=35 // loop_footer
                %s198 = sadd.s32 1, %s194
              $region42: #{dqn_forward.8} parent=35 // loop_footer_branch
                %193 = sbr.rel target = $region38
              $region43: #{dqn_forward.8} parent=35 // loop_exit
                _
            $region36: #{dqn_forward.8} parent=27 // pred_fallthru
              _
          $region28: #{dqn_forward.8} parent=23 // pred_fallthru
            _
          %341 = vnop
        $region24: #{dqn_forward.8} parent=19 // pred_fallthru
          _
        // Predicated region
        $region59: #{dqn_forward.8} parent=19 // pred_check
          %p342 = pneg %p104
        $region60: #{dqn_forward.8} parent=19 // pred_check_branch
          %344 = sbr.rel (%p342) target = $region62
        $region61: #{dqn_forward.8} parent=19 // pred_region
          %s345 = smul.u32 2, %s17
          %p346 = scmp.lt.s32.totalorder %s345, 3
          %s347 = scalar_select %p346, %s345, 3
          %s348 = scalar_lea.vmem %s2, %s347
          %s349 = smul.u32 2, %s17
        $region62: #{dqn_forward.8} parent=19 // pred_fallthru
          _
      $region20: #{dqn_forward.8} parent=5 // pred_fallthru
        _
      %p350 = scmp.le.s32.totalorder 1, %s9
      %p351 = scmp.lt.s32.totalorder %s9, 3
      %p352 = pnand %p350, %p351
      %p353 = pneg %p352
      // Predicated region
      $region63: #{dqn_forward.8} parent=5 // pred_check
        _
      $region64: #{dqn_forward.8} parent=5 // pred_check_branch
        %355 = sbr.rel (%p352) target = $region66
      $region65: #{dqn_forward.8} parent=5 // pred_region
        %s356 = ssub.s32 %s9, 1
        %s357 = sand.u32 %s71, 1
        %s358 = sand.u32 %s71, 1
        %s359 = smul.addr %s358, 256
        %s360 = scalar_lea.vmem [#allocation3], %s359
        // Predicated region
        $region67: #{dqn_forward.8} parent=65 // pred_check
          %p361 = pneg %p84
        $region68: #{dqn_forward.8} parent=65 // pred_check_branch
          %363 = sbr.rel (%p361) target = $region70
        $region69: #{dqn_forward.8} parent=65 // pred_region
          _
        $region70: #{dqn_forward.8} parent=65 // pred_fallthru
          _
        %s364 = smul.u32 2, %s19
        %s365 = smul.u32 2, %s21
        %p366 = scmp.lt.s32.totalorder %s364, 1
        %s367 = scalar_select %p366, %s364, 1
        %p368 = scmp.lt.s32.totalorder %s365, 1
        %s369 = scalar_select %p368, %s365, 1
        %s370 = smul.addr %s367, 2
        %s371 = sadd.s32 %s369, %s370
        %s372 = smul.addr %s371, 4
        %s373 = scalar_lea.vmem %s0, %s372
        %p374 = pneg %p56
        %p375 = pneg %p53
        %s376 = sand.u32 %s71, 1
        %s377 = sand.u32 %s71, 1
        %s378 = smul.addr %s377, 256
        %s379 = scalar_lea.vmem [#allocation3], %s378
        %p380 = pneg %p84
        %p381 = pneg %p81
        %s382 = smul.u32 2, %s20
        %p383 = scmp.lt.s32.totalorder %s382, 3
        %s384 = scalar_select %p383, %s382, 3
        %s385 = scalar_lea.vmem %s2, %s384
        %p386 = pneg %p110
        %p387 = pneg %p107
        %p388 = pneg %p138
        %p389 = pneg %p135
        %s390 = sand.u32 %s125, 1
        %s391 = sand.u32 %s125, 1
        %s392 = smul.addr %s391, 32
        %s393 = scalar_lea.vmem [#allocation4], %s392
        %s394 = smul.u32 2, %s19
        %s395 = smul.u32 2, %s21
        %p396 = scmp.lt.s32.totalorder %s394, 1
        %s397 = scalar_select %p396, %s394, 1
        %p398 = scmp.lt.s32.totalorder %s395, 1
        %s399 = scalar_select %p398, %s395, 1
        %s400 = smul.addr %s397, 2
        %s401 = sadd.s32 %s399, %s400
        %s402 = smul.addr %s401, 4
        %s403 = scalar_lea.vmem %s0, %s402
        %s404 = smul.u32 2, %s19
        %s405 = smul.u32 2, %s21
        %s406 = smul.u32 32, %s21
        %s407 = smul.u32 2, %s20
        %s408 = smul.u32 2, %s20
        %p409 = scmp.lt.s32.totalorder %s408, 3
        %s410 = scalar_select %p409, %s408, 3
        %s411 = scalar_lea.vmem %s2, %s410
        %s412 = smul.u32 2, %s20
        %s413 = smul.u32 2, %s19
        %s414 = smul.u32 2, %s20
        %p415 = scmp.eq.s32.totalorder %s21, 0
        // Predicated region
        $region71: #{dqn_forward.8} parent=65 // pred_check
          %p416 = pneg %p415
        $region72: #{dqn_forward.8} parent=65 // pred_check_branch
          %418 = sbr.rel (%p416) target = $region74
        $region73: #{dqn_forward.8} parent=65 // pred_region
          %419 = vst [vmem:[#allocation2] sm:$0xff] 0.0
          %420 = vst [vmem:[#allocation2 + $0x8] sm:$0xff] 0.0
          %421 = vst [vmem:[#allocation2 + $0x10] sm:$0xff] 0.0
          %422 = vst [vmem:[#allocation2 + $0x18] sm:$0xff] 0.0
        $region74: #{dqn_forward.8} parent=65 // pred_fallthru
          _
        %v423 = vld [vmem:[#allocation2] sm:$0xff]
        %v424 = vld [vmem:[#allocation2 + $0x8] sm:$0xff]
        %v425 = vld [vmem:[#allocation2 + $0x10] sm:$0xff]
        %v426 = vld [vmem:[#allocation2 + $0x18] sm:$0xff]
        %v427 = vld [vmem:[%s403] sm:$0xff]
        %v428 = vld [vmem:[%s403 + $0x8] sm:$0xff]
        %v429 = vld [vmem:[%s360] sm:$0xff]
        %v430 = vld [vmem:[%s360 + $0x8] sm:$0xff]
        %v431 = vld [vmem:[%s360 + $0x10] sm:$0xff]
        %v432 = vld [vmem:[%s360 + $0x18] sm:$0xff]
        %v433 = vld [vmem:[%s360 + $0x20] sm:$0xff]
        %v434 = vld [vmem:[%s360 + $0x28] sm:$0xff]
        %v435 = vld [vmem:[%s360 + $0x30] sm:$0xff]
        %v436 = vld [vmem:[%s360 + $0x38] sm:$0xff]
        %v437 = vld [vmem:[%s360 + $0x40] sm:$0xff]
        %v438 = vld [vmem:[%s360 + $0x48] sm:$0xff]
        %v439 = vld [vmem:[%s360 + $0x50] sm:$0xff]
        %v440 = vld [vmem:[%s360 + $0x58] sm:$0xff]
        %v441 = vld [vmem:[%s360 + $0x60] sm:$0xff]
        %v442 = vld [vmem:[%s360 + $0x68] sm:$0xff]
        %v443 = vld [vmem:[%s360 + $0x70] sm:$0xff]
        %v444 = vld [vmem:[%s360 + $0x78] sm:$0xff]
        %v445 = vld [vmem:[%s360 + $0x80] sm:$0xff]
        %v446 = vld [vmem:[%s360 + $0x88] sm:$0xff]
        %v447 = vld [vmem:[%s360 + $0x90] sm:$0xff]
        %v448 = vld [vmem:[%s360 + $0x98] sm:$0xff]
        %v449 = vld [vmem:[%s360 + $0xa0] sm:$0xff]
        %v450 = vld [vmem:[%s360 + $0xa8] sm:$0xff]
        %v451 = vld [vmem:[%s360 + $0xb0] sm:$0xff]
        %v452 = vld [vmem:[%s360 + $0xb8] sm:$0xff]
        %v453 = vld [vmem:[%s360 + $0xc0] sm:$0xff]
        %v454 = vld [vmem:[%s360 + $0xc8] sm:$0xff]
        %v455 = vld [vmem:[%s360 + $0xd0] sm:$0xff]
        %v456 = vld [vmem:[%s360 + $0xd8] sm:$0xff]
        %v457 = vld [vmem:[%s360 + $0xe0] sm:$0xff]
        %v458 = vld [vmem:[%s360 + $0xe8] sm:$0xff]
        %v459 = vld [vmem:[%s360 + $0xf0] sm:$0xff]
        %v460 = vld [vmem:[%s360 + $0xf8] sm:$0xff]
        %v463 = vunpack.c.l.b16 %v427
        %v464 = vunpack.c.h.b16 %v427
        %v465 = vunpack.c.l.b16 %v428
        %v466 = vunpack.c.h.b16 %v428
        %v467 = vpack.c.b16 %v465, %v463
        %v468 = vpack.c.b16 %v466, %v464
        %v503 = vunpack.c.l.b16 %v429
        %v504 = vunpack.c.h.b16 %v429
        %v505 = vunpack.c.l.b16 %v430
        %v506 = vunpack.c.h.b16 %v430
        %v507 = vunpack.c.l.b16 %v431
        %v508 = vunpack.c.h.b16 %v431
        %v509 = vunpack.c.l.b16 %v432
        %v510 = vunpack.c.h.b16 %v432
        %v511 = vunpack.c.l.b16 %v433
        %v512 = vunpack.c.h.b16 %v433
        %v513 = vunpack.c.l.b16 %v434
        %v514 = vunpack.c.h.b16 %v434
        %v515 = vunpack.c.l.b16 %v435
        %v516 = vunpack.c.h.b16 %v435
        %v517 = vunpack.c.l.b16 %v436
        %v518 = vunpack.c.h.b16 %v436
        %v519 = vunpack.c.l.b16 %v437
        %v520 = vunpack.c.h.b16 %v437
        %v521 = vunpack.c.l.b16 %v438
        %v522 = vunpack.c.h.b16 %v438
        %v523 = vunpack.c.l.b16 %v439
        %v524 = vunpack.c.h.b16 %v439
        %v525 = vunpack.c.l.b16 %v440
        %v526 = vunpack.c.h.b16 %v440
        %v527 = vunpack.c.l.b16 %v441
        %v528 = vunpack.c.h.b16 %v441
        %v529 = vunpack.c.l.b16 %v442
        %v530 = vunpack.c.h.b16 %v442
        %v531 = vunpack.c.l.b16 %v443
        %v532 = vunpack.c.h.b16 %v443
        %v533 = vunpack.c.l.b16 %v444
        %v534 = vunpack.c.h.b16 %v444
        %v535 = vunpack.c.l.b16 %v445
        %v536 = vunpack.c.h.b16 %v445
        %v537 = vunpack.c.l.b16 %v446
        %v538 = vunpack.c.h.b16 %v446
        %v539 = vunpack.c.l.b16 %v447
        %v540 = vunpack.c.h.b16 %v447
        %v541 = vunpack.c.l.b16 %v448
        %v542 = vunpack.c.h.b16 %v448
        %v543 = vunpack.c.l.b16 %v449
        %v544 = vunpack.c.h.b16 %v449
        %v545 = vunpack.c.l.b16 %v450
        %v546 = vunpack.c.h.b16 %v450
        %v547 = vunpack.c.l.b16 %v451
        %v548 = vunpack.c.h.b16 %v451
        %v549 = vunpack.c.l.b16 %v452
        %v550 = vunpack.c.h.b16 %v452
        %v551 = vunpack.c.l.b16 %v453
        %v552 = vunpack.c.h.b16 %v453
        %v553 = vunpack.c.l.b16 %v454
        %v554 = vunpack.c.h.b16 %v454
        %v555 = vunpack.c.l.b16 %v455
        %v556 = vunpack.c.h.b16 %v455
        %v557 = vunpack.c.l.b16 %v456
        %v558 = vunpack.c.h.b16 %v456
        %v559 = vunpack.c.l.b16 %v457
        %v560 = vunpack.c.h.b16 %v457
        %v561 = vunpack.c.l.b16 %v458
        %v562 = vunpack.c.h.b16 %v458
        %v563 = vunpack.c.l.b16 %v459
        %v564 = vunpack.c.h.b16 %v459
        %v565 = vunpack.c.l.b16 %v460
        %v566 = vunpack.c.h.b16 %v460
        %v567 = vpack.c.b16 %v505, %v503
        %v568 = vpack.c.b16 %v506, %v504
        %v569 = vpack.c.b16 %v509, %v507
        %v570 = vpack.c.b16 %v510, %v508
        %v571 = vpack.c.b16 %v513, %v511
        %v572 = vpack.c.b16 %v514, %v512
        %v573 = vpack.c.b16 %v517, %v515
        %v574 = vpack.c.b16 %v518, %v516
        %v575 = vpack.c.b16 %v521, %v519
        %v576 = vpack.c.b16 %v522, %v520
        %v577 = vpack.c.b16 %v525, %v523
        %v578 = vpack.c.b16 %v526, %v524
        %v579 = vpack.c.b16 %v529, %v527
        %v580 = vpack.c.b16 %v530, %v528
        %v581 = vpack.c.b16 %v533, %v531
        %v582 = vpack.c.b16 %v534, %v532
        %v583 = vpack.c.b16 %v537, %v535
        %v584 = vpack.c.b16 %v538, %v536
        %v585 = vpack.c.b16 %v541, %v539
        %v586 = vpack.c.b16 %v542, %v540
        %v587 = vpack.c.b16 %v545, %v543
        %v588 = vpack.c.b16 %v546, %v544
        %v589 = vpack.c.b16 %v549, %v547
        %v590 = vpack.c.b16 %v550, %v548
        %v591 = vpack.c.b16 %v553, %v551
        %v592 = vpack.c.b16 %v554, %v552
        %v593 = vpack.c.b16 %v557, %v555
        %v594 = vpack.c.b16 %v558, %v556
        %v595 = vpack.c.b16 %v561, %v559
        %v596 = vpack.c.b16 %v562, %v560
        %v597 = vpack.c.b16 %v565, %v563
        %v598 = vpack.c.b16 %v566, %v564
        %631 = vmatpush.bf16.msra.mxu0 %v581
        %632 = vmatpush.bf16.msra.mxu0 %v579
        %633 = vmatpush.bf16.msra.mxu0 %v577
        %634 = vmatpush.bf16.msra.mxu0 %v575
        %635 = vmatpush.bf16.msra.mxu0 %v573
        %636 = vmatpush.bf16.msra.mxu0 %v571
        %637 = vmatpush.bf16.msra.mxu0 %v569
        %638 = vmatpush.bf16.msra.mxu0 %v567
        %639 = vmatmul.bf16.gmra.mxu0 %v467
        %v640 = vpop.f32.mrf.mxu0
        %v641 = vadd.f32 0.0, %v640
        %v642 = vpop.f32.mrf.mxu0
        %v643 = vadd.f32 0.0, %v642
        %644 = vdwg.mxu0
        %645 = vmatpush.bf16.msra.mxu0 %v597
        %646 = vmatpush.bf16.msra.mxu0 %v595
        %647 = vmatpush.bf16.msra.mxu0 %v593
        %648 = vmatpush.bf16.msra.mxu0 %v591
        %649 = vmatpush.bf16.msra.mxu0 %v589
        %650 = vmatpush.bf16.msra.mxu0 %v587
        %651 = vmatpush.bf16.msra.mxu0 %v585
        %652 = vmatpush.bf16.msra.mxu0 %v583
        %653 = vmatmul.bf16.gmra.mxu0 %v468
        %v654 = vpop.f32.mrf.mxu0
        %v655 = vadd.f32 %v641, %v654
        %v656 = vpop.f32.mrf.mxu0
        %v657 = vadd.f32 %v643, %v656
        %658 = vdwg.mxu0
        %659 = vmatpush.bf16.msra.mxu0 %v582
        %660 = vmatpush.bf16.msra.mxu0 %v580
        %661 = vmatpush.bf16.msra.mxu0 %v578
        %662 = vmatpush.bf16.msra.mxu0 %v576
        %663 = vmatpush.bf16.msra.mxu0 %v574
        %664 = vmatpush.bf16.msra.mxu0 %v572
        %665 = vmatpush.bf16.msra.mxu0 %v570
        %666 = vmatpush.bf16.msra.mxu0 %v568
        %667 = vmatmul.bf16.gmra.mxu0 %v467
        %v668 = vpop.f32.mrf.mxu0
        %v669 = vadd.f32 0.0, %v668
        %v670 = vpop.f32.mrf.mxu0
        %v671 = vadd.f32 0.0, %v670
        %672 = vdwg.mxu0
        %673 = vmatpush.bf16.msra.mxu0 %v598
        %674 = vmatpush.bf16.msra.mxu0 %v596
        %675 = vmatpush.bf16.msra.mxu0 %v594
        %676 = vmatpush.bf16.msra.mxu0 %v592
        %677 = vmatpush.bf16.msra.mxu0 %v590
        %678 = vmatpush.bf16.msra.mxu0 %v588
        %679 = vmatpush.bf16.msra.mxu0 %v586
        %680 = vmatpush.bf16.msra.mxu0 %v584
        %681 = vmatmul.bf16.gmra.mxu0 %v468
        %v682 = vpop.f32.mrf.mxu0
        %v683 = vadd.f32 %v669, %v682
        %v684 = vpop.f32.mrf.mxu0
        %v685 = vadd.f32 %v671, %v684
        %686 = vdwg.mxu0
        %v687 = vadd.f32 %v423, %v655
        %v688 = vadd.f32 %v424, %v683
        %v689 = vadd.f32 %v425, %v657
        %v690 = vadd.f32 %v426, %v685
        %691 = vst [vmem:[#allocation2] sm:$0xff] %v687
        %692 = vst [vmem:[#allocation2 + $0x8] sm:$0xff] %v688
        %693 = vst [vmem:[#allocation2 + $0x10] sm:$0xff] %v689
        %694 = vst [vmem:[#allocation2 + $0x18] sm:$0xff] %v690
        // Predicated region
        $region75: #{dqn_forward.8} parent=65 // pred_check
          %p695 = pneg %p415
        $region76: #{dqn_forward.8} parent=65 // pred_check_branch
          %697 = sbr.rel (%p695) target = $region78
        $region77: #{dqn_forward.8} parent=65 // pred_region
          %v698 = vld [vmem:[#allocation2] sm:$0xff]
          %v699 = vld [vmem:[#allocation2 + $0x8] sm:$0xff]
          %v700 = vld [vmem:[#allocation2 + $0x10] sm:$0xff]
          %v701 = vld [vmem:[#allocation2 + $0x18] sm:$0xff]
          %v702 = vld [vmem:[%s411] sm:$0x3]
          %v704 = vperm.slane %v702, 0
          %v705 = vperm.slane %v702, 1
          %v708 = vadd.f32 %v698, %v704
          %v709 = vadd.f32 %v699, %v705
          %v710 = vadd.f32 %v700, %v704
          %v711 = vadd.f32 %v701, %v705
          %v712 = vmax.f32 %v708, 0.0
          %v713 = vmax.f32 %v709, 0.0
          %v714 = vmax.f32 %v710, 0.0
          %v715 = vmax.f32 %v711, 0.0
          %716 = vst [vmem:[%s393] sm:$0xff] %v712
          %717 = vst [vmem:[%s393 + $0x8] sm:$0xff] %v713
          %718 = vst [vmem:[%s393 + $0x10] sm:$0xff] %v714
          %719 = vst [vmem:[%s393 + $0x18] sm:$0xff] %v715
        $region78: #{dqn_forward.8} parent=65 // pred_fallthru
          _
        %s720 = sand.u32 %s125, 1
        %s721 = sand.u32 %s125, 1
        %s722 = smul.addr %s721, 32
        %s723 = scalar_lea.vmem [#allocation4], %s722
        // Predicated region
        $region79: #{dqn_forward.8} parent=65 // pred_check
          %p724 = pneg %p135
        $region80: #{dqn_forward.8} parent=65 // pred_check_branch
          %726 = sbr.rel (%p724) target = $region82
        $region81: #{dqn_forward.8} parent=65 // pred_region
          %s727 = smul.u32 2, %s19
          %s728 = smul.u32 2, %s20
          %s729 = smul.addr %s727, 4
          %s730 = sadd.s32 %s728, %s729
          %s731 = smul.addr %s730, 8
          %s732 = scalar_lea.vmem %s3, %s731
          // Predicated region
          $region83: #{dqn_forward.8} parent=81 // pred_check
            _
          $region84: #{dqn_forward.8} parent=81 // pred_check_branch
            %734 = sbr.rel (0) target = $region86
          $region85: #{dqn_forward.8} parent=81 // pred_region
            // Predicated region
            $region87: #{dqn_forward.8} parent=85 // pred_check
              _
            $region88: #{dqn_forward.8} parent=85 // pred_check_branch
              %736 = sbr.rel (0) target = $region90
            $region89: #{dqn_forward.8} parent=85 // pred_region
              loop: start=0, step=1, limit=1
              $region91: #{dqn_forward.8} parent=89 // loop_pre_header
                _
              $region92: #{dqn_forward.8} parent=89 // loop_header
                %s738 = sphi 0, %s742
                %p739 = scmp.ge.s32.totalorder %s738, 1
                %s743 = sphi %s723, %s723
                %s744 = sphi %s732, %s732
              $region93: #{dqn_forward.8} parent=89 // loop_header_branch
                %741 = sbr.rel (%p739) target = $region97
              $region94: #{dqn_forward.8} parent=89 // loop_body
                %v745 = vld [vmem:[%s743] sm:$0xff]
                %746 = vst [vmem:[%s744] sm:$0xff] %v745
                %v747 = vld [vmem:[%s743 + $0x8] sm:$0xff]
                %748 = vst [vmem:[%s744 + $0x8] sm:$0xff] %v747
                %v749 = vld [vmem:[%s743 + $0x10] sm:$0xff]
                %750 = vst [vmem:[%s744 + $0x20] sm:$0xff] %v749
                %v751 = vld [vmem:[%s743 + $0x18] sm:$0xff]
                %752 = vst [vmem:[%s744 + $0x28] sm:$0xff] %v751
              $region95: #{dqn_forward.8} parent=89 // loop_footer
                %s742 = sadd.s32 1, %s738
              $region96: #{dqn_forward.8} parent=89 // loop_footer_branch
                %737 = sbr.rel target = $region92
              $region97: #{dqn_forward.8} parent=89 // loop_exit
                _
            $region90: #{dqn_forward.8} parent=85 // pred_fallthru
              _
            // Predicated region
            $region98: #{dqn_forward.8} parent=85 // pred_check
              _
            $region99: #{dqn_forward.8} parent=85 // pred_check_branch
              %754 = sbr.rel target = $region101
            $region100: #{dqn_forward.8} parent=85 // pred_region
              _
            $region101: #{dqn_forward.8} parent=85 // pred_fallthru
              _
          $region86: #{dqn_forward.8} parent=81 // pred_fallthru
            _
          %755 = vnop
        $region82: #{dqn_forward.8} parent=65 // pred_fallthru
          _
      $region66: #{dqn_forward.8} parent=5 // pred_fallthru
        _
      %p756 = scmp.le.s32.totalorder 2, %s9
      // Predicated region
      $region102: #{dqn_forward.8} parent=5 // pred_check
        %p757 = pneg %p756
      $region103: #{dqn_forward.8} parent=5 // pred_check_branch
        %759 = sbr.rel (%p757) target = $region105
      $region104: #{dqn_forward.8} parent=5 // pred_region
        %s760 = ssub.s32 %s9, 2
        // Predicated region
        $region106: #{dqn_forward.8} parent=104 // pred_check
          %p761 = pneg %p141
        $region107: #{dqn_forward.8} parent=104 // pred_check_branch
          %763 = sbr.rel (%p761) target = $region109
        $region108: #{dqn_forward.8} parent=104 // pred_region
          %s764 = sand.u32 %s126, 1
          %s765 = sand.u32 %s126, 1
          %s766 = smul.addr %s765, 32
          %s767 = scalar_lea.vmem [#allocation4], %s766
        $region109: #{dqn_forward.8} parent=104 // pred_fallthru
          _
      $region105: #{dqn_forward.8} parent=5 // pred_fallthru
        _
    $region6: #{dqn_forward.8} parent=1 // loop_footer
      %s13 = sadd.s32 1, %s9
    $region7: #{dqn_forward.8} parent=1 // loop_footer_branch
      %8 = sbr.rel target = $region3
    $region8: #{dqn_forward.8} parent=1 // loop_exit
      _

// kernel: dqn_forward.7
$region0: #{dqn_forward.7}
  #allocation0 [shape = 'u32[]', space=smem, size = 0x4, offset = 0x4, fixed_abs, tag = 'smem constant byte address 0x4 - core index']
  #allocation1 [shape = 'u32[72,128]{1,0:T(1,128)}', space=vmem, size = 0x9000, scoped, tag = 'internal scratch']
  #allocation2 [shape = 'f32[16,128]{1,0:T(8,128)}', space=vmem, size = 0x2000, scoped, tag = 'scratch operand']
  %s0 = inlined_call_operand.vmem [shape: bf16[16,1024], index: 0, kind: input, shape index: {}]
  %s1 = inlined_call_operand.vmem [shape: bf16[1024,128], index: 1, kind: input, shape index: {}]
  %s2 = inlined_call_operand.vmem [shape: f32[1,128], index: 2, kind: input, shape index: {}]
  %s3 = inlined_call_operand.vmem [shape: f32[16,128], index: 3, kind: output, shape index: {}]
  %s4 = sld [smem:[#allocation0]]
  $region76: #{dqn_forward.7} parent=0
    _
  %s6 = ssub.s32 1, %s4
  %s7 = scalar_select 0, %s6, %s4
  $region1: #{dqn_forward.7} parent=0
    #allocation3 [shape = 'u8[32768]{0}', space=vmem, size = 0x8000, scoped, tag = 'input window, operand 0']
    loop: start=0, step=1, limit=4
    $region2: #{dqn_forward.7} parent=1 // loop_pre_header
      _
    $region3: #{dqn_forward.7} parent=1 // loop_header
      %s9 = sphi 0, %s13
      %p10 = scmp.ge.s32.totalorder %s9, 4
      %s16 = sphi 0, %s35
      %s17 = sphi 0, %s31
      %s18 = sphi 0, %s27
      %s19 = sphi 0, %s16
      %s20 = sphi 0, %s17
      %s21 = sphi 0, %s18
      %s22 = sphi 0, %s19
      %s23 = sphi 0, %s20
      %s24 = sphi 0, %s21
      %s40 = sphi 0, %s42
      %s43 = sphi 0, %s40
      %s44 = sphi 0, %s43
      %s60 = sphi 0, %s44
      %s68 = sphi 0, %s70
      %s71 = sphi 0, %s68
      %s72 = sphi 0, %s71
      %s88 = sphi 0, %s72
      %s94 = sphi 0, %s96
      %s97 = sphi 0, %s94
      %s98 = sphi 0, %s97
      %s114 = sphi 0, %s98
      %s122 = sphi 0, %s124
      %s125 = sphi 0, %s122
      %s126 = sphi 0, %s125
      %s142 = sphi 0, %s126
    $region4: #{dqn_forward.7} parent=1 // loop_header_branch
      %12 = sbr.rel (%p10) target = $region8
    $region5: #{dqn_forward.7} parent=1 // loop_body
      %s14 = ssub.s32 %s9, 1
      %s15 = ssub.s32 %s9, 2
      %s25 = sadd.s32 1, %s18
      %p26 = scmp.ge.s32.totalorder %s25, 2
      %s27 = scalar_select %p26, 0, %s25
      %s28 = sadd.s32 1, %s17
      %s29 = scalar_select %p26, %s28, %s17
      %p30 = scmp.ge.s32.totalorder %s29, 1
      %s31 = scalar_select %p30, 0, %s29
      %s32 = sadd.s32 1, %s16
      %s33 = scalar_select %p30, %s32, %s16
      %p34 = scmp.ge.s32.totalorder %s33, 1
      %s35 = scalar_select %p34, 0, %s33
      %s36 = ssub.s32 %s16, %s35
      %s37 = ssub.s32 %s18, %s27
      %s38 = sor.u32 %s36, %s37
      %p39 = scmp.eq.s32.totalorder %s38, 0
      %s41 = sadd.s32 %s40, 1
      %s42 = scalar_select %p39, %s40, %s41
      %p45 = pneg %p39
      %p46 = scmp.eq.s32.totalorder %s9, 1
      %p47 = por %p45, %p46
      %p48 = scmp.ne.s32.totalorder %s40, %s43
      %p49 = scmp.eq.s32.totalorder %s9, 0
      %p50 = por %p48, %p49
      %p51 = scmp.ne.s32.totalorder %s40, %s43
      %p52 = scmp.eq.s32.totalorder %s14, 1
      %p53 = por %p51, %p52
      %p54 = scmp.ne.s32.totalorder %s43, %s44
      %p55 = scmp.eq.s32.totalorder %s14, 0
      %p56 = por %p54, %p55
      %p57 = scmp.ne.s32.totalorder %s43, %s44
      %p58 = scmp.eq.s32.totalorder %s15, 1
      %p59 = por %p57, %p58
      %p61 = scmp.ne.s32.totalorder %s44, %s60
      %p62 = scmp.eq.s32.totalorder %s15, 0
      %p63 = por %p61, %p62
      %s64 = ssub.s32 %s18, %s27
      %s65 = ssub.s32 %s17, %s31
      %s66 = sor.u32 %s64, %s65
      %p67 = scmp.eq.s32.totalorder %s66, 0
      %s69 = sadd.s32 %s68, 1
      %s70 = scalar_select %p67, %s68, %s69
      %p73 = pneg %p67
      %p74 = scmp.eq.s32.totalorder %s9, 1
      %p75 = por %p73, %p74
      %p76 = scmp.ne.s32.totalorder %s68, %s71
      %p77 = scmp.eq.s32.totalorder %s9, 0
      %p78 = por %p76, %p77
      %p79 = scmp.ne.s32.totalorder %s68, %s71
      %p80 = scmp.eq.s32.totalorder %s14, 1
      %p81 = por %p79, %p80
      %p82 = scmp.ne.s32.totalorder %s71, %s72
      %p83 = scmp.eq.s32.totalorder %s14, 0
      %p84 = por %p82, %p83
      %p85 = scmp.ne.s32.totalorder %s71, %s72
      %p86 = scmp.eq.s32.totalorder %s15, 1
      %p87 = por %p85, %p86
      %p89 = scmp.ne.s32.totalorder %s72, %s88
      %p90 = scmp.eq.s32.totalorder %s15, 0
      %p91 = por %p89, %p90
      %s92 = ssub.s32 %s17, %s31
      %p93 = scmp.eq.s32.totalorder %s92, 0
      %s95 = sadd.s32 %s94, 1
      %s96 = scalar_select %p93, %s94, %s95
      %p99 = pneg %p93
      %p100 = scmp.eq.s32.totalorder %s9, 1
      %p101 = por %p99, %p100
      %p102 = scmp.ne.s32.totalorder %s94, %s97
      %p103 = scmp.eq.s32.totalorder %s9, 0
      %p104 = por %p102, %p103
      %p105 = scmp.ne.s32.totalorder %s94, %s97
      %p106 = scmp.eq.s32.totalorder %s14, 1
      %p107 = por %p105, %p106
      %p108 = scmp.ne.s32.totalorder %s97, %s98
      %p109 = scmp.eq.s32.totalorder %s14, 0
      %p110 = por %p108, %p109
      %p111 = scmp.ne.s32.totalorder %s97, %s98
      %p112 = scmp.eq.s32.totalorder %s15, 1
      %p113 = por %p111, %p112
      %p115 = scmp.ne.s32.totalorder %s98, %s114
      %p116 = scmp.eq.s32.totalorder %s15, 0
      %p117 = por %p115, %p116
      %s118 = ssub.s32 %s16, %s35
      %s119 = ssub.s32 %s17, %s31
      %s120 = sor.u32 %s118, %s119
      %p121 = scmp.eq.s32.totalorder %s120, 0
      %s123 = sadd.s32 %s122, 1
      %s124 = scalar_select %p121, %s122, %s123
      %p127 = pneg %p121
      %p128 = scmp.eq.s32.totalorder %s9, 1
      %p129 = por %p127, %p128
      %p130 = scmp.ne.s32.totalorder %s122, %s125
      %p131 = scmp.eq.s32.totalorder %s9, 0
      %p132 = por %p130, %p131
      %p133 = scmp.ne.s32.totalorder %s122, %s125
      %p134 = scmp.eq.s32.totalorder %s14, 1
      %p135 = por %p133, %p134
      %p136 = scmp.ne.s32.totalorder %s125, %s126
      %p137 = scmp.eq.s32.totalorder %s14, 0
      %p138 = por %p136, %p137
      %p139 = scmp.ne.s32.totalorder %s125, %s126
      %p140 = scmp.eq.s32.totalorder %s15, 1
      %p141 = por %p139, %p140
      %p143 = scmp.ne.s32.totalorder %s126, %s142
      %p144 = scmp.eq.s32.totalorder %s15, 0
      %p145 = por %p143, %p144
      %p146 = scmp.le.s32.totalorder 1, %s9
      %p147 = scmp.lt.s32.totalorder %s9, 3
      %p148 = pnand %p146, %p147
      %p149 = pneg %p148
      // Predicated region
      $region9: #{dqn_forward.7} parent=5 // pred_check
        _
      $region10: #{dqn_forward.7} parent=5 // pred_check_branch
        %151 = sbr.rel (%p148) target = $region12
      $region11: #{dqn_forward.7} parent=5 // pred_region
        %s152 = ssub.s32 %s9, 1
        // Predicated region
        $region13: #{dqn_forward.7} parent=11 // pred_check
          %p153 = pneg %p110
        $region14: #{dqn_forward.7} parent=11 // pred_check_branch
          %155 = sbr.rel (%p153) target = $region16
        $region15: #{dqn_forward.7} parent=11 // pred_region
          %p156 = scmp.lt.s32.totalorder %s20, 0
          %s157 = scalar_select %p156, %s20, 0
          %s158 = scalar_lea.vmem %s2, %s157
        $region16: #{dqn_forward.7} parent=11 // pred_fallthru
          _
      $region12: #{dqn_forward.7} parent=5 // pred_fallthru
        _
      %p159 = scmp.lt.s32.totalorder %s9, 2
      // Predicated region
      $region17: #{dqn_forward.7} parent=5 // pred_check
        %p160 = pneg %p159
      $region18: #{dqn_forward.7} parent=5 // pred_check_branch
        %162 = sbr.rel (%p160) target = $region20
      $region19: #{dqn_forward.7} parent=5 // pred_region
        // Predicated region
        $region21: #{dqn_forward.7} parent=19 // pred_check
          %p163 = pneg %p50
        $region22: #{dqn_forward.7} parent=19 // pred_check_branch
          %165 = sbr.rel (%p163) target = $region24
        $region23: #{dqn_forward.7} parent=19 // pred_region
          %s166 = sand.u32 %s40, 1
          %s167 = sand.u32 %s40, 1
          %s168 = smul.addr %s167, 32
          %s169 = scalar_lea.vmem [#allocation3], %s168
          %s170 = smul.u32 2, %s16
          %s171 = smul.u32 4, %s18
          %s172 = smul.addr %s170, 8
          %s173 = sadd.s32 %s171, %s172
          %s174 = smul.addr %s173, 4
          %s175 = scalar_lea.vmem %s0, %s174
          // Predicated region
          $region25: #{dqn_forward.7} parent=23 // pred_check
            _
          $region26: #{dqn_forward.7} parent=23 // pred_check_branch
            %177 = sbr.rel (0) target = $region28
          $region27: #{dqn_forward.7} parent=23 // pred_region
            // Predicated region
            $region29: #{dqn_forward.7} parent=27 // pred_check
              _
            $region30: #{dqn_forward.7} parent=27 // pred_check_branch
              %179 = sbr.rel (0) target = $region32
            $region31: #{dqn_forward.7} parent=27 // pred_region
              loop: start=0, step=1, limit=1
              $region33: #{dqn_forward.7} parent=31 // loop_pre_header
                _
              $region34: #{dqn_forward.7} parent=31 // loop_header
                %s181 = sphi 0, %s185
                %p182 = scmp.ge.s32.totalorder %s181, 1
                %s186 = sphi %s175, %s175
                %s187 = sphi %s169, %s169
              $region35: #{dqn_forward.7} parent=31 // loop_header_branch
                %184 = sbr.rel (%p182) target = $region39
              $region36: #{dqn_forward.7} parent=31 // loop_body
                %v188 = vld [vmem:[%s186] sm:$0xff]
                %189 = vst [vmem:[%s187] sm:$0xff] %v188
                %v190 = vld [vmem:[%s186 + $0x8] sm:$0xff]
                %191 = vst [vmem:[%s187 + $0x8] sm:$0xff] %v190
                %v192 = vld [vmem:[%s186 + $0x20] sm:$0xff]
                %193 = vst [vmem:[%s187 + $0x10] sm:$0xff] %v192
                %v194 = vld [vmem:[%s186 + $0x28] sm:$0xff]
                %195 = vst [vmem:[%s187 + $0x18] sm:$0xff] %v194
              $region37: #{dqn_forward.7} parent=31 // loop_footer
                %s185 = sadd.s32 1, %s181
              $region38: #{dqn_forward.7} parent=31 // loop_footer_branch
                %180 = sbr.rel target = $region34
              $region39: #{dqn_forward.7} parent=31 // loop_exit
                _
            $region32: #{dqn_forward.7} parent=27 // pred_fallthru
              _
            // Predicated region
            $region40: #{dqn_forward.7} parent=27 // pred_check
              _
            $region41: #{dqn_forward.7} parent=27 // pred_check_branch
              %197 = sbr.rel target = $region43
            $region42: #{dqn_forward.7} parent=27 // pred_region
              _
            $region43: #{dqn_forward.7} parent=27 // pred_fallthru
              _
          $region28: #{dqn_forward.7} parent=23 // pred_fallthru
            _
          %198 = vnop
        $region24: #{dqn_forward.7} parent=19 // pred_fallthru
          _
        // Predicated region
        $region44: #{dqn_forward.7} parent=19 // pred_check
          %p199 = pneg %p78
        $region45: #{dqn_forward.7} parent=19 // pred_check_branch
          %201 = sbr.rel (%p199) target = $region47
        $region46: #{dqn_forward.7} parent=19 // pred_region
          %s202 = smul.u32 64, %s18
          %p203 = scmp.lt.s32.totalorder %s202, 127
          %s204 = scalar_select %p203, %s202, 127
          %p205 = scmp.lt.s32.totalorder %s17, 0
          %s206 = scalar_select %p205, %s17, 0
          %s207 = sadd.s32 %s206, %s204
          %s208 = smul.addr %s207, 4
          %s209 = scalar_lea.vmem %s1, %s208
          %s210 = smul.u32 64, %s18
        $region47: #{dqn_forward.7} parent=19 // pred_fallthru
          _
      $region20: #{dqn_forward.7} parent=5 // pred_fallthru
        _
      %p211 = scmp.le.s32.totalorder 1, %s9
      %p212 = scmp.lt.s32.totalorder %s9, 3
      %p213 = pnand %p211, %p212
      %p214 = pneg %p213
      // Predicated region
      $region48: #{dqn_forward.7} parent=5 // pred_check
        _
      $region49: #{dqn_forward.7} parent=5 // pred_check_branch
        %216 = sbr.rel (%p213) target = $region51
      $region50: #{dqn_forward.7} parent=5 // pred_region
        %s217 = ssub.s32 %s9, 1
        %s218 = sand.u32 %s43, 1
        %s219 = sand.u32 %s43, 1
        %s220 = smul.addr %s219, 32
        %s221 = scalar_lea.vmem [#allocation3], %s220
        // Predicated region
        $region52: #{dqn_forward.7} parent=50 // pred_check
          %p222 = pneg %p56
        $region53: #{dqn_forward.7} parent=50 // pred_check_branch
          %224 = sbr.rel (%p222) target = $region55
        $region54: #{dqn_forward.7} parent=50 // pred_region
          _
        $region55: #{dqn_forward.7} parent=50 // pred_fallthru
          _
        %s225 = sand.u32 %s43, 1
        %s226 = sand.u32 %s43, 1
        %s227 = smul.addr %s226, 32
        %s228 = scalar_lea.vmem [#allocation3], %s227
        %p229 = pneg %p56
        %p230 = pneg %p53
        %s231 = smul.u32 64, %s21
        %p232 = scmp.lt.s32.totalorder %s231, 127
        %s233 = scalar_select %p232, %s231, 127
        %p234 = scmp.lt.s32.totalorder %s20, 0
        %s235 = scalar_select %p234, %s20, 0
        %s236 = sadd.s32 %s235, %s233
        %s237 = smul.addr %s236, 4
        %s238 = scalar_lea.vmem %s1, %s237
        %p239 = pneg %p84
        %p240 = pneg %p81
        %p241 = scmp.lt.s32.totalorder %s20, 0
        %s242 = scalar_select %p241, %s20, 0
        %s243 = scalar_lea.vmem %s2, %s242
        %p244 = pneg %p110
        %p245 = pneg %p107
        %p246 = pneg %p138
        %p247 = pneg %p135
        %s248 = smul.u32 2, %s19
        %p249 = scmp.lt.s32.totalorder %s248, 1
        %s250 = scalar_select %p249, %s248, 1
        %p251 = scmp.lt.s32.totalorder %s20, 0
        %s252 = scalar_select %p251, %s20, 0
        %s253 = sadd.s32 %s252, %s250
        %s254 = smul.addr %s253, 8
        %s255 = scalar_lea.vmem %s3, %s254
        %s256 = smul.u32 2, %s19
        %s257 = smul.u32 4, %s21
        %s258 = smul.u32 64, %s21
        %p259 = scmp.lt.s32.totalorder %s258, 127
        %s260 = scalar_select %p259, %s258, 127
        %p261 = scmp.lt.s32.totalorder %s20, 0
        %s262 = scalar_select %p261, %s20, 0
        %s263 = sadd.s32 %s262, %s260
        %s264 = smul.addr %s263, 4
        %s265 = scalar_lea.vmem %s1, %s264
        %s266 = smul.u32 64, %s21
        %p267 = scmp.lt.s32.totalorder %s20, 0
        %s268 = scalar_select %p267, %s20, 0
        %s269 = scalar_lea.vmem %s2, %s268
        %s270 = smul.u32 2, %s19
        %p271 = scmp.lt.s32.totalorder %s270, 1
        %s272 = scalar_select %p271, %s270, 1
        %p273 = scmp.lt.s32.totalorder %s20, 0
        %s274 = scalar_select %p273, %s20, 0
        %s275 = sadd.s32 %s274, %s272
        %s276 = smul.addr %s275, 8
        %s277 = scalar_lea.vmem %s3, %s276
        %s278 = smul.u32 2, %s19
        %p279 = scmp.eq.s32.totalorder %s21, 0
        // Predicated region
        $region56: #{dqn_forward.7} parent=50 // pred_check
          %p280 = pneg %p279
        $region57: #{dqn_forward.7} parent=50 // pred_check_branch
          %282 = sbr.rel (%p280) target = $region59
        $region58: #{dqn_forward.7} parent=50 // pred_region
          %283 = vst [vmem:[#allocation2] sm:$0xff] 0.0
          %284 = vst [vmem:[#allocation2 + $0x8] sm:$0xff] 0.0
        $region59: #{dqn_forward.7} parent=50 // pred_fallthru
          _
        %v285 = vld [vmem:[#allocation2] sm:$0xff]
        %v286 = vld [vmem:[#allocation2 + $0x8] sm:$0xff]
        %v287 = vld [vmem:[%s221] sm:$0xff]
        %v288 = vld [vmem:[%s221 + $0x8] sm:$0xff]
        %v289 = vld [vmem:[%s221 + $0x10] sm:$0xff]
        %v290 = vld [vmem:[%s221 + $0x18] sm:$0xff]
        %v291 = vld [vmem:[%s265] sm:$0xf]
        %v292 = vld [vmem:[%s265 + $0x4] sm:$0xf]
        %v293 = vld [vmem:[%s265 + $0x8] sm:$0xf]
        %v294 = vld [vmem:[%s265 + $0xc] sm:$0xf]
        %v295 = vld [vmem:[%s265 + $0x10] sm:$0xf]
        %v296 = vld [vmem:[%s265 + $0x14] sm:$0xf]
        %v297 = vld [vmem:[%s265 + $0x18] sm:$0xf]
        %v298 = vld [vmem:[%s265 + $0x1c] sm:$0xf]
        %v299 = vld [vmem:[%s265 + $0x20] sm:$0xf]
        %v300 = vld [vmem:[%s265 + $0x24] sm:$0xf]
        %v301 = vld [vmem:[%s265 + $0x28] sm:$0xf]
        %v302 = vld [vmem:[%s265 + $0x2c] sm:$0xf]
        %v303 = vld [vmem:[%s265 + $0x30] sm:$0xf]
        %v304 = vld [vmem:[%s265 + $0x34] sm:$0xf]
        %v305 = vld [vmem:[%s265 + $0x38] sm:$0xf]
        %v306 = vld [vmem:[%s265 + $0x3c] sm:$0xf]
        %v307 = vld [vmem:[%s265 + $0x40] sm:$0xf]
        %v308 = vld [vmem:[%s265 + $0x44] sm:$0xf]
        %v309 = vld [vmem:[%s265 + $0x48] sm:$0xf]
        %v310 = vld [vmem:[%s265 + $0x4c] sm:$0xf]
        %v311 = vld [vmem:[%s265 + $0x50] sm:$0xf]
        %v312 = vld [vmem:[%s265 + $0x54] sm:$0xf]
        %v313 = vld [vmem:[%s265 + $0x58] sm:$0xf]
        %v314 = vld [vmem:[%s265 + $0x5c] sm:$0xf]
        %v315 = vld [vmem:[%s265 + $0x60] sm:$0xf]
        %v316 = vld [vmem:[%s265 + $0x64] sm:$0xf]
        %v317 = vld [vmem:[%s265 + $0x68] sm:$0xf]
        %v318 = vld [vmem:[%s265 + $0x6c] sm:$0xf]
        %v319 = vld [vmem:[%s265 + $0x70] sm:$0xf]
        %v320 = vld [vmem:[%s265 + $0x74] sm:$0xf]
        %v321 = vld [vmem:[%s265 + $0x78] sm:$0xf]
        %v322 = vld [vmem:[%s265 + $0x7c] sm:$0xf]
        %v323 = vld [vmem:[%s265 + $0x80] sm:$0xf]
        %v324 = vld [vmem:[%s265 + $0x84] sm:$0xf]
        %v325 = vld [vmem:[%s265 + $0x88] sm:$0xf]
        %v326 = vld [vmem:[%s265 + $0x8c] sm:$0xf]
        %v327 = vld [vmem:[%s265 + $0x90] sm:$0xf]
        %v328 = vld [vmem:[%s265 + $0x94] sm:$0xf]
        %v329 = vld [vmem:[%s265 + $0x98] sm:$0xf]
        %v330 = vld [vmem:[%s265 + $0x9c] sm:$0xf]
        %v331 = vld [vmem:[%s265 + $0xa0] sm:$0xf]
        %v332 = vld [vmem:[%s265 + $0xa4] sm:$0xf]
        %v333 = vld [vmem:[%s265 + $0xa8] sm:$0xf]
        %v334 = vld [vmem:[%s265 + $0xac] sm:$0xf]
        %v335 = vld [vmem:[%s265 + $0xb0] sm:$0xf]
        %v336 = vld [vmem:[%s265 + $0xb4] sm:$0xf]
        %v337 = vld [vmem:[%s265 + $0xb8] sm:$0xf]
        %v338 = vld [vmem:[%s265 + $0xbc] sm:$0xf]
        %v339 = vld [vmem:[%s265 + $0xc0] sm:$0xf]
        %v340 = vld [vmem:[%s265 + $0xc4] sm:$0xf]
        %v341 = vld [vmem:[%s265 + $0xc8] sm:$0xf]
        %v342 = vld [vmem:[%s265 + $0xcc] sm:$0xf]
        %v343 = vld [vmem:[%s265 + $0xd0] sm:$0xf]
        %v344 = vld [vmem:[%s265 + $0xd4] sm:$0xf]
        %v345 = vld [vmem:[%s265 + $0xd8] sm:$0xf]
        %v346 = vld [vmem:[%s265 + $0xdc] sm:$0xf]
        %v347 = vld [vmem:[%s265 + $0xe0] sm:$0xf]
        %v348 = vld [vmem:[%s265 + $0xe4] sm:$0xf]
        %v349 = vld [vmem:[%s265 + $0xe8] sm:$0xf]
        %v350 = vld [vmem:[%s265 + $0xec] sm:$0xf]
        %v351 = vld [vmem:[%s265 + $0xf0] sm:$0xf]
        %v352 = vld [vmem:[%s265 + $0xf4] sm:$0xf]
        %v353 = vld [vmem:[%s265 + $0xf8] sm:$0xf]
        %v354 = vld [vmem:[%s265 + $0xfc] sm:$0xf]
        %v359 = vunpack.c.l.b16 %v287
        %v360 = vunpack.c.h.b16 %v287
        %v361 = vunpack.c.l.b16 %v288
        %v362 = vunpack.c.h.b16 %v288
        %v363 = vunpack.c.l.b16 %v289
        %v364 = vunpack.c.h.b16 %v289
        %v365 = vunpack.c.l.b16 %v290
        %v366 = vunpack.c.h.b16 %v290
        %v367 = vpack.c.b16 %v363, %v359
        %v368 = vpack.c.b16 %v364, %v360
        %v369 = vpack.c.b16 %v365, %v361
        %v370 = vpack.c.b16 %v366, %v362
        %v439 = vunpack.c.l.b16 %v291
        %v440 = vunpack.c.l.b16 %v292
        %v441 = vunpack.c.l.b16 %v293
        %v442 = vunpack.c.l.b16 %v294
        %v443 = vunpack.c.l.b16 %v295
        %v444 = vunpack.c.l.b16 %v296
        %v445 = vunpack.c.l.b16 %v297
        %v446 = vunpack.c.l.b16 %v298
        %v447 = vunpack.c.l.b16 %v299
        %v448 = vunpack.c.l.b16 %v300
        %v449 = vunpack.c.l.b16 %v301
        %v450 = vunpack.c.l.b16 %v302
        %v451 = vunpack.c.l.b16 %v303
        %v452 = vunpack.c.l.b16 %v304
        %v453 = vunpack.c.l.b16 %v305
        %v454 = vunpack.c.l.b16 %v306
        %v455 = vunpack.c.l.b16 %v307
        %v456 = vunpack.c.l.b16 %v308
        %v457 = vunpack.c.l.b16 %v309
        %v458 = vunpack.c.l.b16 %v310
        %v459 = vunpack.c.l.b16 %v311
        %v460 = vunpack.c.l.b16 %v312
        %v461 = vunpack.c.l.b16 %v313
        %v462 = vunpack.c.l.b16 %v314
        %v463 = vunpack.c.l.b16 %v315
        %v464 = vunpack.c.l.b16 %v316
        %v465 = vunpack.c.l.b16 %v317
        %v466 = vunpack.c.l.b16 %v318
        %v467 = vunpack.c.l.b16 %v319
        %v468 = vunpack.c.l.b16 %v320
        %v469 = vunpack.c.l.b16 %v321
        %v470 = vunpack.c.l.b16 %v322
        %v471 = vunpack.c.l.b16 %v323
        %v472 = vunpack.c.l.b16 %v324
        %v473 = vunpack.c.l.b16 %v325
        %v474 = vunpack.c.l.b16 %v326
        %v475 = vunpack.c.l.b16 %v327
        %v476 = vunpack.c.l.b16 %v328
        %v477 = vunpack.c.l.b16 %v329
        %v478 = vunpack.c.l.b16 %v330
        %v479 = vunpack.c.l.b16 %v331
        %v480 = vunpack.c.l.b16 %v332
        %v481 = vunpack.c.l.b16 %v333
        %v482 = vunpack.c.l.b16 %v334
        %v483 = vunpack.c.l.b16 %v335
        %v484 = vunpack.c.l.b16 %v336
        %v485 = vunpack.c.l.b16 %v337
        %v486 = vunpack.c.l.b16 %v338
        %v487 = vunpack.c.l.b16 %v339
        %v488 = vunpack.c.l.b16 %v340
        %v489 = vunpack.c.l.b16 %v341
        %v490 = vunpack.c.l.b16 %v342
        %v491 = vunpack.c.l.b16 %v343
        %v492 = vunpack.c.l.b16 %v344
        %v493 = vunpack.c.l.b16 %v345
        %v494 = vunpack.c.l.b16 %v346
        %v495 = vunpack.c.l.b16 %v347
        %v496 = vunpack.c.l.b16 %v348
        %v497 = vunpack.c.l.b16 %v349
        %v498 = vunpack.c.l.b16 %v350
        %v499 = vunpack.c.l.b16 %v351
        %v500 = vunpack.c.l.b16 %v352
        %v501 = vunpack.c.l.b16 %v353
        %v502 = vunpack.c.l.b16 %v354
        %v503 = vpack.c.b16 %v440, %v439
        %v504 = vpack.c.b16 %v442, %v441
        %v505 = vpack.c.b16 %v444, %v443
        %v506 = vpack.c.b16 %v446, %v445
        %v507 = vpack.c.b16 %v448, %v447
        %v508 = vpack.c.b16 %v450, %v449
        %v509 = vpack.c.b16 %v452, %v451
        %v510 = vpack.c.b16 %v454, %v453
        %v511 = vpack.c.b16 %v456, %v455
        %v512 = vpack.c.b16 %v458, %v457
        %v513 = vpack.c.b16 %v460, %v459
        %v514 = vpack.c.b16 %v462, %v461
        %v515 = vpack.c.b16 %v464, %v463
        %v516 = vpack.c.b16 %v466, %v465
        %v517 = vpack.c.b16 %v468, %v467
        %v518 = vpack.c.b16 %v470, %v469
        %v519 = vpack.c.b16 %v472, %v471
        %v520 = vpack.c.b16 %v474, %v473
        %v521 = vpack.c.b16 %v476, %v475
        %v522 = vpack.c.b16 %v478, %v477
        %v523 = vpack.c.b16 %v480, %v479
        %v524 = vpack.c.b16 %v482, %v481
        %v525 = vpack.c.b16 %v484, %v483
        %v526 = vpack.c.b16 %v486, %v485
        %v527 = vpack.c.b16 %v488, %v487
        %v528 = vpack.c.b16 %v490, %v489
        %v529 = vpack.c.b16 %v492, %v491
        %v530 = vpack.c.b16 %v494, %v493
        %v531 = vpack.c.b16 %v496, %v495
        %v532 = vpack.c.b16 %v498, %v497
        %v533 = vpack.c.b16 %v500, %v499
        %v534 = vpack.c.b16 %v502, %v501
        %567 = vmatpush.bf16.msra.mxu0 %v510
        %568 = vmatpush.bf16.msra.mxu0 %v509
        %569 = vmatpush.bf16.msra.mxu0 %v508
        %570 = vmatpush.bf16.msra.mxu0 %v507
        %571 = vmatpush.bf16.msra.mxu0 %v506
        %572 = vmatpush.bf16.msra.mxu0 %v505
        %573 = vmatpush.bf16.msra.mxu0 %v504
        %574 = vmatpush.bf16.msra.mxu0 %v503
        %575 = vmatmul.bf16.gmra.mxu0 %v367
        %v576 = vpop.f32.mrf.mxu0
        %v577 = vadd.f32 0.0, %v576
        %v578 = vpop.f32.mrf.mxu0
        %v579 = vadd.f32 0.0, %v578
        %580 = vdwg.mxu0
        %581 = vmatpush.bf16.msra.mxu0 %v518
        %582 = vmatpush.bf16.msra.mxu0 %v517
        %583 = vmatpush.bf16.msra.mxu0 %v516
        %584 = vmatpush.bf16.msra.mxu0 %v515
        %585 = vmatpush.bf16.msra.mxu0 %v514
        %586 = vmatpush.bf16.msra.mxu0 %v513
        %587 = vmatpush.bf16.msra.mxu0 %v512
        %588 = vmatpush.bf16.msra.mxu0 %v511
        %589 = vmatmul.bf16.gmra.mxu0 %v368
        %v590 = vpop.f32.mrf.mxu0
        %v591 = vadd.f32 %v577, %v590
        %v592 = vpop.f32.mrf.mxu0
        %v593 = vadd.f32 %v579, %v592
        %594 = vdwg.mxu0
        %595 = vmatpush.bf16.msra.mxu0 %v526
        %596 = vmatpush.bf16.msra.mxu0 %v525
        %597 = vmatpush.bf16.msra.mxu0 %v524
        %598 = vmatpush.bf16.msra.mxu0 %v523
        %599 = vmatpush.bf16.msra.mxu0 %v522
        %600 = vmatpush.bf16.msra.mxu0 %v521
        %601 = vmatpush.bf16.msra.mxu0 %v520
        %602 = vmatpush.bf16.msra.mxu0 %v519
        %603 = vmatmul.bf16.gmra.mxu0 %v369
        %v604 = vpop.f32.mrf.mxu0
        %v605 = vadd.f32 %v591, %v604
        %v606 = vpop.f32.mrf.mxu0
        %v607 = vadd.f32 %v593, %v606
        %608 = vdwg.mxu0
        %609 = vmatpush.bf16.msra.mxu0 %v534
        %610 = vmatpush.bf16.msra.mxu0 %v533
        %611 = vmatpush.bf16.msra.mxu0 %v532
        %612 = vmatpush.bf16.msra.mxu0 %v531
        %613 = vmatpush.bf16.msra.mxu0 %v530
        %614 = vmatpush.bf16.msra.mxu0 %v529
        %615 = vmatpush.bf16.msra.mxu0 %v528
        %616 = vmatpush.bf16.msra.mxu0 %v527
        %617 = vmatmul.bf16.gmra.mxu0 %v370
        %v618 = vpop.f32.mrf.mxu0
        %v619 = vadd.f32 %v605, %v618
        %v620 = vpop.f32.mrf.mxu0
        %v621 = vadd.f32 %v607, %v620
        %622 = vdwg.mxu0
        %v623 = vadd.f32 %v285, %v619
        %v624 = vadd.f32 %v286, %v621
        %625 = vst [vmem:[#allocation2] sm:$0xff] %v623
        %626 = vst [vmem:[#allocation2 + $0x8] sm:$0xff] %v624
        %p627 = scmp.eq.s32.totalorder %s21, 1
        // Predicated region
        $region60: #{dqn_forward.7} parent=50 // pred_check
          %p628 = pneg %p627
        $region61: #{dqn_forward.7} parent=50 // pred_check_branch
          %630 = sbr.rel (%p628) target = $region63
        $region62: #{dqn_forward.7} parent=50 // pred_region
          %v631 = vld [vmem:[#allocation2] sm:$0xff]
          %v632 = vld [vmem:[#allocation2 + $0x8] sm:$0xff]
          %v633 = vld [vmem:[%s269] sm:$0x1]
          %v635 = vperm.slane %v633, 0
          %v637 = vadd.f32 %v631, %v635
          %v638 = vadd.f32 %v632, %v635
          %v639 = vmax.f32 %v637, 0.0
          %v640 = vmax.f32 %v638, 0.0
          %641 = vst [vmem:[%s277] sm:$0xff] %v639
          %642 = vst [vmem:[%s277 + $0x8] sm:$0xff] %v640
        $region63: #{dqn_forward.7} parent=50 // pred_fallthru
          _
        %s643 = smul.u32 2, %s19
        %p644 = scmp.lt.s32.totalorder %s643, 1
        %s645 = scalar_select %p644, %s643, 1
        %p646 = scmp.lt.s32.totalorder %s20, 0
        %s647 = scalar_select %p646, %s20, 0
        %s648 = sadd.s32 %s647, %s645
        %s649 = smul.addr %s648, 8
        %s650 = scalar_lea.vmem %s3, %s649
        // Predicated region
        $region64: #{dqn_forward.7} parent=50 // pred_check
          %p651 = pneg %p135
        $region65: #{dqn_forward.7} parent=50 // pred_check_branch
          %653 = sbr.rel (%p651) target = $region67
        $region66: #{dqn_forward.7} parent=50 // pred_region
          %s654 = smul.u32 2, %s19
        $region67: #{dqn_forward.7} parent=50 // pred_fallthru
          _
        // Predicated region
        $region68: #{dqn_forward.7} parent=50 // pred_check
          %p655 = pneg %p135
        $region69: #{dqn_forward.7} parent=50 // pred_check_branch
          %657 = sbr.rel (%p655) target = $region71
        $region70: #{dqn_forward.7} parent=50 // pred_region
          %s658 = smul.u32 2, %s19
          %p659 = scmp.lt.s32.totalorder %s658, 1
          %s660 = scalar_select %p659, %s658, 1
          %p661 = scmp.lt.s32.totalorder %s20, 0
          %s662 = scalar_select %p661, %s20, 0
          %s663 = sadd.s32 %s662, %s660
          %s664 = smul.addr %s663, 8
          %s665 = scalar_lea.vmem %s3, %s664
        $region71: #{dqn_forward.7} parent=50 // pred_fallthru
          _
      $region51: #{dqn_forward.7} parent=5 // pred_fallthru
        _
      %p666 = scmp.le.s32.totalorder 2, %s9
      // Predicated region
      $region72: #{dqn_forward.7} parent=5 // pred_check
        %p667 = pneg %p666
      $region73: #{dqn_forward.7} parent=5 // pred_check_branch
        %669 = sbr.rel (%p667) target = $region75
      $region74: #{dqn_forward.7} parent=5 // pred_region
        %s670 = ssub.s32 %s9, 2
      $region75: #{dqn_forward.7} parent=5 // pred_fallthru
        _
    $region6: #{dqn_forward.7} parent=1 // loop_footer
      %s13 = sadd.s32 1, %s9
    $region7: #{dqn_forward.7} parent=1 // loop_footer_branch
      %8 = sbr.rel target = $region3
    $region8: #{dqn_forward.7} parent=1 // loop_exit
      _

// kernel: dqn_forward.9
$region0: #{dqn_forward.9}
  #allocation0 [shape = 'u32[]', space=smem, size = 0x4, offset = 0x4, fixed_abs, tag = 'smem constant byte address 0x4 - core index']
  #allocation1 [shape = 'u32[72,128]{1,0:T(1,128)}', space=vmem, size = 0x9000, scoped, tag = 'internal scratch']
  #allocation2 [shape = 'f32[16,128]{1,0:T(8,128)}', space=vmem, size = 0x2000, scoped, tag = 'scratch operand']
  %s0 = inlined_call_operand.vmem [shape: bf16[16,512], index: 0, kind: input, shape index: {}]
  %s1 = inlined_call_operand.vmem [shape: bf16[512,128], index: 1, kind: input, shape index: {}]
  %s2 = inlined_call_operand.vmem [shape: f32[1,128], index: 2, kind: input, shape index: {}]
  %s3 = inlined_call_operand.vmem [shape: f32[16,128], index: 3, kind: output, shape index: {}]
  %s4 = sld [smem:[#allocation0]]
  $region30: #{dqn_forward.9} parent=0
    _
  %s6 = ssub.s32 1, %s4
  %s7 = scalar_select 0, %s6, %s4
  // Predicated region
  $region2: #{dqn_forward.9} parent=0 // pred_check
    _
  $region3: #{dqn_forward.9} parent=0 // pred_check_branch
    %9 = sbr.rel (0) target = $region5
  $region4: #{dqn_forward.9} parent=0 // pred_region
    _
  $region5: #{dqn_forward.9} parent=0 // pred_fallthru
    _
  // Predicated region
  $region6: #{dqn_forward.9} parent=0 // pred_check
    _
  $region7: #{dqn_forward.9} parent=0 // pred_check_branch
    %11 = sbr.rel (0) target = $region9
  $region8: #{dqn_forward.9} parent=0 // pred_region
    _
  $region9: #{dqn_forward.9} parent=0 // pred_fallthru
    _
  // Predicated region
  $region10: #{dqn_forward.9} parent=0 // pred_check
    _
  $region11: #{dqn_forward.9} parent=0 // pred_check_branch
    %13 = sbr.rel (0) target = $region13
  $region12: #{dqn_forward.9} parent=0 // pred_region
    _
  $region13: #{dqn_forward.9} parent=0 // pred_fallthru
    _
  %p14 = scmp.eq.s32.totalorder 0, 0
  // Predicated region
  $region14: #{dqn_forward.9} parent=0 // pred_check
    %p15 = pneg %p14
  $region15: #{dqn_forward.9} parent=0 // pred_check_branch
    %17 = sbr.rel (%p15) target = $region17
  $region16: #{dqn_forward.9} parent=0 // pred_region
    %18 = vst [vmem:[#allocation2] sm:$0xff] 0.0
    %19 = vst [vmem:[#allocation2 + $0x8] sm:$0xff] 0.0
  $region17: #{dqn_forward.9} parent=0 // pred_fallthru
    _
  %v20 = vld [vmem:[#allocation2] sm:$0xff]
  %v21 = vld [vmem:[#allocation2 + $0x8] sm:$0xff]
  %v22 = vld [vmem:[%s0] sm:$0xff]
  %v23 = vld [vmem:[%s0 + $0x8] sm:$0xff]
  %v24 = vld [vmem:[%s0 + $0x10] sm:$0xff]
  %v25 = vld [vmem:[%s0 + $0x18] sm:$0xff]
  %v26 = vld [vmem:[%s1] sm:$0xf]
  %v27 = vld [vmem:[%s1 + $0x4] sm:$0xf]
  %v28 = vld [vmem:[%s1 + $0x8] sm:$0xf]
  %v29 = vld [vmem:[%s1 + $0xc] sm:$0xf]
  %v30 = vld [vmem:[%s1 + $0x10] sm:$0xf]
  %v31 = vld [vmem:[%s1 + $0x14] sm:$0xf]
  %v32 = vld [vmem:[%s1 + $0x18] sm:$0xf]
  %v33 = vld [vmem:[%s1 + $0x1c] sm:$0xf]
  %v34 = vld [vmem:[%s1 + $0x20] sm:$0xf]
  %v35 = vld [vmem:[%s1 + $0x24] sm:$0xf]
  %v36 = vld [vmem:[%s1 + $0x28] sm:$0xf]
  %v37 = vld [vmem:[%s1 + $0x2c] sm:$0xf]
  %v38 = vld [vmem:[%s1 + $0x30] sm:$0xf]
  %v39 = vld [vmem:[%s1 + $0x34] sm:$0xf]
  %v40 = vld [vmem:[%s1 + $0x38] sm:$0xf]
  %v41 = vld [vmem:[%s1 + $0x3c] sm:$0xf]
  %v42 = vld [vmem:[%s1 + $0x40] sm:$0xf]
  %v43 = vld [vmem:[%s1 + $0x44] sm:$0xf]
  %v44 = vld [vmem:[%s1 + $0x48] sm:$0xf]
  %v45 = vld [vmem:[%s1 + $0x4c] sm:$0xf]
  %v46 = vld [vmem:[%s1 + $0x50] sm:$0xf]
  %v47 = vld [vmem:[%s1 + $0x54] sm:$0xf]
  %v48 = vld [vmem:[%s1 + $0x58] sm:$0xf]
  %v49 = vld [vmem:[%s1 + $0x5c] sm:$0xf]
  %v50 = vld [vmem:[%s1 + $0x60] sm:$0xf]
  %v51 = vld [vmem:[%s1 + $0x64] sm:$0xf]
  %v52 = vld [vmem:[%s1 + $0x68] sm:$0xf]
  %v53 = vld [vmem:[%s1 + $0x6c] sm:$0xf]
  %v54 = vld [vmem:[%s1 + $0x70] sm:$0xf]
  %v55 = vld [vmem:[%s1 + $0x74] sm:$0xf]
  %v56 = vld [vmem:[%s1 + $0x78] sm:$0xf]
  %v57 = vld [vmem:[%s1 + $0x7c] sm:$0xf]
  %v58 = vld [vmem:[%s1 + $0x80] sm:$0xf]
  %v59 = vld [vmem:[%s1 + $0x84] sm:$0xf]
  %v60 = vld [vmem:[%s1 + $0x88] sm:$0xf]
  %v61 = vld [vmem:[%s1 + $0x8c] sm:$0xf]
  %v62 = vld [vmem:[%s1 + $0x90] sm:$0xf]
  %v63 = vld [vmem:[%s1 + $0x94] sm:$0xf]
  %v64 = vld [vmem:[%s1 + $0x98] sm:$0xf]
  %v65 = vld [vmem:[%s1 + $0x9c] sm:$0xf]
  %v66 = vld [vmem:[%s1 + $0xa0] sm:$0xf]
  %v67 = vld [vmem:[%s1 + $0xa4] sm:$0xf]
  %v68 = vld [vmem:[%s1 + $0xa8] sm:$0xf]
  %v69 = vld [vmem:[%s1 + $0xac] sm:$0xf]
  %v70 = vld [vmem:[%s1 + $0xb0] sm:$0xf]
  %v71 = vld [vmem:[%s1 + $0xb4] sm:$0xf]
  %v72 = vld [vmem:[%s1 + $0xb8] sm:$0xf]
  %v73 = vld [vmem:[%s1 + $0xbc] sm:$0xf]
  %v74 = vld [vmem:[%s1 + $0xc0] sm:$0xf]
  %v75 = vld [vmem:[%s1 + $0xc4] sm:$0xf]
  %v76 = vld [vmem:[%s1 + $0xc8] sm:$0xf]
  %v77 = vld [vmem:[%s1 + $0xcc] sm:$0xf]
  %v78 = vld [vmem:[%s1 + $0xd0] sm:$0xf]
  %v79 = vld [vmem:[%s1 + $0xd4] sm:$0xf]
  %v80 = vld [vmem:[%s1 + $0xd8] sm:$0xf]
  %v81 = vld [vmem:[%s1 + $0xdc] sm:$0xf]
  %v82 = vld [vmem:[%s1 + $0xe0] sm:$0xf]
  %v83 = vld [vmem:[%s1 + $0xe4] sm:$0xf]
  %v84 = vld [vmem:[%s1 + $0xe8] sm:$0xf]
  %v85 = vld [vmem:[%s1 + $0xec] sm:$0xf]
  %v86 = vld [vmem:[%s1 + $0xf0] sm:$0xf]
  %v87 = vld [vmem:[%s1 + $0xf4] sm:$0xf]
  %v88 = vld [vmem:[%s1 + $0xf8] sm:$0xf]
  %v89 = vld [vmem:[%s1 + $0xfc] sm:$0xf]
  %v94 = vunpack.c.l.b16 %v22
  %v95 = vunpack.c.h.b16 %v22
  %v96 = vunpack.c.l.b16 %v23
  %v97 = vunpack.c.h.b16 %v23
  %v98 = vunpack.c.l.b16 %v24
  %v99 = vunpack.c.h.b16 %v24
  %v100 = vunpack.c.l.b16 %v25
  %v101 = vunpack.c.h.b16 %v25
  %v102 = vpack.c.b16 %v98, %v94
  %v103 = vpack.c.b16 %v99, %v95
  %v104 = vpack.c.b16 %v100, %v96
  %v105 = vpack.c.b16 %v101, %v97
  %v174 = vunpack.c.l.b16 %v26
  %v175 = vunpack.c.l.b16 %v27
  %v176 = vunpack.c.l.b16 %v28
  %v177 = vunpack.c.l.b16 %v29
  %v178 = vunpack.c.l.b16 %v30
  %v179 = vunpack.c.l.b16 %v31
  %v180 = vunpack.c.l.b16 %v32
  %v181 = vunpack.c.l.b16 %v33
  %v182 = vunpack.c.l.b16 %v34
  %v183 = vunpack.c.l.b16 %v35
  %v184 = vunpack.c.l.b16 %v36
  %v185 = vunpack.c.l.b16 %v37
  %v186 = vunpack.c.l.b16 %v38
  %v187 = vunpack.c.l.b16 %v39
  %v188 = vunpack.c.l.b16 %v40
  %v189 = vunpack.c.l.b16 %v41
  %v190 = vunpack.c.l.b16 %v42
  %v191 = vunpack.c.l.b16 %v43
  %v192 = vunpack.c.l.b16 %v44
  %v193 = vunpack.c.l.b16 %v45
  %v194 = vunpack.c.l.b16 %v46
  %v195 = vunpack.c.l.b16 %v47
  %v196 = vunpack.c.l.b16 %v48
  %v197 = vunpack.c.l.b16 %v49
  %v198 = vunpack.c.l.b16 %v50
  %v199 = vunpack.c.l.b16 %v51
  %v200 = vunpack.c.l.b16 %v52
  %v201 = vunpack.c.l.b16 %v53
  %v202 = vunpack.c.l.b16 %v54
  %v203 = vunpack.c.l.b16 %v55
  %v204 = vunpack.c.l.b16 %v56
  %v205 = vunpack.c.l.b16 %v57
  %v206 = vunpack.c.l.b16 %v58
  %v207 = vunpack.c.l.b16 %v59
  %v208 = vunpack.c.l.b16 %v60
  %v209 = vunpack.c.l.b16 %v61
  %v210 = vunpack.c.l.b16 %v62
  %v211 = vunpack.c.l.b16 %v63
  %v212 = vunpack.c.l.b16 %v64
  %v213 = vunpack.c.l.b16 %v65
  %v214 = vunpack.c.l.b16 %v66
  %v215 = vunpack.c.l.b16 %v67
  %v216 = vunpack.c.l.b16 %v68
  %v217 = vunpack.c.l.b16 %v69
  %v218 = vunpack.c.l.b16 %v70
  %v219 = vunpack.c.l.b16 %v71
  %v220 = vunpack.c.l.b16 %v72
  %v221 = vunpack.c.l.b16 %v73
  %v222 = vunpack.c.l.b16 %v74
  %v223 = vunpack.c.l.b16 %v75
  %v224 = vunpack.c.l.b16 %v76
  %v225 = vunpack.c.l.b16 %v77
  %v226 = vunpack.c.l.b16 %v78
  %v227 = vunpack.c.l.b16 %v79
  %v228 = vunpack.c.l.b16 %v80
  %v229 = vunpack.c.l.b16 %v81
  %v230 = vunpack.c.l.b16 %v82
  %v231 = vunpack.c.l.b16 %v83
  %v232 = vunpack.c.l.b16 %v84
  %v233 = vunpack.c.l.b16 %v85
  %v234 = vunpack.c.l.b16 %v86
  %v235 = vunpack.c.l.b16 %v87
  %v236 = vunpack.c.l.b16 %v88
  %v237 = vunpack.c.l.b16 %v89
  %v238 = vpack.c.b16 %v175, %v174
  %v239 = vpack.c.b16 %v177, %v176
  %v240 = vpack.c.b16 %v179, %v178
  %v241 = vpack.c.b16 %v181, %v180
  %v242 = vpack.c.b16 %v183, %v182
  %v243 = vpack.c.b16 %v185, %v184
  %v244 = vpack.c.b16 %v187, %v186
  %v245 = vpack.c.b16 %v189, %v188
  %v246 = vpack.c.b16 %v191, %v190
  %v247 = vpack.c.b16 %v193, %v192
  %v248 = vpack.c.b16 %v195, %v194
  %v249 = vpack.c.b16 %v197, %v196
  %v250 = vpack.c.b16 %v199, %v198
  %v251 = vpack.c.b16 %v201, %v200
  %v252 = vpack.c.b16 %v203, %v202
  %v253 = vpack.c.b16 %v205, %v204
  %v254 = vpack.c.b16 %v207, %v206
  %v255 = vpack.c.b16 %v209, %v208
  %v256 = vpack.c.b16 %v211, %v210
  %v257 = vpack.c.b16 %v213, %v212
  %v258 = vpack.c.b16 %v215, %v214
  %v259 = vpack.c.b16 %v217, %v216
  %v260 = vpack.c.b16 %v219, %v218
  %v261 = vpack.c.b16 %v221, %v220
  %v262 = vpack.c.b16 %v223, %v222
  %v263 = vpack.c.b16 %v225, %v224
  %v264 = vpack.c.b16 %v227, %v226
  %v265 = vpack.c.b16 %v229, %v228
  %v266 = vpack.c.b16 %v231, %v230
  %v267 = vpack.c.b16 %v233, %v232
  %v268 = vpack.c.b16 %v235, %v234
  %v269 = vpack.c.b16 %v237, %v236
  %302 = vmatpush.bf16.msra.mxu0 %v245
  %303 = vmatpush.bf16.msra.mxu0 %v244
  %304 = vmatpush.bf16.msra.mxu0 %v243
  %305 = vmatpush.bf16.msra.mxu0 %v242
  %306 = vmatpush.bf16.msra.mxu0 %v241
  %307 = vmatpush.bf16.msra.mxu0 %v240
  %308 = vmatpush.bf16.msra.mxu0 %v239
  %309 = vmatpush.bf16.msra.mxu0 %v238
  %310 = vmatmul.bf16.gmra.mxu0 %v102
  %v311 = vpop.f32.mrf.mxu0
  %v312 = vadd.f32 0.0, %v311
  %v313 = vpop.f32.mrf.mxu0
  %v314 = vadd.f32 0.0, %v313
  %315 = vdwg.mxu0
  %316 = vmatpush.bf16.msra.mxu0 %v253
  %317 = vmatpush.bf16.msra.mxu0 %v252
  %318 = vmatpush.bf16.msra.mxu0 %v251
  %319 = vmatpush.bf16.msra.mxu0 %v250
  %320 = vmatpush.bf16.msra.mxu0 %v249
  %321 = vmatpush.bf16.msra.mxu0 %v248
  %322 = vmatpush.bf16.msra.mxu0 %v247
  %323 = vmatpush.bf16.msra.mxu0 %v246
  %324 = vmatmul.bf16.gmra.mxu0 %v103
  %v325 = vpop.f32.mrf.mxu0
  %v326 = vadd.f32 %v312, %v325
  %v327 = vpop.f32.mrf.mxu0
  %v328 = vadd.f32 %v314, %v327
  %329 = vdwg.mxu0
  %330 = vmatpush.bf16.msra.mxu0 %v261
  %331 = vmatpush.bf16.msra.mxu0 %v260
  %332 = vmatpush.bf16.msra.mxu0 %v259
  %333 = vmatpush.bf16.msra.mxu0 %v258
  %334 = vmatpush.bf16.msra.mxu0 %v257
  %335 = vmatpush.bf16.msra.mxu0 %v256
  %336 = vmatpush.bf16.msra.mxu0 %v255
  %337 = vmatpush.bf16.msra.mxu0 %v254
  %338 = vmatmul.bf16.gmra.mxu0 %v104
  %v339 = vpop.f32.mrf.mxu0
  %v340 = vadd.f32 %v326, %v339
  %v341 = vpop.f32.mrf.mxu0
  %v342 = vadd.f32 %v328, %v341
  %343 = vdwg.mxu0
  %344 = vmatpush.bf16.msra.mxu0 %v269
  %345 = vmatpush.bf16.msra.mxu0 %v268
  %346 = vmatpush.bf16.msra.mxu0 %v267
  %347 = vmatpush.bf16.msra.mxu0 %v266
  %348 = vmatpush.bf16.msra.mxu0 %v265
  %349 = vmatpush.bf16.msra.mxu0 %v264
  %350 = vmatpush.bf16.msra.mxu0 %v263
  %351 = vmatpush.bf16.msra.mxu0 %v262
  %352 = vmatmul.bf16.gmra.mxu0 %v105
  %v353 = vpop.f32.mrf.mxu0
  %v354 = vadd.f32 %v340, %v353
  %v355 = vpop.f32.mrf.mxu0
  %v356 = vadd.f32 %v342, %v355
  %357 = vdwg.mxu0
  %v358 = vadd.f32 %v20, %v354
  %v359 = vadd.f32 %v21, %v356
  %360 = vst [vmem:[#allocation2] sm:$0xff] %v358
  %361 = vst [vmem:[#allocation2 + $0x8] sm:$0xff] %v359
  // Predicated region
  $region18: #{dqn_forward.9} parent=0 // pred_check
    %p362 = pneg %p14
  $region19: #{dqn_forward.9} parent=0 // pred_check_branch
    %364 = sbr.rel (%p362) target = $region21
  $region20: #{dqn_forward.9} parent=0 // pred_region
    %v365 = vld [vmem:[#allocation2] sm:$0xff]
    %v366 = vld [vmem:[#allocation2 + $0x8] sm:$0xff]
    %v367 = vld [vmem:[%s2] sm:$0x1]
    %v369 = vperm.slane %v367, 0
    %v371 = vadd.f32 %v365, %v369
    %v372 = vadd.f32 %v366, %v369
    %373 = vst [vmem:[%s3] sm:$0xff] %v371
    %374 = vst [vmem:[%s3 + $0x8] sm:$0xff] %v372
  $region21: #{dqn_forward.9} parent=0 // pred_fallthru
    _
  // Predicated region
  $region22: #{dqn_forward.9} parent=0 // pred_check
    _
  $region23: #{dqn_forward.9} parent=0 // pred_check_branch
    %376 = sbr.rel (0) target = $region25
  $region24: #{dqn_forward.9} parent=0 // pred_region
    _
  $region25: #{dqn_forward.9} parent=0 // pred_fallthru
    _
  // Predicated region
  $region26: #{dqn_forward.9} parent=0 // pred_check
    _
  $region27: #{dqn_forward.9} parent=0 // pred_check_branch
    %378 = sbr.rel (0) target = $region29
  $region28: #{dqn_forward.9} parent=0 // pred_region
    _
  $region29: #{dqn_forward.9} parent=0 // pred_fallthru
    _

</llo_original>
